<compile_context>
chip_gen: v6e
topology: v6e:2x2x1
jax: 0.10.0
libtpu: 0.0.40
codegen_flags: <defaults>
</compile_context>

<pallas_src>
import functools

import jax
import jax.numpy as jnp
from jax import lax
from jax.experimental import pallas as pl
from jax.experimental.pallas import tpu as pltpu

_NEG = -1e30   # finite "minus infinity" (keeps exp()/max() NaN-free in f32)
_BP = 128      # graphs padded to one full lane -> lane-dense pooling state


def _round_up(v, m):
    return ((v + m - 1) // m) * m


def _vmem_limit_bytes():
    # Generation-aware VMEM budget: ~85% of physical capacity (v5e/v6e 128 MiB,
    # v7x 64 MiB), leaving headroom for compiler scratch / pipeline buffers.
    try:
        cap = pltpu.get_tpu_info().vmem_capacity_bytes
    except Exception:
        cap = 64 * 1024 * 1024
    return int(cap * 0.85)


# ---------------------------------------------------------------------------
# Fused kernel: L x (SAGEConv + ReLU)  ->  GlobalAttention pooling  ->  MLP head
# grid = (num_layers, node_tiles_i, node_tiles_k)
# ---------------------------------------------------------------------------
def _fused_kernel(
    adj_ref,      # [tm, tk]     bf16  row-normalized adjacency tile (index (i, k))
    xk_ref,       # [tk, Dp]     bf16  node-feature tile (pipelined; used at layer 0)
    wl_ref,       # [Dp, Dp]     bf16  SAGE lin_l weight (layer dim squeezed)
    bl_ref,       # [1, Dp]      f32   SAGE lin_l bias
    wr_ref,       # [Dp, Dp]     bf16  SAGE lin_r weight
    seg_ref,      # [tm, BP]     f32   node -> graph one-hot tile
    gate_w_ref,   # [Dp, BP]     bf16  gate weight replicated across graph lanes
    gate_b_ref,   # [1, 1]       f32   gate bias (SMEM scalar)
    w1_ref,       # [Dp, Dp]     bf16  lin1
    b1_ref,       # [1, Dp]      f32
    w2_ref,       # [Dp, Cp]     bf16  lin2 (padded class cols zero)
    b2_ref,       # [1, Cp]      f32   lin2 bias (padded class cols = -1e30)
    out_ref,      # [BP, Cp]     f32   log-probs (written once at the very end)
    h_ref,        # [2*Np, Dp]   bf16  ping-pong activations (slot = layer parity)
    aggr_acc,     # [tm, Dp]     f32   adj @ h accumulator
    m_s, s_s,     # [1, BP]      f32   online segment-softmax running max / sum
    pool_acc_t,   # [Dp, BP]     f32   pooled accumulator (BP lane-dense)
    *, np_pad,
):
    l = pl.program_id(0)
    i = pl.program_id(1)
    k = pl.program_id(2)
    nl = pl.num_programs(0)
    ni = pl.num_programs(1)
    nk = pl.num_programs(2)
    tm, tk = adj_ref.shape

    # layer l reads slot (l+1)%2 ( == (l-1)%2 for l>=1, slot 1 holds x for l==0 )
    # and writes slot l%2.
    src_base = ((l + 1) % 2) * np_pad
    dst_base = (l % 2) * np_pad
    koff = pl.multiple_of(k * tk, tk)
    ioff = pl.multiple_of(i * tm, tm)

    # ---- one-time init of the pooling state ----
    @pl.when((l == 0) & (i == 0) & (k == 0))
    def _init():
        m_s[...] = jnp.full_like(m_s, _NEG)
        s_s[...] = jnp.zeros_like(s_s)
        pool_acc_t[...] = jnp.zeros_like(pool_acc_t)

    # ---- layer 0: stage the pipelined x tile into the layer-0 source slot ----
    # (overlapped HBM->VMEM via BlockSpec pipelining; cheap VMEM->VMEM store here)
    @pl.when((l == 0) & (i == 0))
    def _stage_x():
        h_ref[pl.ds(pl.multiple_of(np_pad + koff, tk), tk), :] = xk_ref[...]

    # ---- per (layer, node-tile): reset the aggregation accumulator ----
    @pl.when(k == 0)
    def _zero_acc():
        aggr_acc[...] = jnp.zeros_like(aggr_acc)

    # ---- mean aggregation (partial over k): bf16 x bf16 -> f32 on the MXU ----
    h_k = h_ref[pl.ds(pl.multiple_of(src_base + koff, tk), tk), :]
    aggr_acc[...] += jnp.dot(adj_ref[...], h_k, preferred_element_type=jnp.float32)

    @pl.when(k == nk - 1)
    def _finish_tile():
        x_root = h_ref[pl.ds(pl.multiple_of(src_base + ioff, tm), tm), :]   # bf16
        h_new = (jnp.dot(aggr_acc[...].astype(jnp.bfloat16), wl_ref[...],
                         preferred_element_type=jnp.float32)
                 + bl_ref[...]
                 + jnp.dot(x_root, wr_ref[...],
                           preferred_element_type=jnp.float32))
        h_new = jnp.maximum(h_new, 0.0)                       # xReLU('ReLU')
        h_bf = h_new.astype(jnp.bfloat16)
        h_ref[pl.ds(pl.multiple_of(dst_base + ioff, tm), tm), :] = h_bf

        # ---- last layer: streamed GlobalAttention pooling over node tiles ----
        @pl.when(l == nl - 1)
        def _pool():
            seg_t = seg_ref[...]                              # [tm, BP]
            # gate replicated across graph lanes by the replicated gate weight:
            # one lane-dense MXU pass, no 1-wide masked intermediates.
            gate = (jnp.dot(h_bf, gate_w_ref[...],
                            preferred_element_type=jnp.float32)
                    + gate_b_ref[0, 0])                       # [tm, BP]
            # NOTE: keep the where/select form; a mask-multiply rewrite would
            # propagate the +inf produced by exp() in the non-selected branch.
            g = jnp.where(seg_t > 0, gate, _NEG)
            m_new = jnp.maximum(m_s[...], jnp.max(g, axis=0, keepdims=True))
            alpha = jnp.exp(m_s[...] - m_new)                 # [1, BP]
            e = jnp.where(seg_t > 0, jnp.exp(gate - m_new), 0.0)
            s_s[...] = alpha * s_s[...] + jnp.sum(e, axis=0, keepdims=True)
            # pool_acc_t[d, b] = alpha_b * pool_acc_t[d, b] + sum_n h[n, d] e[n, b]
            pool_acc_t[...] = alpha * pool_acc_t[...] + lax.dot_general(
                h_bf, e.astype(jnp.bfloat16), (((0,), (0,)), ((), ())),
                preferred_element_type=jnp.float32)
            m_s[...] = m_new

            # ---- very last node tile: MLP head + log_softmax ----
            @pl.when(i == ni - 1)
            def _head():
                den = jnp.maximum(s_s[...], 1e-20)    # guard empty graphs (no NaN)
                inv = pl.reciprocal(den, approx=True)          # [1, BP]
                pooled_t = (pool_acc_t[...] * inv).astype(jnp.bfloat16)  # [Dp, BP]
                hidden = jnp.maximum(
                    lax.dot_general(pooled_t, w1_ref[...],
                                    (((0,), (0,)), ((), ())),
                                    preferred_element_type=jnp.float32)
                    + b1_ref[...], 0.0)                        # [BP, Dp]
                # TODO(synk): F.dropout(p=0.5) is identity with training=False (eval).
                logits = (jnp.dot(hidden.astype(jnp.bfloat16), w2_ref[...],
                                  preferred_element_type=jnp.float32)
                          + b2_ref[...])                       # [BP, Cp]
                mx = jnp.max(logits, axis=-1, keepdims=True)
                lse = jnp.log(jnp.sum(jnp.exp(logits - mx), axis=-1,
                                      keepdims=True))
                out_ref[...] = logits - mx - lse


def _build_fused_call(num_layers, np_, dp, cp, tm, tk):
    ni = np_ // tm
    nk = np_ // tk
    grid = (num_layers, ni, nk)
    last = num_layers - 1

    in_specs = [
        pl.BlockSpec((tm, tk), lambda l, i, k: (i, k)),                    # adj (bf16)
        # x tiles only actually change while they are being staged (layer 0, i == 0);
        # afterwards the block index stays put -> no re-fetch.
        pl.BlockSpec((tk, dp),
                     lambda l, i, k: (jnp.where((l == 0) & (i == 0), k, 0), 0)),
        pl.BlockSpec((None, dp, dp), lambda l, i, k: (l, 0, 0)),           # w_l (bf16)
        pl.BlockSpec((None, 1, dp), lambda l, i, k: (l, 0, 0)),            # b_l
        pl.BlockSpec((None, dp, dp), lambda l, i, k: (l, 0, 0)),           # w_r (bf16)
        # seg only needed on the last layer -> keep its block index frozen otherwise.
        pl.BlockSpec((tm, _BP), lambda l, i, k: (jnp.where(l == last, i, 0), 0)),
        pl.BlockSpec((dp, _BP), lambda l, i, k: (0, 0)),                   # gate_w
        pl.BlockSpec(memory_space=pltpu.MemorySpace.SMEM),                 # gate_b
        pl.BlockSpec((dp, dp), lambda l, i, k: (0, 0)),                    # lin1 w
        pl.BlockSpec((1, dp), lambda l, i, k: (0, 0)),                     # lin1 b
        pl.BlockSpec((dp, cp), lambda l, i, k: (0, 0)),                    # lin2 w
        pl.BlockSpec((1, cp), lambda l, i, k: (0, 0)),                     # lin2 b
        # Note: constant-index weight blocks could be single-buffered
        # (pipeline_mode=pl.Buffered(1)) to reclaim VMEM on v7x if needed.
    ]
    out_specs = pl.BlockSpec((_BP, cp), lambda l, i, k: (0, 0))
    scratch_shapes = [
        pltpu.VMEM((2 * np_, dp), jnp.bfloat16),   # h ping-pong (slot = layer parity)
        pltpu.VMEM((tm, dp), jnp.float32),         # aggr_acc
        pltpu.VMEM((1, _BP), jnp.float32),         # m_s
        pltpu.VMEM((1, _BP), jnp.float32),         # s_s
        pltpu.VMEM((dp, _BP), jnp.float32),        # pool_acc_t (lane-dense)
    ]

    flops = (2 * num_layers * np_ * np_ * dp        # adj @ h
             + 4 * num_layers * np_ * dp * dp       # lin_l + lin_r
             + 2 * np_ * dp * _BP                   # gate (last layer)
             + 2 * np_ * _BP * dp                   # pooling contraction
             + 2 * _BP * dp * (dp + cp))            # MLP head
    bytes_accessed = (num_layers * np_ * np_ * 2 + np_ * dp * 2
                      + num_layers * (2 * dp * dp) * 2 + num_layers * dp * 4
                      + np_ * _BP * 4
                      + (dp * _BP + dp * dp + dp * cp) * 2
                      + (dp + cp) * 4 + _BP * cp * 4)
    cost = pl.CostEstimate(flops=int(flops),
                           transcendentals=int(np_ * _BP + _BP * cp),
                           bytes_accessed=int(bytes_accessed))

    # TODO(synk): on v7x the second TensorCore is idle; a core_map split of the
    # node-tile axis (VMEM_SHARED h + per-layer core_barrier) could ~2x the GEMMs.
    return pl.pallas_call(
        functools.partial(_fused_kernel, np_pad=np_),
        out_shape=jax.ShapeDtypeStruct((_BP, cp), jnp.float32),
        grid_spec=pltpu.PrefetchScalarGridSpec(
            num_scalar_prefetch=0,
            grid=grid,
            in_specs=in_specs,
            out_specs=out_specs,
            scratch_shapes=scratch_shapes),
        compiler_params=pltpu.CompilerParams(
            # layer axis + accumulators carry cross-iteration state -> sequential.
            dimension_semantics=("arbitrary", "arbitrary", "arbitrary"),
            vmem_limit_bytes=_vmem_limit_bytes()),
        cost_estimate=cost,
    )


# ---------------------------------------------------------------------------
# Parameter setup + graph preprocessing + full forward
# ---------------------------------------------------------------------------
def init_params(num_features, hidden, num_classes, num_layers, key):
    ks = iter(jax.random.split(key, 4 * num_layers + 8))

    def lin(shape):
        return 0.1 * jax.random.normal(next(ks), shape, jnp.float32)

    params = {}
    params["convs"] = [
        dict(w_l=lin((num_features, hidden)), b_l=lin((1, hidden)),
             w_r=lin((num_features, hidden)))
    ]
    for _ in range(num_layers - 1):
        params["convs"].append(
            dict(w_l=lin((hidden, hidden)), b_l=lin((1, hidden)),
                 w_r=lin((hidden, hidden))))
    params["gate_w"] = lin((hidden, 1))
    params["gate_b"] = lin((1, 1))
    params["lin1_w"] = lin((hidden, hidden))
    params["lin1_b"] = lin((1, hidden))
    params["lin2_w"] = lin((hidden, num_classes))
    params["lin2_b"] = lin((1, num_classes))
    return params


def build_mean_adj(edge_index, num_nodes):
    """Row-normalized adjacency: A_norm @ x == mean of source features per target."""
    # TODO(synk): for large sparse graphs, replace the dense O(N^2) adjacency with a
    # block-sparse / scalar-prefetched gather form to change the asymptotic roofline.
    src, dst = edge_index[0], edge_index[1]
    a = jnp.zeros((num_nodes, num_nodes), jnp.float32).at[dst, src].add(1.0)
    deg = jnp.sum(a, axis=1, keepdims=True)
    return a / jnp.maximum(deg, 1.0)


def build_seg(batch, num_graphs):
    """One-hot node-to-graph membership [N, B]."""
    return (batch[:, None] == jnp.arange(num_graphs)[None, :]).astype(jnp.float32)


@jax.jit
def global_attention_net_forward(params, x, adj, seg):
    n, f = x.shape
    b = seg.shape[1]
    hidden = params["lin1_w"].shape[0]
    c = params["lin2_w"].shape[1]
    num_layers = len(params["convs"])
    assert b <= _BP, "graph count must fit one 128-lane vreg"

    dp = _round_up(max(f, hidden), 128)      # lane-dense feature/hidden dim
    cp = _round_up(c, 128)                   # lane-dense class dim

    if n <= 512:
        np_ = _round_up(n, 128)
        tm = tk = np_
    else:
        # Bigger tiles amortize the ~0.35us/grid-step overhead (sweepable).
        # tk multiple of 128 suffices on v5e (4x128 MXU); 256-multiples fill
        # v6e/v7x's 2x256 MXU.
        tk = 1024 if n >= 4096 else 512
        tm = 512 if n >= 2048 else 256
        np_ = _round_up(n, max(tm, tk))

    # --- pad + cast (bf16 operands for the MXU, f32 accumulation in-kernel) ---
    # Invariant: padded adjacency columns / padded seg rows are zero (see header).
    adj_p = jnp.zeros((np_, np_), jnp.float32).at[:n, :n].set(adj).astype(jnp.bfloat16)
    x_p = jnp.zeros((np_, dp), jnp.float32).at[:n, :f].set(x).astype(jnp.bfloat16)
    seg_p = jnp.zeros((np_, _BP), jnp.float32).at[:n, :b].set(seg)

    def pad_w(w):
        return jnp.zeros((dp, dp), jnp.float32).at[:w.shape[0], :w.shape[1]].set(w)

    def pad_b(bb, width):
        return jnp.zeros((1, width), jnp.float32).at[:, :bb.shape[1]].set(bb)

    wl = jnp.stack([pad_w(cv["w_l"]) for cv in params["convs"]]).astype(jnp.bfloat16)
    bl = jnp.stack([pad_b(cv["b_l"], dp) for cv in params["convs"]])   # [L, 1, Dp] f32
    wr = jnp.stack([pad_w(cv["w_r"]) for cv in params["convs"]]).astype(jnp.bfloat16)

    # gate weight replicated across graph lanes -> lane-dense [tm, 128] gate result
    gate_w = jnp.zeros((dp, _BP), jnp.float32).at[:hidden, :].set(
        jnp.broadcast_to(params["gate_w"], (hidden, _BP))).astype(jnp.bfloat16)
    gate_b = params["gate_b"].reshape(1, 1)
    w1 = pad_w(params["lin1_w"]).astype(jnp.bfloat16)
    b1 = pad_b(params["lin1_b"], dp)
    w2 = jnp.zeros((dp, cp), jnp.float32).at[:hidden, :c].set(
        params["lin2_w"]).astype(jnp.bfloat16)
    # padded class columns get -1e30 bias -> their probs underflow to 0 in log_softmax
    b2 = jnp.full((1, cp), _NEG, jnp.float32).at[:, :c].set(params["lin2_b"])

    call = _build_fused_call(num_layers, np_, dp, cp, tm, tk)
    out = call(adj_p, x_p, wl, bl, wr, seg_p, gate_w, gate_b, w1, b1, w2, b2)
    return out[:b, :c]


def _reference_forward(params, x, adj, seg):
    """Pure-JAX f32 reference (same eval-mode semantics)."""
    h = x
    for cv in params["convs"]:
        h = jnp.maximum((adj @ h) @ cv["w_l"] + cv["b_l"] + h @ cv["w_r"], 0.0)
    gate = h @ params["gate_w"] + params["gate_b"]
    g = jnp.where(seg > 0, gate, _NEG)
    m = jnp.max(g, axis=0, keepdims=True)
    e = jnp.where(seg > 0, jnp.exp(g - m), 0.0)
    p = e / jnp.maximum(jnp.sum(e, axis=0, keepdims=True), 1e-20)
    pooled = p.T @ h
    hid = jnp.maximum(pooled @ params["lin1_w"] + params["lin1_b"], 0.0)
    logits = hid @ params["lin2_w"] + params["lin2_b"]
    return jax.nn.log_softmax(logits, axis=-1)


# ---------------------------------------------------------------------------
if __name__ == "__main__":
    NUM_NODES = 16        # N (two graphs of 8 nodes each)
    NUM_FEATURES = 8      # dataset.num_features
    HIDDEN = 32           # hidden
    NUM_CLASSES = 4       # dataset.num_classes
    NUM_LAYERS = 2        # num_layers
    NUM_GRAPHS = 2        # batch size (graphs)

    key = jax.random.PRNGKey(0)
    x = jax.random.normal(key, (NUM_NODES, NUM_FEATURES), jnp.float32)

    # Deterministic ring graphs (bidirectional edges) within each graph.
    def ring_edges(offset, n):
        src, dst = [], []
        for i in range(n):
            a, b = offset + i, offset + (i + 1) % n
            src += [a, b]
            dst += [b, a]
        return src, dst

    s0, d0 = ring_edges(0, 8)
    s1, d1 = ring_edges(8, 8)
    edge_index = jnp.array([s0 + s1, d0 + d1], dtype=jnp.int32)
    batch = jnp.array([0] * 8 + [1] * 8, dtype=jnp.int32)

    adj = build_mean_adj(edge_index, NUM_NODES)
    seg = build_seg(batch, NUM_GRAPHS)

    params = init_params(NUM_FEATURES, HIDDEN, NUM_CLASSES, NUM_LAYERS,
                         jax.random.PRNGKey(42))

    out = global_attention_net_forward(params, x, adj, seg)
    out = jax.block_until_ready(out)

    assert out.shape == (NUM_GRAPHS, NUM_CLASSES)
    # log_softmax rows must sum to ~1 in prob space
    assert bool(jnp.all(jnp.abs(jnp.sum(jnp.exp(out), axis=-1) - 1.0) < 1e-4))
    # match the pure-JAX f32 reference (kernel uses bf16 operands -> loose tolerance)
    ref = _reference_forward(params, x, adj, seg)
    assert bool(jnp.allclose(out, ref, atol=5e-2, rtol=5e-2))
    print("KERNEL_OK")
</pallas_src>

<mosaic_0001>
module attributes {stable_mosaic.version = 11 : i64} {
  func.func @_fused_kernel(%arg0: i32, %arg1: i32, %arg2: i32, %arg3: memref<128x128xbf16, #tpu.memory_space<vmem>>, %arg4: memref<128x128xbf16, #tpu.memory_space<vmem>>, %arg5: memref<1x128x128xbf16, #tpu.memory_space<vmem>>, %arg6: memref<1x1x128xf32, #tpu.memory_space<vmem>>, %arg7: memref<1x128x128xbf16, #tpu.memory_space<vmem>>, %arg8: memref<128x128xf32, #tpu.memory_space<vmem>>, %arg9: memref<128x128xbf16, #tpu.memory_space<vmem>>, %arg10: memref<1x1xf32, #tpu.memory_space<smem>>, %arg11: memref<128x128xbf16, #tpu.memory_space<vmem>>, %arg12: memref<1x128xf32, #tpu.memory_space<vmem>>, %arg13: memref<128x128xbf16, #tpu.memory_space<vmem>>, %arg14: memref<1x128xf32, #tpu.memory_space<vmem>>, %arg15: memref<128x128xf32, #tpu.memory_space<vmem>>, %arg16: memref<256x128xbf16, #tpu.memory_space<vmem>>, %arg17: memref<128x128xf32, #tpu.memory_space<vmem>>, %arg18: memref<1x128xf32, #tpu.memory_space<vmem>>, %arg19: memref<1x128xf32, #tpu.memory_space<vmem>>, %arg20: memref<128x128xf32, #tpu.memory_space<vmem>>) attributes {dimension_semantics = [#tpu.dimension_semantics<arbitrary>, #tpu.dimension_semantics<arbitrary>, #tpu.dimension_semantics<arbitrary>], iteration_bounds = array<i64: 2, 1, 1>, scalar_prefetch = 0 : i64, scratch_operands = 5 : i64, tpu.core_type = #tpu.core_type<tc>, window_params = [{transform_indices = @transform_0, window_bounds = array<i64: 128, 128>}, {transform_indices = @transform_1, window_bounds = array<i64: 128, 128>}, {transform_indices = @transform_2, window_bounds = array<i64: 1, 128, 128>}, {transform_indices = @transform_3, window_bounds = array<i64: 1, 1, 128>}, {transform_indices = @transform_4, window_bounds = array<i64: 1, 128, 128>}, {transform_indices = @transform_5, window_bounds = array<i64: 128, 128>}, {pipeline_mode = #tpu.pipeline_mode<synchronous>, transform_indices = @transform_6, window_bounds = array<i64: 128, 128>}, {transform_indices = @transform_7, window_bounds = array<i64: 1, 1>}, {pipeline_mode = #tpu.pipeline_mode<synchronous>, transform_indices = @transform_8, window_bounds = array<i64: 128, 128>}, {pipeline_mode = #tpu.pipeline_mode<synchronous>, transform_indices = @transform_9, window_bounds = array<i64: 1, 128>}, {pipeline_mode = #tpu.pipeline_mode<synchronous>, transform_indices = @transform_10, window_bounds = array<i64: 128, 128>}, {pipeline_mode = #tpu.pipeline_mode<synchronous>, transform_indices = @transform_11, window_bounds = array<i64: 1, 128>}, {pipeline_mode = #tpu.pipeline_mode<synchronous>, transform_indices = @transform_12, window_bounds = array<i64: 128, 128>}]} {
    %c1_i32 = arith.constant 1 : i32
    %0 = arith.addi %arg0, %c1_i32 : i32
    %c2_i32 = arith.constant 2 : i32
    %c0_i32 = arith.constant 0 : i32
    %1 = arith.cmpi eq, %c2_i32, %c0_i32 : i32
    %c1_i32_0 = arith.constant 1 : i32
    %2 = arith.select %1, %c1_i32_0, %c2_i32 : i32
    %3 = arith.remsi %0, %2 : i32
    %c0_i32_1 = arith.constant 0 : i32
    %4 = arith.cmpi ne, %3, %c0_i32_1 : i32
    %c0_i32_2 = arith.constant 0 : i32
    %5 = arith.cmpi slt, %3, %c0_i32_2 : i32
    %c0_i32_3 = arith.constant 0 : i32
    %6 = arith.cmpi slt, %2, %c0_i32_3 : i32
    %7 = arith.xori %5, %6 : i1
    %8 = arith.andi %7, %4 : i1
    %9 = arith.addi %3, %2 : i32
    %10 = arith.select %8, %9, %3 : i32
    %c128_i32 = arith.constant 128 : i32
    %11 = arith.muli %10, %c128_i32 : i32
    %c2_i32_4 = arith.constant 2 : i32
    %c0_i32_5 = arith.constant 0 : i32
    %12 = arith.cmpi eq, %c2_i32_4, %c0_i32_5 : i32
    %c1_i32_6 = arith.constant 1 : i32
    %13 = arith.select %12, %c1_i32_6, %c2_i32_4 : i32
    %14 = arith.remsi %arg0, %13 : i32
    %c0_i32_7 = arith.constant 0 : i32
    %15 = arith.cmpi ne, %14, %c0_i32_7 : i32
    %c0_i32_8 = arith.constant 0 : i32
    %16 = arith.cmpi slt, %14, %c0_i32_8 : i32
    %c0_i32_9 = arith.constant 0 : i32
    %17 = arith.cmpi slt, %13, %c0_i32_9 : i32
    %18 = arith.xori %16, %17 : i1
    %19 = arith.andi %18, %15 : i1
    %20 = arith.addi %14, %13 : i32
    %21 = arith.select %19, %20, %14 : i32
    %c128_i32_10 = arith.constant 128 : i32
    %22 = arith.muli %21, %c128_i32_10 : i32
    %c128_i32_11 = arith.constant 128 : i32
    %23 = arith.muli %arg2, %c128_i32_11 : i32
    %24 = tpu.assume_multiple %23, 128 : i32
    %c128_i32_12 = arith.constant 128 : i32
    %25 = arith.muli %arg1, %c128_i32_12 : i32
    %26 = tpu.assume_multiple %25, 128 : i32
    %c0_i32_13 = arith.constant 0 : i32
    %27 = arith.cmpi eq, %arg0, %c0_i32_13 : i32
    %c0_i32_14 = arith.constant 0 : i32
    %28 = arith.cmpi eq, %arg1, %c0_i32_14 : i32
    %29 = arith.andi %27, %28 : i1
    %c0_i32_15 = arith.constant 0 : i32
    %30 = arith.cmpi eq, %arg2, %c0_i32_15 : i32
    %31 = arith.andi %29, %30 : i1
    %32 = arith.extui %31 : i1 to i32
    %c0_i32_16 = arith.constant 0 : i32
    %33 = arith.cmpi ne, %32, %c0_i32_16 : i32
    scf.if %33 {
      %cst_30 = arith.constant -1.000000e+30 : f32
      %54 = vector.broadcast %cst_30 : f32 to vector<1x128xf32>
      %c0_31 = arith.constant 0 : index
      %c0_32 = arith.constant 0 : index
      %55 = vector.load %arg18[%c0_31, %c0_32] : memref<1x128xf32, #tpu.memory_space<vmem>>, vector<1x128xf32>
      tpu.vector_store %arg18[%c0_31, %c0_32], %54 {strides = array<i32>} : memref<1x128xf32, #tpu.memory_space<vmem>>, vector<1x128xf32>,
      %cst_33 = arith.constant 0.000000e+00 : f32
      %56 = vector.broadcast %cst_33 : f32 to vector<1x128xf32>
      %c0_34 = arith.constant 0 : index
      %c0_35 = arith.constant 0 : index
      %57 = vector.load %arg19[%c0_34, %c0_35] : memref<1x128xf32, #tpu.memory_space<vmem>>, vector<1x128xf32>
      tpu.vector_store %arg19[%c0_34, %c0_35], %56 {strides = array<i32>} : memref<1x128xf32, #tpu.memory_space<vmem>>, vector<1x128xf32>,
      %cst_36 = arith.constant 0.000000e+00 : f32
      %58 = vector.broadcast %cst_36 : f32 to vector<128x128xf32>
      %c0_37 = arith.constant 0 : index
      %c0_38 = arith.constant 0 : index
      %59 = vector.load %arg20[%c0_37, %c0_38] : memref<128x128xf32, #tpu.memory_space<vmem>>, vector<128x128xf32>
      tpu.vector_store %arg20[%c0_37, %c0_38], %58 {strides = array<i32>} : memref<128x128xf32, #tpu.memory_space<vmem>>, vector<128x128xf32>,
    } else {
    }
    %c0_i32_17 = arith.constant 0 : i32
    %34 = arith.cmpi eq, %arg0, %c0_i32_17 : i32
    %c0_i32_18 = arith.constant 0 : i32
    %35 = arith.cmpi eq, %arg1, %c0_i32_18 : i32
    %36 = arith.andi %34, %35 : i1
    %37 = arith.extui %36 : i1 to i32
    %c0_i32_19 = arith.constant 0 : i32
    %38 = arith.cmpi ne, %37, %c0_i32_19 : i32
    scf.if %38 {
      %c0_30 = arith.constant 0 : index
      %c0_31 = arith.constant 0 : index
      %54 = vector.load %arg4[%c0_30, %c0_31] : memref<128x128xbf16, #tpu.memory_space<vmem>>, vector<128x128xbf16>
      %c128_i32_32 = arith.constant 128 : i32
      %55 = arith.addi %c128_i32_32, %24 : i32
      %56 = tpu.assume_multiple %55, 128 : i32
      %57 = arith.index_cast %56 : i32 to index
      %c0_33 = arith.constant 0 : index
      %58 = vector.load %arg16[%57, %c0_33] : memref<256x128xbf16, #tpu.memory_space<vmem>>, vector<128x128xbf16>
      tpu.vector_store %arg16[%57, %c0_33], %54 {strides = array<i32>} : memref<256x128xbf16, #tpu.memory_space<vmem>>, vector<128x128xbf16>,
    } else {
    }
    %c0_i32_20 = arith.constant 0 : i32
    %39 = arith.cmpi eq, %arg2, %c0_i32_20 : i32
    %40 = arith.extui %39 : i1 to i32
    %c0_i32_21 = arith.constant 0 : i32
    %41 = arith.cmpi ne, %40, %c0_i32_21 : i32
    scf.if %41 {
      %cst_30 = arith.constant 0.000000e+00 : f32
      %54 = vector.broadcast %cst_30 : f32 to vector<128x128xf32>
      %c0_31 = arith.constant 0 : index
      %c0_32 = arith.constant 0 : index
      %55 = vector.load %arg17[%c0_31, %c0_32] : memref<128x128xf32, #tpu.memory_space<vmem>>, vector<128x128xf32>
      tpu.vector_store %arg17[%c0_31, %c0_32], %54 {strides = array<i32>} : memref<128x128xf32, #tpu.memory_space<vmem>>, vector<128x128xf32>,
    } else {
    }
    %42 = arith.addi %11, %24 : i32
    %43 = tpu.assume_multiple %42, 128 : i32
    %44 = arith.index_cast %43 : i32 to index
    %c0 = arith.constant 0 : index
    %45 = vector.load %arg16[%44, %c0] : memref<256x128xbf16, #tpu.memory_space<vmem>>, vector<128x128xbf16>
    %c0_22 = arith.constant 0 : index
    %c0_23 = arith.constant 0 : index
    %46 = vector.load %arg17[%c0_22, %c0_23] : memref<128x128xf32, #tpu.memory_space<vmem>>, vector<128x128xf32>
    %c0_24 = arith.constant 0 : index
    %c0_25 = arith.constant 0 : index
    %47 = vector.load %arg3[%c0_24, %c0_25] : memref<128x128xbf16, #tpu.memory_space<vmem>>, vector<128x128xbf16>
    %cst = arith.constant dense<0.000000e+00> : vector<128x128xf32>
    %48 = tpu.matmul %47, %45, %cst {dimension_numbers = #tpu.dot_dimension_numbers<[1], [0], [0], [1], [0, 0, 1, 1], [], []>} : vector<128x128xbf16>, vector<128x128xbf16>, vector<128x128xf32> -> vector<128x128xf32>
    %49 = arith.addf %46, %48 : vector<128x128xf32>
    %c0_26 = arith.constant 0 : index
    %c0_27 = arith.constant 0 : index
    %50 = vector.load %arg17[%c0_26, %c0_27] : memref<128x128xf32, #tpu.memory_space<vmem>>, vector<128x128xf32>
    tpu.vector_store %arg17[%c0_26, %c0_27], %49 {strides = array<i32>} : memref<128x128xf32, #tpu.memory_space<vmem>>, vector<128x128xf32>,
    %c0_i32_28 = arith.constant 0 : i32
    %51 = arith.cmpi eq, %arg2, %c0_i32_28 : i32
    %52 = arith.extui %51 : i1 to i32
    %c0_i32_29 = arith.constant 0 : i32
    %53 = arith.cmpi ne, %52, %c0_i32_29 : i32
    scf.if %53 {
      %54 = arith.addi %11, %26 : i32
      %55 = tpu.assume_multiple %54, 128 : i32
      %56 = arith.index_cast %55 : i32 to index
      %c0_30 = arith.constant 0 : index
      %57 = vector.load %arg16[%56, %c0_30] : memref<256x128xbf16, #tpu.memory_space<vmem>>, vector<128x128xbf16>
      %c0_31 = arith.constant 0 : index
      %c0_32 = arith.constant 0 : index
      %58 = vector.load %arg17[%c0_31, %c0_32] : memref<128x128xf32, #tpu.memory_space<vmem>>, vector<128x128xf32>
      %59 = arith.truncf %58 : vector<128x128xf32> to vector<128x128xbf16>
      %c0_33 = arith.constant 0 : index
      %c0_34 = arith.constant 0 : index
      %c0_35 = arith.constant 0 : index
      %60 = vector.load %arg5[%c0_33, %c0_34, %c0_35] : memref<1x128x128xbf16, #tpu.memory_space<vmem>>, vector<1x128x128xbf16>
      %61 = vector.shape_cast %60 : vector<1x128x128xbf16> to vector<128x128xbf16>
      %cst_36 = arith.constant dense<0.000000e+00> : vector<128x128xf32>
      %62 = tpu.matmul %59, %61, %cst_36 {dimension_numbers = #tpu.dot_dimension_numbers<[1], [0], [0], [1], [0, 0, 1, 1], [], []>} : vector<128x128xbf16>, vector<128x128xbf16>, vector<128x128xf32> -> vector<128x128xf32>
      %c0_37 = arith.constant 0 : index
      %c0_38 = arith.constant 0 : index
      %c0_39 = arith.constant 0 : index
      %63 = vector.load %arg6[%c0_37, %c0_38, %c0_39] : memref<1x1x128xf32, #tpu.memory_space<vmem>>, vector<1x1x128xf32>
      %64 = vector.shape_cast %63 : vector<1x1x128xf32> to vector<1x128xf32>
      %65 = vector.broadcast %64 : vector<1x128xf32> to vector<128x128xf32>
      %66 = arith.addf %62, %65 : vector<128x128xf32>
      %c0_40 = arith.constant 0 : index
      %c0_41 = arith.constant 0 : index
      %c0_42 = arith.constant 0 : index
      %67 = vector.load %arg7[%c0_40, %c0_41, %c0_42] : memref<1x128x128xbf16, #tpu.memory_space<vmem>>, vector<1x128x128xbf16>
      %68 = vector.shape_cast %67 : vector<1x128x128xbf16> to vector<128x128xbf16>
      %cst_43 = arith.constant dense<0.000000e+00> : vector<128x128xf32>
      %69 = tpu.matmul %57, %68, %cst_43 {dimension_numbers = #tpu.dot_dimension_numbers<[1], [0], [0], [1], [0, 0, 1, 1], [], []>} : vector<128x128xbf16>, vector<128x128xbf16>, vector<128x128xf32> -> vector<128x128xf32>
      %70 = arith.addf %66, %69 : vector<128x128xf32>
      %cst_44 = arith.constant 0.000000e+00 : f32
      %71 = vector.broadcast %cst_44 : f32 to vector<128x128xf32>
      %72 = arith.maximumf %70, %71 : vector<128x128xf32>
      %73 = arith.truncf %72 : vector<128x128xf32> to vector<128x128xbf16>
      %74 = arith.addi %22, %26 : i32
      %75 = tpu.assume_multiple %74, 128 : i32
      %76 = arith.index_cast %75 : i32 to index
      %c0_45 = arith.constant 0 : index
      %77 = vector.load %arg16[%76, %c0_45] : memref<256x128xbf16, #tpu.memory_space<vmem>>, vector<128x128xbf16>
      tpu.vector_store %arg16[%76, %c0_45], %73 {strides = array<i32>} : memref<256x128xbf16, #tpu.memory_space<vmem>>, vector<128x128xbf16>,
      %c1_i32_46 = arith.constant 1 : i32
      %78 = arith.cmpi eq, %arg0, %c1_i32_46 : i32
      %79 = arith.extui %78 : i1 to i32
      %c0_i32_47 = arith.constant 0 : i32
      %80 = arith.cmpi ne, %79, %c0_i32_47 : i32
      scf.if %80 {
        %c0_48 = arith.constant 0 : index
        %c0_49 = arith.constant 0 : index
        %81 = vector.load %arg8[%c0_48, %c0_49] : memref<128x128xf32, #tpu.memory_space<vmem>>, vector<128x128xf32>
        %c0_50 = arith.constant 0 : index
        %c0_51 = arith.constant 0 : index
        %82 = vector.load %arg9[%c0_50, %c0_51] : memref<128x128xbf16, #tpu.memory_space<vmem>>, vector<128x128xbf16>
        %cst_52 = arith.constant dense<0.000000e+00> : vector<128x128xf32>
        %83 = tpu.matmul %73, %82, %cst_52 {dimension_numbers = #tpu.dot_dimension_numbers<[1], [0], [0], [1], [0, 0, 1, 1], [], []>} : vector<128x128xbf16>, vector<128x128xbf16>, vector<128x128xf32> -> vector<128x128xf32>
        %c0_53 = arith.constant 0 : index
        %c0_54 = arith.constant 0 : index
        %84 = memref.load %arg10[%c0_53, %c0_54] : memref<1x1xf32, #tpu.memory_space<smem>>
        %85 = vector.broadcast %84 : f32 to vector<128x128xf32>
        %86 = arith.addf %83, %85 : vector<128x128xf32>
        %cst_55 = arith.constant 0.000000e+00 : f32
        %87 = vector.broadcast %cst_55 : f32 to vector<128x128xf32>
        %88 = arith.cmpf ogt, %81, %87 : vector<128x128xf32>
        %cst_56 = arith.constant -1.000000e+30 : f32
        %89 = vector.broadcast %cst_56 : f32 to vector<128x128xf32>
        %90 = arith.select %88, %86, %89 : vector<128x128xi1>, vector<128x128xf32>
        %c0_57 = arith.constant 0 : index
        %c0_58 = arith.constant 0 : index
        %91 = vector.load %arg18[%c0_57, %c0_58] : memref<1x128xf32, #tpu.memory_space<vmem>>, vector<1x128xf32>
        %cst_59 = arith.constant dense<0xFF800000> : vector<128xf32>
        %92 = vector.multi_reduction <maximumf>, %90, %cst_59 [0] : vector<128x128xf32> to vector<128xf32>
        %93 = vector.shape_cast %92 : vector<128xf32> to vector<1x128xf32>
        %94 = arith.maximumf %91, %93 : vector<1x128xf32>
        %c0_60 = arith.constant 0 : index
        %c0_61 = arith.constant 0 : index
        %95 = vector.load %arg18[%c0_60, %c0_61] : memref<1x128xf32, #tpu.memory_space<vmem>>, vector<1x128xf32>
        %96 = arith.subf %95, %94 : vector<1x128xf32>
        %97 = math.exp %96 : vector<1x128xf32>
        %cst_62 = arith.constant 0.000000e+00 : f32
        %98 = vector.broadcast %cst_62 : f32 to vector<128x128xf32>
        %99 = arith.cmpf ogt, %81, %98 : vector<128x128xf32>
        %100 = vector.broadcast %94 : vector<1x128xf32> to vector<128x128xf32>
        %101 = arith.subf %86, %100 : vector<128x128xf32>
        %102 = math.exp %101 : vector<128x128xf32>
        %cst_63 = arith.constant 0.000000e+00 : f32
        %103 = vector.broadcast %cst_63 : f32 to vector<128x128xf32>
        %104 = arith.select %99, %102, %103 : vector<128x128xi1>, vector<128x128xf32>
        %c0_64 = arith.constant 0 : index
        %c0_65 = arith.constant 0 : index
        %105 = vector.load %arg19[%c0_64, %c0_65] : memref<1x128xf32, #tpu.memory_space<vmem>>, vector<1x128xf32>
        %106 = arith.mulf %97, %105 : vector<1x128xf32>
        %cst_66 = arith.constant dense<0.000000e+00> : vector<128xf32>
        %107 = vector.multi_reduction <add>, %104, %cst_66 [0] : vector<128x128xf32> to vector<128xf32>
        %108 = vector.shape_cast %107 : vector<128xf32> to vector<1x128xf32>
        %109 = arith.addf %106, %108 : vector<1x128xf32>
        %c0_67 = arith.constant 0 : index
        %c0_68 = arith.constant 0 : index
        %110 = vector.load %arg19[%c0_67, %c0_68] : memref<1x128xf32, #tpu.memory_space<vmem>>, vector<1x128xf32>
        tpu.vector_store %arg19[%c0_67, %c0_68], %109 {strides = array<i32>} : memref<1x128xf32, #tpu.memory_space<vmem>>, vector<1x128xf32>,
        %c0_69 = arith.constant 0 : index
        %c0_70 = arith.constant 0 : index
        %111 = vector.load %arg20[%c0_69, %c0_70] : memref<128x128xf32, #tpu.memory_space<vmem>>, vector<128x128xf32>
        %112 = vector.broadcast %97 : vector<1x128xf32> to vector<128x128xf32>
        %113 = arith.mulf %112, %111 : vector<128x128xf32>
        %114 = arith.truncf %104 : vector<128x128xf32> to vector<128x128xbf16>
        %cst_71 = arith.constant dense<0.000000e+00> : vector<128x128xf32>
        %115 = tpu.matmul %73, %114, %cst_71 {dimension_numbers = #tpu.dot_dimension_numbers<[0], [0], [1], [1], [0, 1, 1, 1], [], []>} : vector<128x128xbf16>, vector<128x128xbf16>, vector<128x128xf32> -> vector<128x128xf32>
        %116 = arith.addf %113, %115 : vector<128x128xf32>
        %c0_72 = arith.constant 0 : index
        %c0_73 = arith.constant 0 : index
        %117 = vector.load %arg20[%c0_72, %c0_73] : memref<128x128xf32, #tpu.memory_space<vmem>>, vector<128x128xf32>
        tpu.vector_store %arg20[%c0_72, %c0_73], %116 {strides = array<i32>} : memref<128x128xf32, #tpu.memory_space<vmem>>, vector<128x128xf32>,
        %c0_74 = arith.constant 0 : index
        %c0_75 = arith.constant 0 : index
        %118 = vector.load %arg18[%c0_74, %c0_75] : memref<1x128xf32, #tpu.memory_space<vmem>>, vector<1x128xf32>
        tpu.vector_store %arg18[%c0_74, %c0_75], %94 {strides = array<i32>} : memref<1x128xf32, #tpu.memory_space<vmem>>, vector<1x128xf32>,
        %c0_i32_76 = arith.constant 0 : i32
        %119 = arith.cmpi eq, %arg1, %c0_i32_76 : i32
        %120 = arith.extui %119 : i1 to i32
        %c0_i32_77 = arith.constant 0 : i32
        %121 = arith.cmpi ne, %120, %c0_i32_77 : i32
        scf.if %121 {
          %c0_78 = arith.constant 0 : index
          %c0_79 = arith.constant 0 : index
          %122 = vector.load %arg19[%c0_78, %c0_79] : memref<1x128xf32, #tpu.memory_space<vmem>>, vector<1x128xf32>
          %cst_80 = arith.constant 9.99999968E-21 : f32
          %123 = vector.broadcast %cst_80 : f32 to vector<1x128xf32>
          %124 = arith.maximumf %122, %123 : vector<1x128xf32>
          %125 = tpu.reciprocal %124 {approx = true} : vector<1x128xf32> -> vector<1x128xf32>
          %c0_81 = arith.constant 0 : index
          %c0_82 = arith.constant 0 : index
          %126 = vector.load %arg20[%c0_81, %c0_82] : memref<128x128xf32, #tpu.memory_space<vmem>>, vector<128x128xf32>
          %127 = vector.broadcast %125 : vector<1x128xf32> to vector<128x128xf32>
          %128 = arith.mulf %126, %127 : vector<128x128xf32>
          %129 = arith.truncf %128 : vector<128x128xf32> to vector<128x128xbf16>
          %c0_83 = arith.constant 0 : index
          %c0_84 = arith.constant 0 : index
          %130 = vector.load %arg11[%c0_83, %c0_84] : memref<128x128xbf16, #tpu.memory_space<vmem>>, vector<128x128xbf16>
          %cst_85 = arith.constant dense<0.000000e+00> : vector<128x128xf32>
          %131 = tpu.matmul %129, %130, %cst_85 {dimension_numbers = #tpu.dot_dimension_numbers<[0], [0], [1], [1], [0, 1, 1, 1], [], []>} : vector<128x128xbf16>, vector<128x128xbf16>, vector<128x128xf32> -> vector<128x128xf32>
          %c0_86 = arith.constant 0 : index
          %c0_87 = arith.constant 0 : index
          %132 = vector.load %arg12[%c0_86, %c0_87] : memref<1x128xf32, #tpu.memory_space<vmem>>, vector<1x128xf32>
          %133 = vector.broadcast %132 : vector<1x128xf32> to vector<128x128xf32>
          %134 = arith.addf %131, %133 : vector<128x128xf32>
          %cst_88 = arith.constant 0.000000e+00 : f32
          %135 = vector.broadcast %cst_88 : f32 to vector<128x128xf32>
          %136 = arith.maximumf %134, %135 : vector<128x128xf32>
          %137 = arith.truncf %136 : vector<128x128xf32> to vector<128x128xbf16>
          %c0_89 = arith.constant 0 : index
          %c0_90 = arith.constant 0 : index
          %138 = vector.load %arg13[%c0_89, %c0_90] : memref<128x128xbf16, #tpu.memory_space<vmem>>, vector<128x128xbf16>
          %cst_91 = arith.constant dense<0.000000e+00> : vector<128x128xf32>
          %139 = tpu.matmul %137, %138, %cst_91 {dimension_numbers = #tpu.dot_dimension_numbers<[1], [0], [0], [1], [0, 0, 1, 1], [], []>} : vector<128x128xbf16>, vector<128x128xbf16>, vector<128x128xf32> -> vector<128x128xf32>
          %c0_92 = arith.constant 0 : index
          %c0_93 = arith.constant 0 : index
          %140 = vector.load %arg14[%c0_92, %c0_93] : memref<1x128xf32, #tpu.memory_space<vmem>>, vector<1x128xf32>
          %141 = vector.broadcast %140 : vector<1x128xf32> to vector<128x128xf32>
          %142 = arith.addf %139, %141 : vector<128x128xf32>
          %cst_94 = arith.constant dense<0xFF800000> : vector<128xf32>
          %143 = vector.multi_reduction <maximumf>, %142, %cst_94 [1] : vector<128x128xf32> to vector<128xf32>
          %144 = vector.shape_cast %143 : vector<128xf32> to vector<128x1xf32>
          %145 = vector.broadcast %144 : vector<128x1xf32> to vector<128x128xf32>
          %146 = arith.subf %142, %145 : vector<128x128xf32>
          %147 = math.exp %146 : vector<128x128xf32>
          %cst_95 = arith.constant dense<0.000000e+00> : vector<128xf32>
          %148 = vector.multi_reduction <add>, %147, %cst_95 [1] : vector<128x128xf32> to vector<128xf32>
          %149 = vector.shape_cast %148 : vector<128xf32> to vector<128x1xf32>
          %150 = math.log %149 : vector<128x1xf32>
          %151 = vector.broadcast %144 : vector<128x1xf32> to vector<128x128xf32>
          %152 = arith.subf %142, %151 : vector<128x128xf32>
          %153 = vector.broadcast %150 : vector<128x1xf32> to vector<128x128xf32>
          %154 = arith.subf %152, %153 : vector<128x128xf32>
          %c0_96 = arith.constant 0 : index
          %c0_97 = arith.constant 0 : index
          %155 = vector.load %arg15[%c0_96, %c0_97] : memref<128x128xf32, #tpu.memory_space<vmem>>, vector<128x128xf32>
          tpu.vector_store %arg15[%c0_96, %c0_97], %154 {strides = array<i32>} : memref<128x128xf32, #tpu.memory_space<vmem>>, vector<128x128xf32>,
        } else {
        }
      } else {
      }
    } else {
    }
    return
  }
  func.func @transform_0(%arg0: i32, %arg1: i32, %arg2: i32) -> (i32, i32) {
    %c0_i32 = arith.constant 0 : i32
    return %arg1, %arg2 : i32, i32
  }
  func.func @transform_1(%arg0: i32, %arg1: i32, %arg2: i32) -> (i32, i32) {
    %c0_i32 = arith.constant 0 : i32
    %0 = arith.cmpi eq, %arg0, %c0_i32 : i32
    %c0_i32_0 = arith.constant 0 : i32
    %1 = arith.cmpi eq, %arg1, %c0_i32_0 : i32
    %2 = arith.andi %0, %1 : i1
    %c0_i32_1 = arith.constant 0 : i32
    %3 = arith.select %2, %arg2, %c0_i32_1 : i32
    %c0_i32_2 = arith.constant 0 : i32
    %c0_i32_3 = arith.constant 0 : i32
    return %3, %c0_i32_2 : i32, i32
  }
  func.func @transform_2(%arg0: i32, %arg1: i32, %arg2: i32) -> (i32, i32, i32) {
    %c0_i32 = arith.constant 0 : i32
    %c0_i32_0 = arith.constant 0 : i32
    %c0_i32_1 = arith.constant 0 : i32
    return %arg0, %c0_i32, %c0_i32_0 : i32, i32, i32
  }
  func.func @transform_3(%arg0: i32, %arg1: i32, %arg2: i32) -> (i32, i32, i32) {
    %c0_i32 = arith.constant 0 : i32
    %c0_i32_0 = arith.constant 0 : i32
    %c0_i32_1 = arith.constant 0 : i32
    return %arg0, %c0_i32, %c0_i32_0 : i32, i32, i32
  }
  func.func @transform_4(%arg0: i32, %arg1: i32, %arg2: i32) -> (i32, i32, i32) {
    %c0_i32 = arith.constant 0 : i32
    %c0_i32_0 = arith.constant 0 : i32
    %c0_i32_1 = arith.constant 0 : i32
    return %arg0, %c0_i32, %c0_i32_0 : i32, i32, i32
  }
  func.func @transform_5(%arg0: i32, %arg1: i32, %arg2: i32) -> (i32, i32) {
    %c1_i32 = arith.constant 1 : i32
    %0 = arith.cmpi eq, %arg0, %c1_i32 : i32
    %c0_i32 = arith.constant 0 : i32
    %1 = arith.select %0, %arg1, %c0_i32 : i32
    %c0_i32_0 = arith.constant 0 : i32
    %c0_i32_1 = arith.constant 0 : i32
    return %1, %c0_i32_0 : i32, i32
  }
  func.func @transform_6(%arg0: i32, %arg1: i32, %arg2: i32) -> (i32, i32) {
    %c0_i32 = arith.constant 0 : i32
    %c0_i32_0 = arith.constant 0 : i32
    %c0_i32_1 = arith.constant 0 : i32
    return %c0_i32, %c0_i32_0 : i32, i32
  }
  func.func @transform_7(%arg0: i32, %arg1: i32, %arg2: i32) -> (i32, i32) {
    %c0_i32 = arith.constant 0 : i32
    %c0_i32_0 = arith.constant 0 : i32
    %c0_i32_1 = arith.constant 0 : i32
    return %c0_i32, %c0_i32_0 : i32, i32
  }
  func.func @transform_8(%arg0: i32, %arg1: i32, %arg2: i32) -> (i32, i32) {
    %c0_i32 = arith.constant 0 : i32
    %c0_i32_0 = arith.constant 0 : i32
    %c0_i32_1 = arith.constant 0 : i32
    return %c0_i32, %c0_i32_0 : i32, i32
  }
  func.func @transform_9(%arg0: i32, %arg1: i32, %arg2: i32) -> (i32, i32) {
    %c0_i32 = arith.constant 0 : i32
    %c0_i32_0 = arith.constant 0 : i32
    %c0_i32_1 = arith.constant 0 : i32
    return %c0_i32, %c0_i32_0 : i32, i32
  }
  func.func @transform_10(%arg0: i32, %arg1: i32, %arg2: i32) -> (i32, i32) {
    %c0_i32 = arith.constant 0 : i32
    %c0_i32_0 = arith.constant 0 : i32
    %c0_i32_1 = arith.constant 0 : i32
    return %c0_i32, %c0_i32_0 : i32, i32
  }
  func.func @transform_11(%arg0: i32, %arg1: i32, %arg2: i32) -> (i32, i32) {
    %c0_i32 = arith.constant 0 : i32
    %c0_i32_0 = arith.constant 0 : i32
    %c0_i32_1 = arith.constant 0 : i32
    return %c0_i32, %c0_i32_0 : i32, i32
  }
  func.func @transform_12(%arg0: i32, %arg1: i32, %arg2: i32) -> (i32, i32) {
    %c0_i32 = arith.constant 0 : i32
    %c0_i32_0 = arith.constant 0 : i32
    %c0_i32_1 = arith.constant 0 : i32
    return %c0_i32, %c0_i32_0 : i32, i32
  }
}

</mosaic_0001>

<llo_original>
// kernel: global_attention_net_forward.1
$region0: #{global_attention_net_forward.1}
  #allocation0 [shape = 'u32[]', space=smem, size = 0x4, offset = 0x4, fixed_abs, tag = 'smem constant byte address 0x4 - core index']
  #allocation1 [shape = 'u32[144,128]{1,0:T(1,128)}', space=vmem, size = 0x12000, scoped, tag = 'internal scratch']
  #allocation2 [shape = 'bf16[256,128]{1,0:T(8,128)(2,1)}', space=vmem, size = 0x10000, scoped, tag = 'scratch operand']
  #allocation3 [shape = 'f32[128,128]{1,0:T(8,128)}', space=vmem, size = 0x10000, scoped, tag = 'scratch operand']
  #allocation4 [shape = 'f32[1,128]{1,0:T(1,128)}', space=vmem, size = 0x200, scoped, tag = 'scratch operand']
  #allocation5 [shape = 'f32[1,128]{1,0:T(1,128)}', space=vmem, size = 0x200, scoped, tag = 'scratch operand']
  #allocation6 [shape = 'f32[128,128]{1,0:T(8,128)}', space=vmem, size = 0x10000, scoped, tag = 'scratch operand']
  #allocation7 [shape = 'f32[1,1]{1,0:T(1,128)S(6)}', space=smem, size = 0x200, scoped, tag = 'scoped memory for global_attention_net_forward.1']
  %s0 = inlined_call_operand.vmem [shape: bf16[128,128], index: 0, kind: input, shape index: {}]
  %s1 = inlined_call_operand.vmem [shape: bf16[128,128], index: 1, kind: input, shape index: {}]
  %s2 = inlined_call_operand.vmem [shape: bf16[2,128,128], index: 2, kind: input, shape index: {}]
  %s3 = inlined_call_operand.vmem [shape: f32[2,1,128], index: 3, kind: input, shape index: {}]
  %s4 = inlined_call_operand.vmem [shape: bf16[2,128,128], index: 4, kind: input, shape index: {}]
  %s5 = inlined_call_operand.vmem [shape: f32[128,128], index: 5, kind: input, shape index: {}]
  %s6 = inlined_call_operand.vmem [shape: bf16[128,128], index: 6, kind: input, shape index: {}]
  %s7 = inlined_call_operand.<no memory space> [shape: f32[1,1], index: 7, kind: input, shape index: {}]
  %s8 = inlined_call_operand.vmem [shape: bf16[128,128], index: 8, kind: input, shape index: {}]
  %s9 = inlined_call_operand.vmem [shape: f32[1,128], index: 9, kind: input, shape index: {}]
  %s10 = inlined_call_operand.vmem [shape: bf16[128,128], index: 10, kind: input, shape index: {}]
  %s11 = inlined_call_operand.vmem [shape: f32[1,128], index: 11, kind: input, shape index: {}]
  %s12 = inlined_call_operand.vmem [shape: f32[128,128], index: 12, kind: output, shape index: {}]
  %s13 = sld [smem:[#allocation0]]
  $region105: #{global_attention_net_forward.1} parent=0
    _
  %s15 = ssub.s32 1, %s13
  %s16 = scalar_select 0, %s15, %s13
  %17 = sst [smem:[#allocation7]] %s7
  loop: start=0, step=1, limit=4
  $region2: #{global_attention_net_forward.1} parent=0 // loop_pre_header
    _
  $region3: #{global_attention_net_forward.1} parent=0 // loop_header
    %s19 = sphi 0, %s23
    %p20 = scmp.ge.s32.totalorder %s19, 4
    %s26 = sphi 0, %s45
    %s27 = sphi 0, %s41
    %s28 = sphi 0, %s37
    %s29 = sphi 0, %s26
    %s30 = sphi 0, %s27
    %s31 = sphi 0, %s28
    %s32 = sphi 0, %s29
    %s33 = sphi 0, %s30
    %s34 = sphi 0, %s31
    %s50 = sphi 0, %s52
    %s53 = sphi 0, %s50
    %s54 = sphi 0, %s53
    %s70 = sphi 0, %s54
    %s86 = sphi 0, %s88
    %s89 = sphi 0, %s86
    %s90 = sphi 0, %s89
    %s106 = sphi 0, %s90
    %s112 = sphi 0, %s114
    %s115 = sphi 0, %s112
    %s116 = sphi 0, %s115
    %s132 = sphi 0, %s116
    %s138 = sphi 0, %s140
    %s141 = sphi 0, %s138
    %s142 = sphi 0, %s141
    %s158 = sphi 0, %s142
    %s164 = sphi 0, %s166
    %s167 = sphi 0, %s164
    %s168 = sphi 0, %s167
    %s184 = sphi 0, %s168
    %s194 = sphi 0, %s196
    %s197 = sphi 0, %s194
    %s198 = sphi 0, %s197
    %s214 = sphi 0, %s198
    %s218 = sphi 0, %s218
    %s220 = sphi 0, %s218
    %s221 = sphi 0, %s220
    %s235 = sphi 0, %s221
    %s239 = sphi 0, %s239
    %s241 = sphi 0, %s239
    %s242 = sphi 0, %s241
    %s256 = sphi 0, %s242
    %s260 = sphi 0, %s260
    %s262 = sphi 0, %s260
    %s263 = sphi 0, %s262
    %s277 = sphi 0, %s263
    %s281 = sphi 0, %s281
    %s283 = sphi 0, %s281
    %s284 = sphi 0, %s283
    %s298 = sphi 0, %s284
    %s302 = sphi 0, %s302
    %s304 = sphi 0, %s302
    %s305 = sphi 0, %s304
    %s319 = sphi 0, %s305
    %s323 = sphi 0, %s323
    %s325 = sphi 0, %s323
    %s326 = sphi 0, %s325
    %s340 = sphi 0, %s326
    %s344 = sphi 0, %s344
    %s346 = sphi 0, %s344
    %s347 = sphi 0, %s346
    %s361 = sphi 0, %s347
  $region4: #{global_attention_net_forward.1} parent=0 // loop_header_branch
    %22 = sbr.rel (%p20) target = $region8
  $region5: #{global_attention_net_forward.1} parent=0 // loop_body
    %s24 = ssub.s32 %s19, 1
    %s25 = ssub.s32 %s19, 2
    %s35 = sadd.s32 1, %s28
    %p36 = scmp.ge.s32.totalorder %s35, 1
    %s37 = scalar_select %p36, 0, %s35
    %s38 = sadd.s32 1, %s27
    %s39 = scalar_select %p36, %s38, %s27
    %p40 = scmp.ge.s32.totalorder %s39, 1
    %s41 = scalar_select %p40, 0, %s39
    %s42 = sadd.s32 1, %s26
    %s43 = scalar_select %p40, %s42, %s26
    %p44 = scmp.ge.s32.totalorder %s43, 2
    %s45 = scalar_select %p44, 0, %s43
    %s46 = ssub.s32 %s27, %s41
    %s47 = ssub.s32 %s28, %s37
    %s48 = sor.u32 %s46, %s47
    %p49 = scmp.eq.s32.totalorder %s48, 0
    %s51 = sadd.s32 %s50, 1
    %s52 = scalar_select %p49, %s50, %s51
    %p55 = pneg %p49
    %p56 = scmp.eq.s32.totalorder %s19, 1
    %p57 = por %p55, %p56
    %p58 = scmp.ne.s32.totalorder %s50, %s53
    %p59 = scmp.eq.s32.totalorder %s19, 0
    %p60 = por %p58, %p59
    %p61 = scmp.ne.s32.totalorder %s50, %s53
    %p62 = scmp.eq.s32.totalorder %s24, 1
    %p63 = por %p61, %p62
    %p64 = scmp.ne.s32.totalorder %s53, %s54
    %p65 = scmp.eq.s32.totalorder %s24, 0
    %p66 = por %p64, %p65
    %p67 = scmp.ne.s32.totalorder %s53, %s54
    %p68 = scmp.eq.s32.totalorder %s25, 1
    %p69 = por %p67, %p68
    %p71 = scmp.ne.s32.totalorder %s54, %s70
    %p72 = scmp.eq.s32.totalorder %s25, 0
    %p73 = por %p71, %p72
    %p74 = scmp.eq.s32.totalorder %s26, 0
    %p75 = scmp.eq.s32.totalorder %s27, 0
    %p76 = pnand %p74, %p75
    %p77 = pneg %p76
    %s78 = scalar_select %p77, %s28, 0
    %p79 = scmp.eq.s32.totalorder %s45, 0
    %p80 = scmp.eq.s32.totalorder %s41, 0
    %p81 = pnand %p79, %p80
    %p82 = pneg %p81
    %s83 = scalar_select %p82, %s37, 0
    %s84 = ssub.s32 %s78, %s83
    %p85 = scmp.eq.s32.totalorder %s84, 0
    %s87 = sadd.s32 %s86, 1
    %s88 = scalar_select %p85, %s86, %s87
    %p91 = pneg %p85
    %p92 = scmp.eq.s32.totalorder %s19, 1
    %p93 = por %p91, %p92
    %p94 = scmp.ne.s32.totalorder %s86, %s89
    %p95 = scmp.eq.s32.totalorder %s19, 0
    %p96 = por %p94, %p95
    %p97 = scmp.ne.s32.totalorder %s86, %s89
    %p98 = scmp.eq.s32.totalorder %s24, 1
    %p99 = por %p97, %p98
    %p100 = scmp.ne.s32.totalorder %s89, %s90
    %p101 = scmp.eq.s32.totalorder %s24, 0
    %p102 = por %p100, %p101
    %p103 = scmp.ne.s32.totalorder %s89, %s90
    %p104 = scmp.eq.s32.totalorder %s25, 1
    %p105 = por %p103, %p104
    %p107 = scmp.ne.s32.totalorder %s90, %s106
    %p108 = scmp.eq.s32.totalorder %s25, 0
    %p109 = por %p107, %p108
    %s110 = ssub.s32 %s26, %s45
    %p111 = scmp.eq.s32.totalorder %s110, 0
    %s113 = sadd.s32 %s112, 1
    %s114 = scalar_select %p111, %s112, %s113
    %p117 = pneg %p111
    %p118 = scmp.eq.s32.totalorder %s19, 1
    %p119 = por %p117, %p118
    %p120 = scmp.ne.s32.totalorder %s112, %s115
    %p121 = scmp.eq.s32.totalorder %s19, 0
    %p122 = por %p120, %p121
    %p123 = scmp.ne.s32.totalorder %s112, %s115
    %p124 = scmp.eq.s32.totalorder %s24, 1
    %p125 = por %p123, %p124
    %p126 = scmp.ne.s32.totalorder %s115, %s116
    %p127 = scmp.eq.s32.totalorder %s24, 0
    %p128 = por %p126, %p127
    %p129 = scmp.ne.s32.totalorder %s115, %s116
    %p130 = scmp.eq.s32.totalorder %s25, 1
    %p131 = por %p129, %p130
    %p133 = scmp.ne.s32.totalorder %s116, %s132
    %p134 = scmp.eq.s32.totalorder %s25, 0
    %p135 = por %p133, %p134
    %s136 = ssub.s32 %s26, %s45
    %p137 = scmp.eq.s32.totalorder %s136, 0
    %s139 = sadd.s32 %s138, 1
    %s140 = scalar_select %p137, %s138, %s139
    %p143 = pneg %p137
    %p144 = scmp.eq.s32.totalorder %s19, 1
    %p145 = por %p143, %p144
    %p146 = scmp.ne.s32.totalorder %s138, %s141
    %p147 = scmp.eq.s32.totalorder %s19, 0
    %p148 = por %p146, %p147
    %p149 = scmp.ne.s32.totalorder %s138, %s141
    %p150 = scmp.eq.s32.totalorder %s24, 1
    %p151 = por %p149, %p150
    %p152 = scmp.ne.s32.totalorder %s141, %s142
    %p153 = scmp.eq.s32.totalorder %s24, 0
    %p154 = por %p152, %p153
    %p155 = scmp.ne.s32.totalorder %s141, %s142
    %p156 = scmp.eq.s32.totalorder %s25, 1
    %p157 = por %p155, %p156
    %p159 = scmp.ne.s32.totalorder %s142, %s158
    %p160 = scmp.eq.s32.totalorder %s25, 0
    %p161 = por %p159, %p160
    %s162 = ssub.s32 %s26, %s45
    %p163 = scmp.eq.s32.totalorder %s162, 0
    %s165 = sadd.s32 %s164, 1
    %s166 = scalar_select %p163, %s164, %s165
    %p169 = pneg %p163
    %p170 = scmp.eq.s32.totalorder %s19, 1
    %p171 = por %p169, %p170
    %p172 = scmp.ne.s32.totalorder %s164, %s167
    %p173 = scmp.eq.s32.totalorder %s19, 0
    %p174 = por %p172, %p173
    %p175 = scmp.ne.s32.totalorder %s164, %s167
    %p176 = scmp.eq.s32.totalorder %s24, 1
    %p177 = por %p175, %p176
    %p178 = scmp.ne.s32.totalorder %s167, %s168
    %p179 = scmp.eq.s32.totalorder %s24, 0
    %p180 = por %p178, %p179
    %p181 = scmp.ne.s32.totalorder %s167, %s168
    %p182 = scmp.eq.s32.totalorder %s25, 1
    %p183 = por %p181, %p182
    %p185 = scmp.ne.s32.totalorder %s168, %s184
    %p186 = scmp.eq.s32.totalorder %s25, 0
    %p187 = por %p185, %p186
    %p188 = scmp.eq.s32.totalorder %s26, 1
    %s189 = scalar_select %p188, %s27, 0
    %p190 = scmp.eq.s32.totalorder %s45, 1
    %s191 = scalar_select %p190, %s41, 0
    %s192 = ssub.s32 %s189, %s191
    %p193 = scmp.eq.s32.totalorder %s192, 0
    %s195 = sadd.s32 %s194, 1
    %s196 = scalar_select %p193, %s194, %s195
    %p199 = pneg %p193
    %p200 = scmp.eq.s32.totalorder %s19, 1
    %p201 = por %p199, %p200
    %p202 = scmp.ne.s32.totalorder %s194, %s197
    %p203 = scmp.eq.s32.totalorder %s19, 0
    %p204 = por %p202, %p203
    %p205 = scmp.ne.s32.totalorder %s194, %s197
    %p206 = scmp.eq.s32.totalorder %s24, 1
    %p207 = por %p205, %p206
    %p208 = scmp.ne.s32.totalorder %s197, %s198
    %p209 = scmp.eq.s32.totalorder %s24, 0
    %p210 = por %p208, %p209
    %p211 = scmp.ne.s32.totalorder %s197, %s198
    %p212 = scmp.eq.s32.totalorder %s25, 1
    %p213 = por %p211, %p212
    %p215 = scmp.ne.s32.totalorder %s198, %s214
    %p216 = scmp.eq.s32.totalorder %s25, 0
    %p217 = por %p215, %p216
    %s219 = sadd.s32 %s218, 1
    %p222 = scmp.eq.s32.totalorder %s19, 1
    %p223 = scmp.ne.s32.totalorder %s218, %s220
    %p224 = scmp.eq.s32.totalorder %s19, 0
    %p225 = por %p223, %p224
    %p226 = scmp.ne.s32.totalorder %s218, %s220
    %p227 = scmp.eq.s32.totalorder %s24, 1
    %p228 = por %p226, %p227
    %p229 = scmp.ne.s32.totalorder %s220, %s221
    %p230 = scmp.eq.s32.totalorder %s24, 0
    %p231 = por %p229, %p230
    %p232 = scmp.ne.s32.totalorder %s220, %s221
    %p233 = scmp.eq.s32.totalorder %s25, 1
    %p234 = por %p232, %p233
    %p236 = scmp.ne.s32.totalorder %s221, %s235
    %p237 = scmp.eq.s32.totalorder %s25, 0
    %p238 = por %p236, %p237
    %s240 = sadd.s32 %s239, 1
    %p243 = scmp.eq.s32.totalorder %s19, 1
    %p244 = scmp.ne.s32.totalorder %s239, %s241
    %p245 = scmp.eq.s32.totalorder %s19, 0
    %p246 = por %p244, %p245
    %p247 = scmp.ne.s32.totalorder %s239, %s241
    %p248 = scmp.eq.s32.totalorder %s24, 1
    %p249 = por %p247, %p248
    %p250 = scmp.ne.s32.totalorder %s241, %s242
    %p251 = scmp.eq.s32.totalorder %s24, 0
    %p252 = por %p250, %p251
    %p253 = scmp.ne.s32.totalorder %s241, %s242
    %p254 = scmp.eq.s32.totalorder %s25, 1
    %p255 = por %p253, %p254
    %p257 = scmp.ne.s32.totalorder %s242, %s256
    %p258 = scmp.eq.s32.totalorder %s25, 0
    %p259 = por %p257, %p258
    %s261 = sadd.s32 %s260, 1
    %p264 = scmp.eq.s32.totalorder %s19, 1
    %p265 = scmp.ne.s32.totalorder %s260, %s262
    %p266 = scmp.eq.s32.totalorder %s19, 0
    %p267 = por %p265, %p266
    %p268 = scmp.ne.s32.totalorder %s260, %s262
    %p269 = scmp.eq.s32.totalorder %s24, 1
    %p270 = por %p268, %p269
    %p271 = scmp.ne.s32.totalorder %s262, %s263
    %p272 = scmp.eq.s32.totalorder %s24, 0
    %p273 = por %p271, %p272
    %p274 = scmp.ne.s32.totalorder %s262, %s263
    %p275 = scmp.eq.s32.totalorder %s25, 1
    %p276 = por %p274, %p275
    %p278 = scmp.ne.s32.totalorder %s263, %s277
    %p279 = scmp.eq.s32.totalorder %s25, 0
    %p280 = por %p278, %p279
    %s282 = sadd.s32 %s281, 1
    %p285 = scmp.eq.s32.totalorder %s19, 1
    %p286 = scmp.ne.s32.totalorder %s281, %s283
    %p287 = scmp.eq.s32.totalorder %s19, 0
    %p288 = por %p286, %p287
    %p289 = scmp.ne.s32.totalorder %s281, %s283
    %p290 = scmp.eq.s32.totalorder %s24, 1
    %p291 = por %p289, %p290
    %p292 = scmp.ne.s32.totalorder %s283, %s284
    %p293 = scmp.eq.s32.totalorder %s24, 0
    %p294 = por %p292, %p293
    %p295 = scmp.ne.s32.totalorder %s283, %s284
    %p296 = scmp.eq.s32.totalorder %s25, 1
    %p297 = por %p295, %p296
    %p299 = scmp.ne.s32.totalorder %s284, %s298
    %p300 = scmp.eq.s32.totalorder %s25, 0
    %p301 = por %p299, %p300
    %s303 = sadd.s32 %s302, 1
    %p306 = scmp.eq.s32.totalorder %s19, 1
    %p307 = scmp.ne.s32.totalorder %s302, %s304
    %p308 = scmp.eq.s32.totalorder %s19, 0
    %p309 = por %p307, %p308
    %p310 = scmp.ne.s32.totalorder %s302, %s304
    %p311 = scmp.eq.s32.totalorder %s24, 1
    %p312 = por %p310, %p311
    %p313 = scmp.ne.s32.totalorder %s304, %s305
    %p314 = scmp.eq.s32.totalorder %s24, 0
    %p315 = por %p313, %p314
    %p316 = scmp.ne.s32.totalorder %s304, %s305
    %p317 = scmp.eq.s32.totalorder %s25, 1
    %p318 = por %p316, %p317
    %p320 = scmp.ne.s32.totalorder %s305, %s319
    %p321 = scmp.eq.s32.totalorder %s25, 0
    %p322 = por %p320, %p321
    %s324 = sadd.s32 %s323, 1
    %p327 = scmp.eq.s32.totalorder %s19, 1
    %p328 = scmp.ne.s32.totalorder %s323, %s325
    %p329 = scmp.eq.s32.totalorder %s19, 0
    %p330 = por %p328, %p329
    %p331 = scmp.ne.s32.totalorder %s323, %s325
    %p332 = scmp.eq.s32.totalorder %s24, 1
    %p333 = por %p331, %p332
    %p334 = scmp.ne.s32.totalorder %s325, %s326
    %p335 = scmp.eq.s32.totalorder %s24, 0
    %p336 = por %p334, %p335
    %p337 = scmp.ne.s32.totalorder %s325, %s326
    %p338 = scmp.eq.s32.totalorder %s25, 1
    %p339 = por %p337, %p338
    %p341 = scmp.ne.s32.totalorder %s326, %s340
    %p342 = scmp.eq.s32.totalorder %s25, 0
    %p343 = por %p341, %p342
    %s345 = sadd.s32 %s344, 1
    %p348 = scmp.eq.s32.totalorder %s19, 1
    %p349 = scmp.ne.s32.totalorder %s344, %s346
    %p350 = scmp.eq.s32.totalorder %s19, 0
    %p351 = por %p349, %p350
    %p352 = scmp.ne.s32.totalorder %s344, %s346
    %p353 = scmp.eq.s32.totalorder %s24, 1
    %p354 = por %p352, %p353
    %p355 = scmp.ne.s32.totalorder %s346, %s347
    %p356 = scmp.eq.s32.totalorder %s24, 0
    %p357 = por %p355, %p356
    %p358 = scmp.ne.s32.totalorder %s346, %s347
    %p359 = scmp.eq.s32.totalorder %s25, 1
    %p360 = por %p358, %p359
    %p362 = scmp.ne.s32.totalorder %s347, %s361
    %p363 = scmp.eq.s32.totalorder %s25, 0
    %p364 = por %p362, %p363
    %p365 = scmp.le.s32.totalorder 1, %s19
    %p366 = scmp.lt.s32.totalorder %s19, 3
    %p367 = pnand %p365, %p366
    %p368 = pneg %p367
    // Predicated region
    $region9: #{global_attention_net_forward.1} parent=5 // pred_check
      _
    $region10: #{global_attention_net_forward.1} parent=5 // pred_check_branch
      %370 = sbr.rel (%p367) target = $region12
    $region11: #{global_attention_net_forward.1} parent=5 // pred_region
      %s371 = ssub.s32 %s19, 1
      // Predicated region
      $region13: #{global_attention_net_forward.1} parent=11 // pred_check
        %p372 = pneg %p66
      $region14: #{global_attention_net_forward.1} parent=11 // pred_check_branch
        %374 = sbr.rel (%p372) target = $region16
      $region15: #{global_attention_net_forward.1} parent=11 // pred_region
        %s375 = smul.u32 16, %s30
        %p376 = scmp.lt.s32.totalorder %s375, 15
        %s377 = scalar_select %p376, %s375, 15
        %p378 = scmp.lt.s32.totalorder %s31, 0
        %s379 = scalar_select %p378, %s31, 0
        %s380 = sadd.s32 %s379, %s377
        %s381 = smul.addr %s380, 4
        %s382 = scalar_lea.vmem %s0, %s381
        %s383 = smul.u32 16, %s30
      $region16: #{global_attention_net_forward.1} parent=11 // pred_fallthru
        _
      // Predicated region
      $region17: #{global_attention_net_forward.1} parent=11 // pred_check
        %p384 = pneg %p231
      $region18: #{global_attention_net_forward.1} parent=11 // pred_check_branch
        %386 = sbr.rel (%p384) target = $region20
      $region19: #{global_attention_net_forward.1} parent=11 // pred_region
        _
      $region20: #{global_attention_net_forward.1} parent=11 // pred_fallthru
        _
      // Predicated region
      $region21: #{global_attention_net_forward.1} parent=11 // pred_check
        %p387 = pneg %p252
      $region22: #{global_attention_net_forward.1} parent=11 // pred_check_branch
        %389 = sbr.rel (%p387) target = $region24
      $region23: #{global_attention_net_forward.1} parent=11 // pred_region
        _
      $region24: #{global_attention_net_forward.1} parent=11 // pred_fallthru
        _
      // Predicated region
      $region25: #{global_attention_net_forward.1} parent=11 // pred_check
        %p390 = pneg %p273
      $region26: #{global_attention_net_forward.1} parent=11 // pred_check_branch
        %392 = sbr.rel (%p390) target = $region28
      $region27: #{global_attention_net_forward.1} parent=11 // pred_region
        _
      $region28: #{global_attention_net_forward.1} parent=11 // pred_fallthru
        _
      // Predicated region
      $region29: #{global_attention_net_forward.1} parent=11 // pred_check
        %p393 = pneg %p294
      $region30: #{global_attention_net_forward.1} parent=11 // pred_check_branch
        %395 = sbr.rel (%p393) target = $region32
      $region31: #{global_attention_net_forward.1} parent=11 // pred_region
        _
      $region32: #{global_attention_net_forward.1} parent=11 // pred_fallthru
        _
      // Predicated region
      $region33: #{global_attention_net_forward.1} parent=11 // pred_check
        %p396 = pneg %p315
      $region34: #{global_attention_net_forward.1} parent=11 // pred_check_branch
        %398 = sbr.rel (%p396) target = $region36
      $region35: #{global_attention_net_forward.1} parent=11 // pred_region
        _
      $region36: #{global_attention_net_forward.1} parent=11 // pred_fallthru
        _
      // Predicated region
      $region37: #{global_attention_net_forward.1} parent=11 // pred_check
        %p399 = pneg %p336
      $region38: #{global_attention_net_forward.1} parent=11 // pred_check_branch
        %401 = sbr.rel (%p399) target = $region40
      $region39: #{global_attention_net_forward.1} parent=11 // pred_region
        _
      $region40: #{global_attention_net_forward.1} parent=11 // pred_fallthru
        _
    $region12: #{global_attention_net_forward.1} parent=5 // pred_fallthru
      _
    %p402 = scmp.lt.s32.totalorder %s19, 2
    // Predicated region
    $region41: #{global_attention_net_forward.1} parent=5 // pred_check
      %p403 = pneg %p402
    $region42: #{global_attention_net_forward.1} parent=5 // pred_check_branch
      %405 = sbr.rel (%p403) target = $region44
    $region43: #{global_attention_net_forward.1} parent=5 // pred_region
      // Predicated region
      $region45: #{global_attention_net_forward.1} parent=43 // pred_check
        %p406 = pneg %p96
      $region46: #{global_attention_net_forward.1} parent=43 // pred_check_branch
        %408 = sbr.rel (%p406) target = $region48
      $region47: #{global_attention_net_forward.1} parent=43 // pred_region
        %p409 = scmp.eq.s32.totalorder %s26, 0
        %p410 = scmp.eq.s32.totalorder %s27, 0
        %p411 = pnand %p409, %p410
        %p412 = pneg %p411
        %s413 = scalar_select %p412, %s28, 0
        %s414 = smul.u32 16, %s413
        %p415 = scmp.lt.s32.totalorder %s414, 15
        %s416 = scalar_select %p415, %s414, 15
        %s417 = smul.addr %s416, 4
        %s418 = scalar_lea.vmem %s1, %s417
        %p419 = scmp.eq.s32.totalorder %s26, 0
        %p420 = scmp.eq.s32.totalorder %s27, 0
        %p421 = pnand %p419, %p420
        %p422 = pneg %p421
        %s423 = scalar_select %p422, %s28, 0
        %s424 = smul.u32 16, %s423
      $region48: #{global_attention_net_forward.1} parent=43 // pred_fallthru
        _
      // Predicated region
      $region49: #{global_attention_net_forward.1} parent=43 // pred_check
        %p425 = pneg %p122
      $region50: #{global_attention_net_forward.1} parent=43 // pred_check_branch
        %427 = sbr.rel (%p425) target = $region52
      $region51: #{global_attention_net_forward.1} parent=43 // pred_region
        %p428 = scmp.lt.s32.totalorder %s26, 1
        %s429 = scalar_select %p428, %s26, 1
        %s430 = smul.addr %s429, 16
        %s431 = smul.addr %s430, 4
        %s432 = scalar_lea.vmem %s2, %s431
      $region52: #{global_attention_net_forward.1} parent=43 // pred_fallthru
        _
      // Predicated region
      $region53: #{global_attention_net_forward.1} parent=43 // pred_check
        %p433 = pneg %p148
      $region54: #{global_attention_net_forward.1} parent=43 // pred_check_branch
        %435 = sbr.rel (%p433) target = $region56
      $region55: #{global_attention_net_forward.1} parent=43 // pred_region
        %p436 = scmp.lt.s32.totalorder %s26, 1
        %s437 = scalar_select %p436, %s26, 1
        %s438 = scalar_lea.vmem %s3, %s437
      $region56: #{global_attention_net_forward.1} parent=43 // pred_fallthru
        _
      // Predicated region
      $region57: #{global_attention_net_forward.1} parent=43 // pred_check
        %p439 = pneg %p174
      $region58: #{global_attention_net_forward.1} parent=43 // pred_check_branch
        %441 = sbr.rel (%p439) target = $region60
      $region59: #{global_attention_net_forward.1} parent=43 // pred_region
        %p442 = scmp.lt.s32.totalorder %s26, 1
        %s443 = scalar_select %p442, %s26, 1
        %s444 = smul.addr %s443, 16
        %s445 = smul.addr %s444, 4
        %s446 = scalar_lea.vmem %s4, %s445
      $region60: #{global_attention_net_forward.1} parent=43 // pred_fallthru
        _
      // Predicated region
      $region61: #{global_attention_net_forward.1} parent=43 // pred_check
        %p447 = pneg %p204
      $region62: #{global_attention_net_forward.1} parent=43 // pred_check_branch
        %449 = sbr.rel (%p447) target = $region64
      $region63: #{global_attention_net_forward.1} parent=43 // pred_region
        %p450 = scmp.eq.s32.totalorder %s26, 1
        %s451 = scalar_select %p450, %s27, 0
        %s452 = smul.u32 16, %s451
        %p453 = scmp.lt.s32.totalorder %s452, 15
        %s454 = scalar_select %p453, %s452, 15
        %s455 = smul.addr %s454, 8
        %s456 = scalar_lea.vmem %s5, %s455
        %p457 = scmp.eq.s32.totalorder %s26, 1
        %s458 = scalar_select %p457, %s27, 0
        %s459 = smul.u32 16, %s458
      $region64: #{global_attention_net_forward.1} parent=43 // pred_fallthru
        _
    $region44: #{global_attention_net_forward.1} parent=5 // pred_fallthru
      _
    %p460 = scmp.le.s32.totalorder 1, %s19
    %p461 = scmp.lt.s32.totalorder %s19, 3
    %p462 = pnand %p460, %p461
    %p463 = pneg %p462
    // Predicated region
    $region65: #{global_attention_net_forward.1} parent=5 // pred_check
      _
    $region66: #{global_attention_net_forward.1} parent=5 // pred_check_branch
      %465 = sbr.rel (%p462) target = $region68
    $region67: #{global_attention_net_forward.1} parent=5 // pred_region
      %s466 = ssub.s32 %s19, 1
      %s467 = smul.u32 16, %s30
      %p468 = scmp.lt.s32.totalorder %s467, 15
      %s469 = scalar_select %p468, %s467, 15
      %p470 = scmp.lt.s32.totalorder %s31, 0
      %s471 = scalar_select %p470, %s31, 0
      %s472 = sadd.s32 %s471, %s469
      %s473 = smul.addr %s472, 4
      %s474 = scalar_lea.vmem %s0, %s473
      %p475 = pneg %p66
      %p476 = pneg %p63
      %p477 = scmp.eq.s32.totalorder %s29, 0
      %p478 = scmp.eq.s32.totalorder %s30, 0
      %p479 = pnand %p477, %p478
      %p480 = pneg %p479
      %s481 = scalar_select %p480, %s31, 0
      %s482 = smul.u32 16, %s481
      %p483 = scmp.lt.s32.totalorder %s482, 15
      %s484 = scalar_select %p483, %s482, 15
      %s485 = smul.addr %s484, 4
      %s486 = scalar_lea.vmem %s1, %s485
      %p487 = pneg %p102
      %p488 = pneg %p99
      %p489 = scmp.lt.s32.totalorder %s29, 1
      %s490 = scalar_select %p489, %s29, 1
      %s491 = smul.addr %s490, 16
      %s492 = smul.addr %s491, 4
      %s493 = scalar_lea.vmem %s2, %s492
      %p494 = pneg %p128
      %p495 = pneg %p125
      %p496 = scmp.lt.s32.totalorder %s29, 1
      %s497 = scalar_select %p496, %s29, 1
      %s498 = scalar_lea.vmem %s3, %s497
      %p499 = pneg %p154
      %p500 = pneg %p151
      %p501 = scmp.lt.s32.totalorder %s29, 1
      %s502 = scalar_select %p501, %s29, 1
      %s503 = smul.addr %s502, 16
      %s504 = smul.addr %s503, 4
      %s505 = scalar_lea.vmem %s4, %s504
      %p506 = pneg %p180
      %p507 = pneg %p177
      %p508 = scmp.eq.s32.totalorder %s29, 1
      %s509 = scalar_select %p508, %s30, 0
      %s510 = smul.u32 16, %s509
      %p511 = scmp.lt.s32.totalorder %s510, 15
      %s512 = scalar_select %p511, %s510, 15
      %s513 = smul.addr %s512, 8
      %s514 = scalar_lea.vmem %s5, %s513
      %p515 = pneg %p210
      %p516 = pneg %p207
      %p517 = pneg %p231
      %p518 = pneg %p228
      %p519 = pneg %p252
      %p520 = pneg %p249
      %p521 = pneg %p273
      %p522 = pneg %p270
      %p523 = pneg %p294
      %p524 = pneg %p291
      %p525 = pneg %p315
      %p526 = pneg %p312
      %p527 = pneg %p336
      %p528 = pneg %p333
      %p529 = pneg %p357
      %p530 = pneg %p354
      %s531 = smul.u32 16, %s30
      %p532 = scmp.lt.s32.totalorder %s531, 15
      %s533 = scalar_select %p532, %s531, 15
      %p534 = scmp.lt.s32.totalorder %s31, 0
      %s535 = scalar_select %p534, %s31, 0
      %s536 = sadd.s32 %s535, %s533
      %s537 = smul.addr %s536, 4
      %s538 = scalar_lea.vmem %s0, %s537
      %s539 = smul.u32 16, %s30
      %p540 = scmp.eq.s32.totalorder %s29, 0
      %p541 = scmp.eq.s32.totalorder %s30, 0
      %p542 = pnand %p540, %p541
      %p543 = pneg %p542
      %s544 = scalar_select %p543, %s31, 0
      %s545 = smul.u32 16, %s544
      %p546 = scmp.lt.s32.totalorder %s545, 15
      %s547 = scalar_select %p546, %s545, 15
      %s548 = smul.addr %s547, 4
      %s549 = scalar_lea.vmem %s1, %s548
      %p550 = scmp.eq.s32.totalorder %s29, 0
      %p551 = scmp.eq.s32.totalorder %s30, 0
      %p552 = pnand %p550, %p551
      %p553 = pneg %p552
      %s554 = scalar_select %p553, %s31, 0
      %s555 = smul.u32 16, %s554
      %p556 = scmp.lt.s32.totalorder %s29, 1
      %s557 = scalar_select %p556, %s29, 1
      %s558 = smul.addr %s557, 16
      %s559 = smul.addr %s558, 4
      %s560 = scalar_lea.vmem %s2, %s559
      %p561 = scmp.lt.s32.totalorder %s29, 1
      %s562 = scalar_select %p561, %s29, 1
      %s563 = scalar_lea.vmem %s3, %s562
      %p564 = scmp.lt.s32.totalorder %s29, 1
      %s565 = scalar_select %p564, %s29, 1
      %s566 = smul.addr %s565, 16
      %s567 = smul.addr %s566, 4
      %s568 = scalar_lea.vmem %s4, %s567
      %p569 = scmp.eq.s32.totalorder %s29, 1
      %s570 = scalar_select %p569, %s30, 0
      %s571 = smul.u32 16, %s570
      %p572 = scmp.lt.s32.totalorder %s571, 15
      %s573 = scalar_select %p572, %s571, 15
      %s574 = smul.addr %s573, 8
      %s575 = scalar_lea.vmem %s5, %s574
      %p576 = scmp.eq.s32.totalorder %s29, 1
      %s577 = scalar_select %p576, %s30, 0
      %s578 = smul.u32 16, %s577
      %s580 = sadd.s32 %s29, 1
      %p581 = scmp.lt.s32.totalorder %s580, 0
      %s582 = ssub.s32 0, %s580
      %s583 = scalar_select %p581, %s582, %s580
      %s584 = sand.u32 %s583, 1
      %s585 = ssub.s32 0, %s584
      %s586 = scalar_select %p581, %s585, %s584
      %p587 = scmp.ne.s32.totalorder %s586, 0
      %p588 = scmp.lt.s32.totalorder %s586, 0
      %p589 = pnand %p588, %p587
      %p590 = pneg %p589
      %s591 = sadd.s32 %s586, 2
      %s592 = scalar_select %p590, %s591, %s586
      %s593 = smul.u32 %s592, 128
      %p594 = scmp.lt.s32.totalorder %s29, 0
      %s595 = ssub.s32 0, %s29
      %s596 = scalar_select %p594, %s595, %s29
      %s597 = sand.u32 %s596, 1
      %s598 = ssub.s32 0, %s597
      %s599 = scalar_select %p594, %s598, %s597
      %p600 = scmp.ne.s32.totalorder %s599, 0
      %p601 = scmp.lt.s32.totalorder %s599, 0
      %p602 = pnand %p601, %p600
      %p603 = pneg %p602
      %s604 = sadd.s32 %s599, 2
      %s605 = scalar_select %p603, %s604, %s599
      %s606 = smul.u32 %s605, 128
      %s607 = smul.u32 %s31, 128
      %s608 = smul.u32 %s30, 128
      %p609 = scmp.eq.s32.totalorder %s29, 0
      %p610 = scmp.eq.s32.totalorder %s30, 0
      %p611 = pnand %p609, %p610
      %p612 = pneg %p611
      %p613 = scmp.eq.s32.totalorder %s31, 0
      %p614 = pnand %p612, %p613
      %p615 = pneg %p614
      // Predicated region
      $region69: #{global_attention_net_forward.1} parent=67 // pred_check
        _
      $region70: #{global_attention_net_forward.1} parent=67 // pred_check_branch
        %617 = sbr.rel (%p614) target = $region72
      $region71: #{global_attention_net_forward.1} parent=67 // pred_region
        %618 = vst [vmem:[#allocation4] sm:$0x1] -1e+30
        %619 = vst [vmem:[#allocation5] sm:$0x1] 0.0
        %620 = vst [vmem:[#allocation6] sm:$0xff] 0.0
        %621 = vst [vmem:[#allocation6 + $0x8] sm:$0xff] 0.0
        %622 = vst [vmem:[#allocation6 + $0x10] sm:$0xff] 0.0
        %623 = vst [vmem:[#allocation6 + $0x18] sm:$0xff] 0.0
        %624 = vst [vmem:[#allocation6 + $0x20] sm:$0xff] 0.0
        %625 = vst [vmem:[#allocation6 + $0x28] sm:$0xff] 0.0
        %626 = vst [vmem:[#allocation6 + $0x30] sm:$0xff] 0.0
        %627 = vst [vmem:[#allocation6 + $0x38] sm:$0xff] 0.0
        %628 = vst [vmem:[#allocation6 + $0x40] sm:$0xff] 0.0
        %629 = vst [vmem:[#allocation6 + $0x48] sm:$0xff] 0.0
        %630 = vst [vmem:[#allocation6 + $0x50] sm:$0xff] 0.0
        %631 = vst [vmem:[#allocation6 + $0x58] sm:$0xff] 0.0
        %632 = vst [vmem:[#allocation6 + $0x60] sm:$0xff] 0.0
        %633 = vst [vmem:[#allocation6 + $0x68] sm:$0xff] 0.0
        %634 = vst [vmem:[#allocation6 + $0x70] sm:$0xff] 0.0
        %635 = vst [vmem:[#allocation6 + $0x78] sm:$0xff] 0.0
      $region72: #{global_attention_net_forward.1} parent=67 // pred_fallthru
        _
      // Predicated region
      $region73: #{global_attention_net_forward.1} parent=67 // pred_check
        _
      $region74: #{global_attention_net_forward.1} parent=67 // pred_check_branch
        %637 = sbr.rel (%p611) target = $region76
      $region75: #{global_attention_net_forward.1} parent=67 // pred_region
        %v638 = vld [vmem:[%s549] sm:$0xf]
        %v639 = vld [vmem:[%s549 + $0x4] sm:$0xf]
        %v640 = vld [vmem:[%s549 + $0x8] sm:$0xf]
        %v641 = vld [vmem:[%s549 + $0xc] sm:$0xf]
        %v642 = vld [vmem:[%s549 + $0x10] sm:$0xf]
        %v643 = vld [vmem:[%s549 + $0x14] sm:$0xf]
        %v644 = vld [vmem:[%s549 + $0x18] sm:$0xf]
        %v645 = vld [vmem:[%s549 + $0x1c] sm:$0xf]
        %v646 = vld [vmem:[%s549 + $0x20] sm:$0xf]
        %v647 = vld [vmem:[%s549 + $0x24] sm:$0xf]
        %v648 = vld [vmem:[%s549 + $0x28] sm:$0xf]
        %v649 = vld [vmem:[%s549 + $0x2c] sm:$0xf]
        %v650 = vld [vmem:[%s549 + $0x30] sm:$0xf]
        %v651 = vld [vmem:[%s549 + $0x34] sm:$0xf]
        %v652 = vld [vmem:[%s549 + $0x38] sm:$0xf]
        %v653 = vld [vmem:[%s549 + $0x3c] sm:$0xf]
        %s654 = sadd.s32 %s607, 128
        %s655 = sshra.s32 %s654, 3
        %s656 = sand.u32 %s654, 7
        %s657 = smul.addr %s655, 4
        %s658 = scalar_lea.vmem [#allocation2], %s657
        %659 = vst [vmem:[%s658] sm:$0xf] %v638
        %660 = vst [vmem:[%s658 + $0x4] sm:$0xf] %v639
        %661 = vst [vmem:[%s658 + $0x8] sm:$0xf] %v640
        %662 = vst [vmem:[%s658 + $0xc] sm:$0xf] %v641
        %663 = vst [vmem:[%s658 + $0x10] sm:$0xf] %v642
        %664 = vst [vmem:[%s658 + $0x14] sm:$0xf] %v643
        %665 = vst [vmem:[%s658 + $0x18] sm:$0xf] %v644
        %666 = vst [vmem:[%s658 + $0x1c] sm:$0xf] %v645
        %667 = vst [vmem:[%s658 + $0x20] sm:$0xf] %v646
        %668 = vst [vmem:[%s658 + $0x24] sm:$0xf] %v647
        %669 = vst [vmem:[%s658 + $0x28] sm:$0xf] %v648
        %670 = vst [vmem:[%s658 + $0x2c] sm:$0xf] %v649
        %671 = vst [vmem:[%s658 + $0x30] sm:$0xf] %v650
        %672 = vst [vmem:[%s658 + $0x34] sm:$0xf] %v651
        %673 = vst [vmem:[%s658 + $0x38] sm:$0xf] %v652
        %674 = vst [vmem:[%s658 + $0x3c] sm:$0xf] %v653
      $region76: #{global_attention_net_forward.1} parent=67 // pred_fallthru
        _
      // Predicated region
      $region77: #{global_attention_net_forward.1} parent=67 // pred_check
        %p675 = pneg %p613
      $region78: #{global_attention_net_forward.1} parent=67 // pred_check_branch
        %677 = sbr.rel (%p675) target = $region80
      $region79: #{global_attention_net_forward.1} parent=67 // pred_region
        %678 = vst [vmem:[#allocation3] sm:$0xff] 0.0
        %679 = vst [vmem:[#allocation3 + $0x8] sm:$0xff] 0.0
        %680 = vst [vmem:[#allocation3 + $0x10] sm:$0xff] 0.0
        %681 = vst [vmem:[#allocation3 + $0x18] sm:$0xff] 0.0
        %682 = vst [vmem:[#allocation3 + $0x20] sm:$0xff] 0.0
        %683 = vst [vmem:[#allocation3 + $0x28] sm:$0xff] 0.0
        %684 = vst [vmem:[#allocation3 + $0x30] sm:$0xff] 0.0
        %685 = vst [vmem:[#allocation3 + $0x38] sm:$0xff] 0.0
        %686 = vst [vmem:[#allocation3 + $0x40] sm:$0xff] 0.0
        %687 = vst [vmem:[#allocation3 + $0x48] sm:$0xff] 0.0
        %688 = vst [vmem:[#allocation3 + $0x50] sm:$0xff] 0.0
        %689 = vst [vmem:[#allocation3 + $0x58] sm:$0xff] 0.0
        %690 = vst [vmem:[#allocation3 + $0x60] sm:$0xff] 0.0
        %691 = vst [vmem:[#allocation3 + $0x68] sm:$0xff] 0.0
        %692 = vst [vmem:[#allocation3 + $0x70] sm:$0xff] 0.0
        %693 = vst [vmem:[#allocation3 + $0x78] sm:$0xff] 0.0
      $region80: #{global_attention_net_forward.1} parent=67 // pred_fallthru
        _
      %s694 = sadd.s32 %s593, %s607
      %s695 = sshra.s32 %s694, 3
      %s696 = sand.u32 %s694, 7
      %s697 = smul.addr %s695, 4
      %s698 = scalar_lea.vmem [#allocation2], %s697
      %v699 = vld [vmem:[%s698] sm:$0xf]
      %v700 = vld [vmem:[%s698 + $0x4] sm:$0xf]
      %v701 = vld [vmem:[%s698 + $0x8] sm:$0xf]
      %v702 = vld [vmem:[%s698 + $0xc] sm:$0xf]
      %v703 = vld [vmem:[%s698 + $0x10] sm:$0xf]
      %v704 = vld [vmem:[%s698 + $0x14] sm:$0xf]
      %v705 = vld [vmem:[%s698 + $0x18] sm:$0xf]
      %v706 = vld [vmem:[%s698 + $0x1c] sm:$0xf]
      %v707 = vld [vmem:[%s698 + $0x20] sm:$0xf]
      %v708 = vld [vmem:[%s698 + $0x24] sm:$0xf]
      %v709 = vld [vmem:[%s698 + $0x28] sm:$0xf]
      %v710 = vld [vmem:[%s698 + $0x2c] sm:$0xf]
      %v711 = vld [vmem:[%s698 + $0x30] sm:$0xf]
      %v712 = vld [vmem:[%s698 + $0x34] sm:$0xf]
      %v713 = vld [vmem:[%s698 + $0x38] sm:$0xf]
      %v714 = vld [vmem:[%s698 + $0x3c] sm:$0xf]
      %v715 = vld [vmem:[#allocation3] sm:$0xff]
      %v716 = vld [vmem:[#allocation3 + $0x8] sm:$0xff]
      %v717 = vld [vmem:[#allocation3 + $0x10] sm:$0xff]
      %v718 = vld [vmem:[#allocation3 + $0x18] sm:$0xff]
      %v719 = vld [vmem:[#allocation3 + $0x20] sm:$0xff]
      %v720 = vld [vmem:[#allocation3 + $0x28] sm:$0xff]
      %v721 = vld [vmem:[#allocation3 + $0x30] sm:$0xff]
      %v722 = vld [vmem:[#allocation3 + $0x38] sm:$0xff]
      %v723 = vld [vmem:[#allocation3 + $0x40] sm:$0xff]
      %v724 = vld [vmem:[#allocation3 + $0x48] sm:$0xff]
      %v725 = vld [vmem:[#allocation3 + $0x50] sm:$0xff]
      %v726 = vld [vmem:[#allocation3 + $0x58] sm:$0xff]
      %v727 = vld [vmem:[#allocation3 + $0x60] sm:$0xff]
      %v728 = vld [vmem:[#allocation3 + $0x68] sm:$0xff]
      %v729 = vld [vmem:[#allocation3 + $0x70] sm:$0xff]
      %v730 = vld [vmem:[#allocation3 + $0x78] sm:$0xff]
      %v731 = vld [vmem:[%s538] sm:$0xf]
      %v732 = vld [vmem:[%s538 + $0x4] sm:$0xf]
      %v733 = vld [vmem:[%s538 + $0x8] sm:$0xf]
      %v734 = vld [vmem:[%s538 + $0xc] sm:$0xf]
      %v735 = vld [vmem:[%s538 + $0x10] sm:$0xf]
      %v736 = vld [vmem:[%s538 + $0x14] sm:$0xf]
      %v737 = vld [vmem:[%s538 + $0x18] sm:$0xf]
      %v738 = vld [vmem:[%s538 + $0x1c] sm:$0xf]
      %v739 = vld [vmem:[%s538 + $0x20] sm:$0xf]
      %v740 = vld [vmem:[%s538 + $0x24] sm:$0xf]
      %v741 = vld [vmem:[%s538 + $0x28] sm:$0xf]
      %v742 = vld [vmem:[%s538 + $0x2c] sm:$0xf]
      %v743 = vld [vmem:[%s538 + $0x30] sm:$0xf]
      %v744 = vld [vmem:[%s538 + $0x34] sm:$0xf]
      %v745 = vld [vmem:[%s538 + $0x38] sm:$0xf]
      %v746 = vld [vmem:[%s538 + $0x3c] sm:$0xf]
      %v763 = vunpack.c.l.b16 %v731
      %v764 = vunpack.c.l.b16 %v732
      %v765 = vunpack.c.l.b16 %v733
      %v766 = vunpack.c.l.b16 %v734
      %v767 = vunpack.c.l.b16 %v735
      %v768 = vunpack.c.l.b16 %v736
      %v769 = vunpack.c.l.b16 %v737
      %v770 = vunpack.c.l.b16 %v738
      %v771 = vunpack.c.l.b16 %v739
      %v772 = vunpack.c.l.b16 %v740
      %v773 = vunpack.c.l.b16 %v741
      %v774 = vunpack.c.l.b16 %v742
      %v775 = vunpack.c.l.b16 %v743
      %v776 = vunpack.c.l.b16 %v744
      %v777 = vunpack.c.l.b16 %v745
      %v778 = vunpack.c.l.b16 %v746
      %v779 = vpack.c.b16 %v764, %v763
      %v780 = vpack.c.b16 %v766, %v765
      %v781 = vpack.c.b16 %v768, %v767
      %v782 = vpack.c.b16 %v770, %v769
      %v783 = vpack.c.b16 %v772, %v771
      %v784 = vpack.c.b16 %v774, %v773
      %v785 = vpack.c.b16 %v776, %v775
      %v786 = vpack.c.b16 %v778, %v777
      %v811 = vunpack.c.l.b16 %v699
      %v812 = vunpack.c.l.b16 %v700
      %v813 = vunpack.c.l.b16 %v701
      %v814 = vunpack.c.l.b16 %v702
      %v815 = vunpack.c.l.b16 %v703
      %v816 = vunpack.c.l.b16 %v704
      %v817 = vunpack.c.l.b16 %v705
      %v818 = vunpack.c.l.b16 %v706
      %v819 = vunpack.c.l.b16 %v707
      %v820 = vunpack.c.l.b16 %v708
      %v821 = vunpack.c.l.b16 %v709
      %v822 = vunpack.c.l.b16 %v710
      %v823 = vunpack.c.l.b16 %v711
      %v824 = vunpack.c.l.b16 %v712
      %v825 = vunpack.c.l.b16 %v713
      %v826 = vunpack.c.l.b16 %v714
      %v827 = vpack.c.b16 %v812, %v811
      %v828 = vpack.c.b16 %v814, %v813
      %v829 = vpack.c.b16 %v816, %v815
      %v830 = vpack.c.b16 %v818, %v817
      %v831 = vpack.c.b16 %v820, %v819
      %v832 = vpack.c.b16 %v822, %v821
      %v833 = vpack.c.b16 %v824, %v823
      %v834 = vpack.c.b16 %v826, %v825
      %843 = vmatprep.subr.bf16.mxu0 0
      %844 = vmatpush1.bf16.msra.mxu0 %v834
      %845 = vmatprep.subr.bf16.mxu0 0
      %846 = vmatpush1.bf16.msra.mxu0 %v833
      %847 = vmatprep.subr.bf16.mxu0 0
      %848 = vmatpush1.bf16.msra.mxu0 %v832
      %849 = vmatprep.subr.bf16.mxu0 0
      %850 = vmatpush1.bf16.msra.mxu0 %v831
      %851 = vmatprep.subr.bf16.mxu0 0
      %852 = vmatpush1.bf16.msra.mxu0 %v830
      %853 = vmatprep.subr.bf16.mxu0 0
      %854 = vmatpush1.bf16.msra.mxu0 %v829
      %855 = vmatprep.subr.bf16.mxu0 0
      %856 = vmatpush1.bf16.msra.mxu0 %v828
      %857 = vmatprep.subr.bf16.mxu0 0
      %858 = vmatpush1.bf16.msra.mxu0 %v827
      %859 = vmatprep.subr.bf16.mxu0 0
      %860 = vmatpush2.bf16.msra.mxu0 0
      %861 = vmatprep.subr.bf16.mxu0 0
      %862 = vmatpush2.bf16.msra.mxu0 0
      %863 = vmatprep.subr.bf16.mxu0 0
      %864 = vmatpush2.bf16.msra.mxu0 0
      %865 = vmatprep.subr.bf16.mxu0 0
      %866 = vmatpush2.bf16.msra.mxu0 0
      %867 = vmatprep.subr.bf16.mxu0 0
      %868 = vmatpush2.bf16.msra.mxu0 0
      %869 = vmatprep.subr.bf16.mxu0 0
      %870 = vmatpush2.bf16.msra.mxu0 0
      %871 = vmatprep.subr.bf16.mxu0 0
      %872 = vmatpush2.bf16.msra.mxu0 0
      %873 = vmatprep.subr.bf16.mxu0 0
      %874 = vmatpush2.bf16.msra.mxu0 0
      %875 = vmatprep.mubr.bf16.mxu0 0
      %876 = vmatmul.mubr.bf16.gmra.mxu0 %v779
      %v877 = vpop.f32.mrf.mxu0
      %v878 = vadd.f32 0.0, %v877
      %v879 = vpop.f32.mrf.mxu0
      %v880 = vpop.f32.mrf.mxu0
      %v881 = vadd.f32 0.0, %v880
      %v882 = vpop.f32.mrf.mxu0
      %883 = vmatprep.mubr.bf16.mxu0 0
      %884 = vmatmul.mubr.bf16.gmra.mxu0 %v780
      %v885 = vpop.f32.mrf.mxu0
      %v886 = vadd.f32 0.0, %v885
      %v887 = vpop.f32.mrf.mxu0
      %v888 = vpop.f32.mrf.mxu0
      %v889 = vadd.f32 0.0, %v888
      %v890 = vpop.f32.mrf.mxu0
      %891 = vmatprep.mubr.bf16.mxu0 0
      %892 = vmatmul.mubr.bf16.gmra.mxu0 %v781
      %v893 = vpop.f32.mrf.mxu0
      %v894 = vadd.f32 0.0, %v893
      %v895 = vpop.f32.mrf.mxu0
      %v896 = vpop.f32.mrf.mxu0
      %v897 = vadd.f32 0.0, %v896
      %v898 = vpop.f32.mrf.mxu0
      %899 = vmatprep.mubr.bf16.mxu0 0
      %900 = vmatmul.mubr.bf16.gmra.mxu0 %v782
      %v901 = vpop.f32.mrf.mxu0
      %v902 = vadd.f32 0.0, %v901
      %v903 = vpop.f32.mrf.mxu0
      %v904 = vpop.f32.mrf.mxu0
      %v905 = vadd.f32 0.0, %v904
      %v906 = vpop.f32.mrf.mxu0
      %907 = vmatprep.mubr.bf16.mxu0 0
      %908 = vmatmul.mubr.bf16.gmra.mxu0 %v783
      %v909 = vpop.f32.mrf.mxu0
      %v910 = vadd.f32 0.0, %v909
      %v911 = vpop.f32.mrf.mxu0
      %v912 = vpop.f32.mrf.mxu0
      %v913 = vadd.f32 0.0, %v912
      %v914 = vpop.f32.mrf.mxu0
      %915 = vmatprep.mubr.bf16.mxu0 0
      %916 = vmatmul.mubr.bf16.gmra.mxu0 %v784
      %v917 = vpop.f32.mrf.mxu0
      %v918 = vadd.f32 0.0, %v917
      %v919 = vpop.f32.mrf.mxu0
      %v920 = vpop.f32.mrf.mxu0
      %v921 = vadd.f32 0.0, %v920
      %v922 = vpop.f32.mrf.mxu0
      %923 = vmatprep.mubr.bf16.mxu0 0
      %924 = vmatmul.mubr.bf16.gmra.mxu0 %v785
      %v925 = vpop.f32.mrf.mxu0
      %v926 = vadd.f32 0.0, %v925
      %v927 = vpop.f32.mrf.mxu0
      %v928 = vpop.f32.mrf.mxu0
      %v929 = vadd.f32 0.0, %v928
      %v930 = vpop.f32.mrf.mxu0
      %931 = vmatprep.mubr.bf16.mxu0 0
      %932 = vmatmul.mubr.bf16.gmra.mxu0 %v786
      %v933 = vpop.f32.mrf.mxu0
      %v934 = vadd.f32 0.0, %v933
      %v935 = vpop.f32.mrf.mxu0
      %v936 = vpop.f32.mrf.mxu0
      %v937 = vadd.f32 0.0, %v936
      %v938 = vpop.f32.mrf.mxu0
      %939 = vdwg.mxu0
      %v940 = vadd.f32 %v715, %v878
      %v941 = vadd.f32 %v716, %v881
      %v942 = vadd.f32 %v717, %v886
      %v943 = vadd.f32 %v718, %v889
      %v944 = vadd.f32 %v719, %v894
      %v945 = vadd.f32 %v720, %v897
      %v946 = vadd.f32 %v721, %v902
      %v947 = vadd.f32 %v722, %v905
      %v948 = vadd.f32 %v723, %v910
      %v949 = vadd.f32 %v724, %v913
      %v950 = vadd.f32 %v725, %v918
      %v951 = vadd.f32 %v726, %v921
      %v952 = vadd.f32 %v727, %v926
      %v953 = vadd.f32 %v728, %v929
      %v954 = vadd.f32 %v729, %v934
      %v955 = vadd.f32 %v730, %v937
      %956 = vst [vmem:[#allocation3] sm:$0xff] %v940
      %957 = vst [vmem:[#allocation3 + $0x8] sm:$0xff] %v941
      %958 = vst [vmem:[#allocation3 + $0x10] sm:$0xff] %v942
      %959 = vst [vmem:[#allocation3 + $0x18] sm:$0xff] %v943
      %960 = vst [vmem:[#allocation3 + $0x20] sm:$0xff] %v944
      %961 = vst [vmem:[#allocation3 + $0x28] sm:$0xff] %v945
      %962 = vst [vmem:[#allocation3 + $0x30] sm:$0xff] %v946
      %963 = vst [vmem:[#allocation3 + $0x38] sm:$0xff] %v947
      %964 = vst [vmem:[#allocation3 + $0x40] sm:$0xff] %v948
      %965 = vst [vmem:[#allocation3 + $0x48] sm:$0xff] %v949
      %966 = vst [vmem:[#allocation3 + $0x50] sm:$0xff] %v950
      %967 = vst [vmem:[#allocation3 + $0x58] sm:$0xff] %v951
      %968 = vst [vmem:[#allocation3 + $0x60] sm:$0xff] %v952
      %969 = vst [vmem:[#allocation3 + $0x68] sm:$0xff] %v953
      %970 = vst [vmem:[#allocation3 + $0x70] sm:$0xff] %v954
      %971 = vst [vmem:[#allocation3 + $0x78] sm:$0xff] %v955
      // Predicated region
      $region81: #{global_attention_net_forward.1} parent=67 // pred_check
        %p972 = pneg %p613
      $region82: #{global_attention_net_forward.1} parent=67 // pred_check_branch
        %974 = sbr.rel (%p972) target = $region84
      $region83: #{global_attention_net_forward.1} parent=67 // pred_region
        %s975 = sadd.s32 %s593, %s608
        %s976 = sshra.s32 %s975, 3
        %s977 = sand.u32 %s975, 7
        %s978 = smul.addr %s976, 4
        %s979 = scalar_lea.vmem [#allocation2], %s978
        %v980 = vld [vmem:[%s979] sm:$0xf]
        %v981 = vld [vmem:[%s979 + $0x4] sm:$0xf]
        %v982 = vld [vmem:[%s979 + $0x8] sm:$0xf]
        %v983 = vld [vmem:[%s979 + $0xc] sm:$0xf]
        %v984 = vld [vmem:[%s979 + $0x10] sm:$0xf]
        %v985 = vld [vmem:[%s979 + $0x14] sm:$0xf]
        %v986 = vld [vmem:[%s979 + $0x18] sm:$0xf]
        %v987 = vld [vmem:[%s979 + $0x1c] sm:$0xf]
        %v988 = vld [vmem:[%s979 + $0x20] sm:$0xf]
        %v989 = vld [vmem:[%s979 + $0x24] sm:$0xf]
        %v990 = vld [vmem:[%s979 + $0x28] sm:$0xf]
        %v991 = vld [vmem:[%s979 + $0x2c] sm:$0xf]
        %v992 = vld [vmem:[%s979 + $0x30] sm:$0xf]
        %v993 = vld [vmem:[%s979 + $0x34] sm:$0xf]
        %v994 = vld [vmem:[%s979 + $0x38] sm:$0xf]
        %v995 = vld [vmem:[%s979 + $0x3c] sm:$0xf]
        %v996 = vld [vmem:[#allocation3] sm:$0xff]
        %v997 = vld [vmem:[#allocation3 + $0x8] sm:$0xff]
        %v998 = vld [vmem:[#allocation3 + $0x10] sm:$0xff]
        %v999 = vld [vmem:[#allocation3 + $0x18] sm:$0xff]
        %v1000 = vld [vmem:[#allocation3 + $0x20] sm:$0xff]
        %v1001 = vld [vmem:[#allocation3 + $0x28] sm:$0xff]
        %v1002 = vld [vmem:[#allocation3 + $0x30] sm:$0xff]
        %v1003 = vld [vmem:[#allocation3 + $0x38] sm:$0xff]
        %v1004 = vld [vmem:[#allocation3 + $0x40] sm:$0xff]
        %v1005 = vld [vmem:[#allocation3 + $0x48] sm:$0xff]
        %v1006 = vld [vmem:[#allocation3 + $0x50] sm:$0xff]
        %v1007 = vld [vmem:[#allocation3 + $0x58] sm:$0xff]
        %v1008 = vld [vmem:[#allocation3 + $0x60] sm:$0xff]
        %v1009 = vld [vmem:[#allocation3 + $0x68] sm:$0xff]
        %v1010 = vld [vmem:[#allocation3 + $0x70] sm:$0xff]
        %v1011 = vld [vmem:[#allocation3 + $0x78] sm:$0xff]
        %v1012 = vpack.c.bf16 %v997, %v996
        %v1013 = vpack.c.bf16 %v999, %v998
        %v1014 = vpack.c.bf16 %v1001, %v1000
        %v1015 = vpack.c.bf16 %v1003, %v1002
        %v1016 = vpack.c.bf16 %v1005, %v1004
        %v1017 = vpack.c.bf16 %v1007, %v1006
        %v1018 = vpack.c.bf16 %v1009, %v1008
        %v1019 = vpack.c.bf16 %v1011, %v1010
        %v1020 = vld [vmem:[%s560] sm:$0xf]
        %v1021 = vld [vmem:[%s560 + $0x4] sm:$0xf]
        %v1022 = vld [vmem:[%s560 + $0x8] sm:$0xf]
        %v1023 = vld [vmem:[%s560 + $0xc] sm:$0xf]
        %v1024 = vld [vmem:[%s560 + $0x10] sm:$0xf]
        %v1025 = vld [vmem:[%s560 + $0x14] sm:$0xf]
        %v1026 = vld [vmem:[%s560 + $0x18] sm:$0xf]
        %v1027 = vld [vmem:[%s560 + $0x1c] sm:$0xf]
        %v1028 = vld [vmem:[%s560 + $0x20] sm:$0xf]
        %v1029 = vld [vmem:[%s560 + $0x24] sm:$0xf]
        %v1030 = vld [vmem:[%s560 + $0x28] sm:$0xf]
        %v1031 = vld [vmem:[%s560 + $0x2c] sm:$0xf]
        %v1032 = vld [vmem:[%s560 + $0x30] sm:$0xf]
        %v1033 = vld [vmem:[%s560 + $0x34] sm:$0xf]
        %v1034 = vld [vmem:[%s560 + $0x38] sm:$0xf]
        %v1035 = vld [vmem:[%s560 + $0x3c] sm:$0xf]
        %v1036 = vld [vmem:[%s563] sm:$0x1]
        %v1038 = vlaneseq
        %v1039 = vshrl.u32 %v1038, 7
        %v1040 = vsub.s32 0, %v1039
        %v1041 = vrot.slane %v1036, %v1040
        %v1059 = vunpack.c.l.b16 %v1020
        %v1060 = vunpack.c.l.b16 %v1021
        %v1061 = vunpack.c.l.b16 %v1022
        %v1062 = vunpack.c.l.b16 %v1023
        %v1063 = vunpack.c.l.b16 %v1024
        %v1064 = vunpack.c.l.b16 %v1025
        %v1065 = vunpack.c.l.b16 %v1026
        %v1066 = vunpack.c.l.b16 %v1027
        %v1067 = vunpack.c.l.b16 %v1028
        %v1068 = vunpack.c.l.b16 %v1029
        %v1069 = vunpack.c.l.b16 %v1030
        %v1070 = vunpack.c.l.b16 %v1031
        %v1071 = vunpack.c.l.b16 %v1032
        %v1072 = vunpack.c.l.b16 %v1033
        %v1073 = vunpack.c.l.b16 %v1034
        %v1074 = vunpack.c.l.b16 %v1035
        %v1075 = vpack.c.b16 %v1060, %v1059
        %v1076 = vpack.c.b16 %v1062, %v1061
        %v1077 = vpack.c.b16 %v1064, %v1063
        %v1078 = vpack.c.b16 %v1066, %v1065
        %v1079 = vpack.c.b16 %v1068, %v1067
        %v1080 = vpack.c.b16 %v1070, %v1069
        %v1081 = vpack.c.b16 %v1072, %v1071
        %v1082 = vpack.c.b16 %v1074, %v1073
        %1091 = vmatprep.subr.bf16.mxu0 0
        %1092 = vmatpush1.bf16.msra.mxu0 %v1082
        %1093 = vmatprep.subr.bf16.mxu0 0
        %1094 = vmatpush1.bf16.msra.mxu0 %v1081
        %1095 = vmatprep.subr.bf16.mxu0 0
        %1096 = vmatpush1.bf16.msra.mxu0 %v1080
        %1097 = vmatprep.subr.bf16.mxu0 0
        %1098 = vmatpush1.bf16.msra.mxu0 %v1079
        %1099 = vmatprep.subr.bf16.mxu0 0
        %1100 = vmatpush1.bf16.msra.mxu0 %v1078
        %1101 = vmatprep.subr.bf16.mxu0 0
        %1102 = vmatpush1.bf16.msra.mxu0 %v1077
        %1103 = vmatprep.subr.bf16.mxu0 0
        %1104 = vmatpush1.bf16.msra.mxu0 %v1076
        %1105 = vmatprep.subr.bf16.mxu0 0
        %1106 = vmatpush1.bf16.msra.mxu0 %v1075
        %1107 = vmatprep.subr.bf16.mxu0 0
        %1108 = vmatpush2.bf16.msra.mxu0 0
        %1109 = vmatprep.subr.bf16.mxu0 0
        %1110 = vmatpush2.bf16.msra.mxu0 0
        %1111 = vmatprep.subr.bf16.mxu0 0
        %1112 = vmatpush2.bf16.msra.mxu0 0
        %1113 = vmatprep.subr.bf16.mxu0 0
        %1114 = vmatpush2.bf16.msra.mxu0 0
        %1115 = vmatprep.subr.bf16.mxu0 0
        %1116 = vmatpush2.bf16.msra.mxu0 0
        %1117 = vmatprep.subr.bf16.mxu0 0
        %1118 = vmatpush2.bf16.msra.mxu0 0
        %1119 = vmatprep.subr.bf16.mxu0 0
        %1120 = vmatpush2.bf16.msra.mxu0 0
        %1121 = vmatprep.subr.bf16.mxu0 0
        %1122 = vmatpush2.bf16.msra.mxu0 0
        %1123 = vmatprep.mubr.bf16.mxu0 0
        %1124 = vmatmul.mubr.bf16.gmra.mxu0 %v1012
        %v1125 = vpop.f32.mrf.mxu0
        %v1126 = vadd.f32 %v1041, %v1125
        %v1127 = vpop.f32.mrf.mxu0
        %v1128 = vpop.f32.mrf.mxu0
        %v1129 = vadd.f32 %v1041, %v1128
        %v1130 = vpop.f32.mrf.mxu0
        %1131 = vmatprep.mubr.bf16.mxu0 0
        %1132 = vmatmul.mubr.bf16.gmra.mxu0 %v1013
        %v1133 = vpop.f32.mrf.mxu0
        %v1134 = vadd.f32 %v1041, %v1133
        %v1135 = vpop.f32.mrf.mxu0
        %v1136 = vpop.f32.mrf.mxu0
        %v1137 = vadd.f32 %v1041, %v1136
        %v1138 = vpop.f32.mrf.mxu0
        %1139 = vmatprep.mubr.bf16.mxu0 0
        %1140 = vmatmul.mubr.bf16.gmra.mxu0 %v1014
        %v1141 = vpop.f32.mrf.mxu0
        %v1142 = vadd.f32 %v1041, %v1141
        %v1143 = vpop.f32.mrf.mxu0
        %v1144 = vpop.f32.mrf.mxu0
        %v1145 = vadd.f32 %v1041, %v1144
        %v1146 = vpop.f32.mrf.mxu0
        %1147 = vmatprep.mubr.bf16.mxu0 0
        %1148 = vmatmul.mubr.bf16.gmra.mxu0 %v1015
        %v1149 = vpop.f32.mrf.mxu0
        %v1150 = vadd.f32 %v1041, %v1149
        %v1151 = vpop.f32.mrf.mxu0
        %v1152 = vpop.f32.mrf.mxu0
        %v1153 = vadd.f32 %v1041, %v1152
        %v1154 = vpop.f32.mrf.mxu0
        %1155 = vmatprep.mubr.bf16.mxu0 0
        %1156 = vmatmul.mubr.bf16.gmra.mxu0 %v1016
        %v1157 = vpop.f32.mrf.mxu0
        %v1158 = vadd.f32 %v1041, %v1157
        %v1159 = vpop.f32.mrf.mxu0
        %v1160 = vpop.f32.mrf.mxu0
        %v1161 = vadd.f32 %v1041, %v1160
        %v1162 = vpop.f32.mrf.mxu0
        %1163 = vmatprep.mubr.bf16.mxu0 0
        %1164 = vmatmul.mubr.bf16.gmra.mxu0 %v1017
        %v1165 = vpop.f32.mrf.mxu0
        %v1166 = vadd.f32 %v1041, %v1165
        %v1167 = vpop.f32.mrf.mxu0
        %v1168 = vpop.f32.mrf.mxu0
        %v1169 = vadd.f32 %v1041, %v1168
        %v1170 = vpop.f32.mrf.mxu0
        %1171 = vmatprep.mubr.bf16.mxu0 0
        %1172 = vmatmul.mubr.bf16.gmra.mxu0 %v1018
        %v1173 = vpop.f32.mrf.mxu0
        %v1174 = vadd.f32 %v1041, %v1173
        %v1175 = vpop.f32.mrf.mxu0
        %v1176 = vpop.f32.mrf.mxu0
        %v1177 = vadd.f32 %v1041, %v1176
        %v1178 = vpop.f32.mrf.mxu0
        %1179 = vmatprep.mubr.bf16.mxu0 0
        %1180 = vmatmul.mubr.bf16.gmra.mxu0 %v1019
        %v1181 = vpop.f32.mrf.mxu0
        %v1182 = vadd.f32 %v1041, %v1181
        %v1183 = vpop.f32.mrf.mxu0
        %v1184 = vpop.f32.mrf.mxu0
        %v1185 = vadd.f32 %v1041, %v1184
        %v1186 = vpop.f32.mrf.mxu0
        %1187 = vdwg.mxu0
        %v1188 = vld [vmem:[%s568] sm:$0xf]
        %v1189 = vld [vmem:[%s568 + $0x4] sm:$0xf]
        %v1190 = vld [vmem:[%s568 + $0x8] sm:$0xf]
        %v1191 = vld [vmem:[%s568 + $0xc] sm:$0xf]
        %v1192 = vld [vmem:[%s568 + $0x10] sm:$0xf]
        %v1193 = vld [vmem:[%s568 + $0x14] sm:$0xf]
        %v1194 = vld [vmem:[%s568 + $0x18] sm:$0xf]
        %v1195 = vld [vmem:[%s568 + $0x1c] sm:$0xf]
        %v1196 = vld [vmem:[%s568 + $0x20] sm:$0xf]
        %v1197 = vld [vmem:[%s568 + $0x24] sm:$0xf]
        %v1198 = vld [vmem:[%s568 + $0x28] sm:$0xf]
        %v1199 = vld [vmem:[%s568 + $0x2c] sm:$0xf]
        %v1200 = vld [vmem:[%s568 + $0x30] sm:$0xf]
        %v1201 = vld [vmem:[%s568 + $0x34] sm:$0xf]
        %v1202 = vld [vmem:[%s568 + $0x38] sm:$0xf]
        %v1203 = vld [vmem:[%s568 + $0x3c] sm:$0xf]
        %v1220 = vunpack.c.l.b16 %v980
        %v1221 = vunpack.c.l.b16 %v981
        %v1222 = vunpack.c.l.b16 %v982
        %v1223 = vunpack.c.l.b16 %v983
        %v1224 = vunpack.c.l.b16 %v984
        %v1225 = vunpack.c.l.b16 %v985
        %v1226 = vunpack.c.l.b16 %v986
        %v1227 = vunpack.c.l.b16 %v987
        %v1228 = vunpack.c.l.b16 %v988
        %v1229 = vunpack.c.l.b16 %v989
        %v1230 = vunpack.c.l.b16 %v990
        %v1231 = vunpack.c.l.b16 %v991
        %v1232 = vunpack.c.l.b16 %v992
        %v1233 = vunpack.c.l.b16 %v993
        %v1234 = vunpack.c.l.b16 %v994
        %v1235 = vunpack.c.l.b16 %v995
        %v1236 = vpack.c.b16 %v1221, %v1220
        %v1237 = vpack.c.b16 %v1223, %v1222
        %v1238 = vpack.c.b16 %v1225, %v1224
        %v1239 = vpack.c.b16 %v1227, %v1226
        %v1240 = vpack.c.b16 %v1229, %v1228
        %v1241 = vpack.c.b16 %v1231, %v1230
        %v1242 = vpack.c.b16 %v1233, %v1232
        %v1243 = vpack.c.b16 %v1235, %v1234
        %v1268 = vunpack.c.l.b16 %v1188
        %v1269 = vunpack.c.l.b16 %v1189
        %v1270 = vunpack.c.l.b16 %v1190
        %v1271 = vunpack.c.l.b16 %v1191
        %v1272 = vunpack.c.l.b16 %v1192
        %v1273 = vunpack.c.l.b16 %v1193
        %v1274 = vunpack.c.l.b16 %v1194
        %v1275 = vunpack.c.l.b16 %v1195
        %v1276 = vunpack.c.l.b16 %v1196
        %v1277 = vunpack.c.l.b16 %v1197
        %v1278 = vunpack.c.l.b16 %v1198
        %v1279 = vunpack.c.l.b16 %v1199
        %v1280 = vunpack.c.l.b16 %v1200
        %v1281 = vunpack.c.l.b16 %v1201
        %v1282 = vunpack.c.l.b16 %v1202
        %v1283 = vunpack.c.l.b16 %v1203
        %v1284 = vpack.c.b16 %v1269, %v1268
        %v1285 = vpack.c.b16 %v1271, %v1270
        %v1286 = vpack.c.b16 %v1273, %v1272
        %v1287 = vpack.c.b16 %v1275, %v1274
        %v1288 = vpack.c.b16 %v1277, %v1276
        %v1289 = vpack.c.b16 %v1279, %v1278
        %v1290 = vpack.c.b16 %v1281, %v1280
        %v1291 = vpack.c.b16 %v1283, %v1282
        %1300 = vmatprep.subr.bf16.mxu0 0
        %1301 = vmatpush1.bf16.msra.mxu0 %v1291
        %1302 = vmatprep.subr.bf16.mxu0 0
        %1303 = vmatpush1.bf16.msra.mxu0 %v1290
        %1304 = vmatprep.subr.bf16.mxu0 0
        %1305 = vmatpush1.bf16.msra.mxu0 %v1289
        %1306 = vmatprep.subr.bf16.mxu0 0
        %1307 = vmatpush1.bf16.msra.mxu0 %v1288
        %1308 = vmatprep.subr.bf16.mxu0 0
        %1309 = vmatpush1.bf16.msra.mxu0 %v1287
        %1310 = vmatprep.subr.bf16.mxu0 0
        %1311 = vmatpush1.bf16.msra.mxu0 %v1286
        %1312 = vmatprep.subr.bf16.mxu0 0
        %1313 = vmatpush1.bf16.msra.mxu0 %v1285
        %1314 = vmatprep.subr.bf16.mxu0 0
        %1315 = vmatpush1.bf16.msra.mxu0 %v1284
        %1316 = vmatprep.subr.bf16.mxu0 0
        %1317 = vmatpush2.bf16.msra.mxu0 0
        %1318 = vmatprep.subr.bf16.mxu0 0
        %1319 = vmatpush2.bf16.msra.mxu0 0
        %1320 = vmatprep.subr.bf16.mxu0 0
        %1321 = vmatpush2.bf16.msra.mxu0 0
        %1322 = vmatprep.subr.bf16.mxu0 0
        %1323 = vmatpush2.bf16.msra.mxu0 0
        %1324 = vmatprep.subr.bf16.mxu0 0
        %1325 = vmatpush2.bf16.msra.mxu0 0
        %1326 = vmatprep.subr.bf16.mxu0 0
        %1327 = vmatpush2.bf16.msra.mxu0 0
        %1328 = vmatprep.subr.bf16.mxu0 0
        %1329 = vmatpush2.bf16.msra.mxu0 0
        %1330 = vmatprep.subr.bf16.mxu0 0
        %1331 = vmatpush2.bf16.msra.mxu0 0
        %1332 = vmatprep.mubr.bf16.mxu0 0
        %1333 = vmatmul.mubr.bf16.gmra.mxu0 %v1236
        %v1334 = vpop.f32.mrf.mxu0
        %v1335 = vadd.f32 0.0, %v1334
        %v1336 = vpop.f32.mrf.mxu0
        %v1337 = vpop.f32.mrf.mxu0
        %v1338 = vadd.f32 0.0, %v1337
        %v1339 = vpop.f32.mrf.mxu0
        %1340 = vmatprep.mubr.bf16.mxu0 0
        %1341 = vmatmul.mubr.bf16.gmra.mxu0 %v1237
        %v1342 = vpop.f32.mrf.mxu0
        %v1343 = vadd.f32 0.0, %v1342
        %v1344 = vpop.f32.mrf.mxu0
        %v1345 = vpop.f32.mrf.mxu0
        %v1346 = vadd.f32 0.0, %v1345
        %v1347 = vpop.f32.mrf.mxu0
        %1348 = vmatprep.mubr.bf16.mxu0 0
        %1349 = vmatmul.mubr.bf16.gmra.mxu0 %v1238
        %v1350 = vpop.f32.mrf.mxu0
        %v1351 = vadd.f32 0.0, %v1350
        %v1352 = vpop.f32.mrf.mxu0
        %v1353 = vpop.f32.mrf.mxu0
        %v1354 = vadd.f32 0.0, %v1353
        %v1355 = vpop.f32.mrf.mxu0
        %1356 = vmatprep.mubr.bf16.mxu0 0
        %1357 = vmatmul.mubr.bf16.gmra.mxu0 %v1239
        %v1358 = vpop.f32.mrf.mxu0
        %v1359 = vadd.f32 0.0, %v1358
        %v1360 = vpop.f32.mrf.mxu0
        %v1361 = vpop.f32.mrf.mxu0
        %v1362 = vadd.f32 0.0, %v1361
        %v1363 = vpop.f32.mrf.mxu0
        %1364 = vmatprep.mubr.bf16.mxu0 0
        %1365 = vmatmul.mubr.bf16.gmra.mxu0 %v1240
        %v1366 = vpop.f32.mrf.mxu0
        %v1367 = vadd.f32 0.0, %v1366
        %v1368 = vpop.f32.mrf.mxu0
        %v1369 = vpop.f32.mrf.mxu0
        %v1370 = vadd.f32 0.0, %v1369
        %v1371 = vpop.f32.mrf.mxu0
        %1372 = vmatprep.mubr.bf16.mxu0 0
        %1373 = vmatmul.mubr.bf16.gmra.mxu0 %v1241
        %v1374 = vpop.f32.mrf.mxu0
        %v1375 = vadd.f32 0.0, %v1374
        %v1376 = vpop.f32.mrf.mxu0
        %v1377 = vpop.f32.mrf.mxu0
        %v1378 = vadd.f32 0.0, %v1377
        %v1379 = vpop.f32.mrf.mxu0
        %1380 = vmatprep.mubr.bf16.mxu0 0
        %1381 = vmatmul.mubr.bf16.gmra.mxu0 %v1242
        %v1382 = vpop.f32.mrf.mxu0
        %v1383 = vadd.f32 0.0, %v1382
        %v1384 = vpop.f32.mrf.mxu0
        %v1385 = vpop.f32.mrf.mxu0
        %v1386 = vadd.f32 0.0, %v1385
        %v1387 = vpop.f32.mrf.mxu0
        %1388 = vmatprep.mubr.bf16.mxu0 0
        %1389 = vmatmul.mubr.bf16.gmra.mxu0 %v1243
        %v1390 = vpop.f32.mrf.mxu0
        %v1391 = vadd.f32 0.0, %v1390
        %v1392 = vpop.f32.mrf.mxu0
        %v1393 = vpop.f32.mrf.mxu0
        %v1394 = vadd.f32 0.0, %v1393
        %v1395 = vpop.f32.mrf.mxu0
        %1396 = vdwg.mxu0
        %v1397 = vadd.f32 %v1126, %v1335
        %v1398 = vadd.f32 %v1129, %v1338
        %v1399 = vadd.f32 %v1134, %v1343
        %v1400 = vadd.f32 %v1137, %v1346
        %v1401 = vadd.f32 %v1142, %v1351
        %v1402 = vadd.f32 %v1145, %v1354
        %v1403 = vadd.f32 %v1150, %v1359
        %v1404 = vadd.f32 %v1153, %v1362
        %v1405 = vadd.f32 %v1158, %v1367
        %v1406 = vadd.f32 %v1161, %v1370
        %v1407 = vadd.f32 %v1166, %v1375
        %v1408 = vadd.f32 %v1169, %v1378
        %v1409 = vadd.f32 %v1174, %v1383
        %v1410 = vadd.f32 %v1177, %v1386
        %v1411 = vadd.f32 %v1182, %v1391
        %v1412 = vadd.f32 %v1185, %v1394
        %v1413 = vmax.f32 %v1397, 0.0
        %v1414 = vmax.f32 %v1398, 0.0
        %v1415 = vmax.f32 %v1399, 0.0
        %v1416 = vmax.f32 %v1400, 0.0
        %v1417 = vmax.f32 %v1401, 0.0
        %v1418 = vmax.f32 %v1402, 0.0
        %v1419 = vmax.f32 %v1403, 0.0
        %v1420 = vmax.f32 %v1404, 0.0
        %v1421 = vmax.f32 %v1405, 0.0
        %v1422 = vmax.f32 %v1406, 0.0
        %v1423 = vmax.f32 %v1407, 0.0
        %v1424 = vmax.f32 %v1408, 0.0
        %v1425 = vmax.f32 %v1409, 0.0
        %v1426 = vmax.f32 %v1410, 0.0
        %v1427 = vmax.f32 %v1411, 0.0
        %v1428 = vmax.f32 %v1412, 0.0
        %v1429 = vpack.c.bf16 %v1414, %v1413
        %v1430 = vpack.c.bf16 %v1416, %v1415
        %v1431 = vpack.c.bf16 %v1418, %v1417
        %v1432 = vpack.c.bf16 %v1420, %v1419
        %v1433 = vpack.c.bf16 %v1422, %v1421
        %v1434 = vpack.c.bf16 %v1424, %v1423
        %v1435 = vpack.c.bf16 %v1426, %v1425
        %v1436 = vpack.c.bf16 %v1428, %v1427
        %s1437 = sadd.s32 %s606, %s608
        %v1446 = vunpack.c.l.b16 %v1429
        %v1447 = vunpack.c.h.b16 %v1429
        %v1448 = vunpack.c.l.b16 %v1430
        %v1449 = vunpack.c.h.b16 %v1430
        %v1450 = vunpack.c.l.b16 %v1431
        %v1451 = vunpack.c.h.b16 %v1431
        %v1452 = vunpack.c.l.b16 %v1432
        %v1453 = vunpack.c.h.b16 %v1432
        %v1454 = vunpack.c.l.b16 %v1433
        %v1455 = vunpack.c.h.b16 %v1433
        %v1456 = vunpack.c.l.b16 %v1434
        %v1457 = vunpack.c.h.b16 %v1434
        %v1458 = vunpack.c.l.b16 %v1435
        %v1459 = vunpack.c.h.b16 %v1435
        %v1460 = vunpack.c.l.b16 %v1436
        %v1461 = vunpack.c.h.b16 %v1436
        %v1462 = vpack.c.b16 %v1446, %v1446
        %v1463 = vpack.c.b16 %v1447, %v1447
        %v1464 = vpack.c.b16 %v1448, %v1448
        %v1465 = vpack.c.b16 %v1449, %v1449
        %v1466 = vpack.c.b16 %v1450, %v1450
        %v1467 = vpack.c.b16 %v1451, %v1451
        %v1468 = vpack.c.b16 %v1452, %v1452
        %v1469 = vpack.c.b16 %v1453, %v1453
        %v1470 = vpack.c.b16 %v1454, %v1454
        %v1471 = vpack.c.b16 %v1455, %v1455
        %v1472 = vpack.c.b16 %v1456, %v1456
        %v1473 = vpack.c.b16 %v1457, %v1457
        %v1474 = vpack.c.b16 %v1458, %v1458
        %v1475 = vpack.c.b16 %v1459, %v1459
        %v1476 = vpack.c.b16 %v1460, %v1460
        %v1477 = vpack.c.b16 %v1461, %v1461
        %s1494 = sshra.s32 %s1437, 3
        %s1495 = sand.u32 %s1437, 7
        %s1496 = smul.addr %s1494, 4
        %s1497 = scalar_lea.vmem [#allocation2], %s1496
        %1498 = vst [vmem:[%s1497] sm:$0xf] %v1462
        %1499 = vst [vmem:[%s1497 + $0x4] sm:$0xf] %v1463
        %1500 = vst [vmem:[%s1497 + $0x8] sm:$0xf] %v1464
        %1501 = vst [vmem:[%s1497 + $0xc] sm:$0xf] %v1465
        %1502 = vst [vmem:[%s1497 + $0x10] sm:$0xf] %v1466
        %1503 = vst [vmem:[%s1497 + $0x14] sm:$0xf] %v1467
        %1504 = vst [vmem:[%s1497 + $0x18] sm:$0xf] %v1468
        %1505 = vst [vmem:[%s1497 + $0x1c] sm:$0xf] %v1469
        %1506 = vst [vmem:[%s1497 + $0x20] sm:$0xf] %v1470
        %1507 = vst [vmem:[%s1497 + $0x24] sm:$0xf] %v1471
        %1508 = vst [vmem:[%s1497 + $0x28] sm:$0xf] %v1472
        %1509 = vst [vmem:[%s1497 + $0x2c] sm:$0xf] %v1473
        %1510 = vst [vmem:[%s1497 + $0x30] sm:$0xf] %v1474
        %1511 = vst [vmem:[%s1497 + $0x34] sm:$0xf] %v1475
        %1512 = vst [vmem:[%s1497 + $0x38] sm:$0xf] %v1476
        %1513 = vst [vmem:[%s1497 + $0x3c] sm:$0xf] %v1477
        %p1514 = scmp.eq.s32.totalorder %s29, 1
        // Predicated region
        $region85: #{global_attention_net_forward.1} parent=83 // pred_check
          %p1515 = pneg %p1514
        $region86: #{global_attention_net_forward.1} parent=83 // pred_check_branch
          %1517 = sbr.rel (%p1515) target = $region88
        $region87: #{global_attention_net_forward.1} parent=83 // pred_region
          %v1518 = vld [vmem:[%s575] sm:$0xff]
          %v1519 = vld [vmem:[%s575 + $0x8] sm:$0xff]
          %v1520 = vld [vmem:[%s575 + $0x10] sm:$0xff]
          %v1521 = vld [vmem:[%s575 + $0x18] sm:$0xff]
          %v1522 = vld [vmem:[%s575 + $0x20] sm:$0xff]
          %v1523 = vld [vmem:[%s575 + $0x28] sm:$0xff]
          %v1524 = vld [vmem:[%s575 + $0x30] sm:$0xff]
          %v1525 = vld [vmem:[%s575 + $0x38] sm:$0xff]
          %v1526 = vld [vmem:[%s575 + $0x40] sm:$0xff]
          %v1527 = vld [vmem:[%s575 + $0x48] sm:$0xff]
          %v1528 = vld [vmem:[%s575 + $0x50] sm:$0xff]
          %v1529 = vld [vmem:[%s575 + $0x58] sm:$0xff]
          %v1530 = vld [vmem:[%s575 + $0x60] sm:$0xff]
          %v1531 = vld [vmem:[%s575 + $0x68] sm:$0xff]
          %v1532 = vld [vmem:[%s575 + $0x70] sm:$0xff]
          %v1533 = vld [vmem:[%s575 + $0x78] sm:$0xff]
          %v1534 = vld [vmem:[%s6] sm:$0xf]
          %v1535 = vld [vmem:[%s6 + $0x4] sm:$0xf]
          %v1536 = vld [vmem:[%s6 + $0x8] sm:$0xf]
          %v1537 = vld [vmem:[%s6 + $0xc] sm:$0xf]
          %v1538 = vld [vmem:[%s6 + $0x10] sm:$0xf]
          %v1539 = vld [vmem:[%s6 + $0x14] sm:$0xf]
          %v1540 = vld [vmem:[%s6 + $0x18] sm:$0xf]
          %v1541 = vld [vmem:[%s6 + $0x1c] sm:$0xf]
          %v1542 = vld [vmem:[%s6 + $0x20] sm:$0xf]
          %v1543 = vld [vmem:[%s6 + $0x24] sm:$0xf]
          %v1544 = vld [vmem:[%s6 + $0x28] sm:$0xf]
          %v1545 = vld [vmem:[%s6 + $0x2c] sm:$0xf]
          %v1546 = vld [vmem:[%s6 + $0x30] sm:$0xf]
          %v1547 = vld [vmem:[%s6 + $0x34] sm:$0xf]
          %v1548 = vld [vmem:[%s6 + $0x38] sm:$0xf]
          %v1549 = vld [vmem:[%s6 + $0x3c] sm:$0xf]
          %s1550 = sld [smem:[#allocation7]]
          %v1551 = vstv %s1550
          %v1568 = vunpack.c.l.b16 %v1534
          %v1569 = vunpack.c.l.b16 %v1535
          %v1570 = vunpack.c.l.b16 %v1536
          %v1571 = vunpack.c.l.b16 %v1537
          %v1572 = vunpack.c.l.b16 %v1538
          %v1573 = vunpack.c.l.b16 %v1539
          %v1574 = vunpack.c.l.b16 %v1540
          %v1575 = vunpack.c.l.b16 %v1541
          %v1576 = vunpack.c.l.b16 %v1542
          %v1577 = vunpack.c.l.b16 %v1543
          %v1578 = vunpack.c.l.b16 %v1544
          %v1579 = vunpack.c.l.b16 %v1545
          %v1580 = vunpack.c.l.b16 %v1546
          %v1581 = vunpack.c.l.b16 %v1547
          %v1582 = vunpack.c.l.b16 %v1548
          %v1583 = vunpack.c.l.b16 %v1549
          %v1584 = vpack.c.b16 %v1569, %v1568
          %v1585 = vpack.c.b16 %v1571, %v1570
          %v1586 = vpack.c.b16 %v1573, %v1572
          %v1587 = vpack.c.b16 %v1575, %v1574
          %v1588 = vpack.c.b16 %v1577, %v1576
          %v1589 = vpack.c.b16 %v1579, %v1578
          %v1590 = vpack.c.b16 %v1581, %v1580
          %v1591 = vpack.c.b16 %v1583, %v1582
          %1600 = vmatprep.subr.bf16.mxu0 0
          %1601 = vmatpush1.bf16.msra.mxu0 %v1591
          %1602 = vmatprep.subr.bf16.mxu0 0
          %1603 = vmatpush1.bf16.msra.mxu0 %v1590
          %1604 = vmatprep.subr.bf16.mxu0 0
          %1605 = vmatpush1.bf16.msra.mxu0 %v1589
          %1606 = vmatprep.subr.bf16.mxu0 0
          %1607 = vmatpush1.bf16.msra.mxu0 %v1588
          %1608 = vmatprep.subr.bf16.mxu0 0
          %1609 = vmatpush1.bf16.msra.mxu0 %v1587
          %1610 = vmatprep.subr.bf16.mxu0 0
          %1611 = vmatpush1.bf16.msra.mxu0 %v1586
          %1612 = vmatprep.subr.bf16.mxu0 0
          %1613 = vmatpush1.bf16.msra.mxu0 %v1585
          %1614 = vmatprep.subr.bf16.mxu0 0
          %1615 = vmatpush1.bf16.msra.mxu0 %v1584
          %1616 = vmatprep.subr.bf16.mxu0 0
          %1617 = vmatpush2.bf16.msra.mxu0 0
          %1618 = vmatprep.subr.bf16.mxu0 0
          %1619 = vmatpush2.bf16.msra.mxu0 0
          %1620 = vmatprep.subr.bf16.mxu0 0
          %1621 = vmatpush2.bf16.msra.mxu0 0
          %1622 = vmatprep.subr.bf16.mxu0 0
          %1623 = vmatpush2.bf16.msra.mxu0 0
          %1624 = vmatprep.subr.bf16.mxu0 0
          %1625 = vmatpush2.bf16.msra.mxu0 0
          %1626 = vmatprep.subr.bf16.mxu0 0
          %1627 = vmatpush2.bf16.msra.mxu0 0
          %1628 = vmatprep.subr.bf16.mxu0 0
          %1629 = vmatpush2.bf16.msra.mxu0 0
          %1630 = vmatprep.subr.bf16.mxu0 0
          %1631 = vmatpush2.bf16.msra.mxu0 0
          %1632 = vmatprep.mubr.bf16.mxu0 0
          %1633 = vmatmul.mubr.bf16.gmra.mxu0 %v1429
          %v1634 = vpop.f32.mrf.mxu0
          %v1635 = vadd.f32 %v1551, %v1634
          %v1636 = vpop.f32.mrf.mxu0
          %v1637 = vpop.f32.mrf.mxu0
          %v1638 = vadd.f32 %v1551, %v1637
          %v1639 = vpop.f32.mrf.mxu0
          %1640 = vmatprep.mubr.bf16.mxu0 0
          %1641 = vmatmul.mubr.bf16.gmra.mxu0 %v1430
          %v1642 = vpop.f32.mrf.mxu0
          %v1643 = vadd.f32 %v1551, %v1642
          %v1644 = vpop.f32.mrf.mxu0
          %v1645 = vpop.f32.mrf.mxu0
          %v1646 = vadd.f32 %v1551, %v1645
          %v1647 = vpop.f32.mrf.mxu0
          %1648 = vmatprep.mubr.bf16.mxu0 0
          %1649 = vmatmul.mubr.bf16.gmra.mxu0 %v1431
          %v1650 = vpop.f32.mrf.mxu0
          %v1651 = vadd.f32 %v1551, %v1650
          %v1652 = vpop.f32.mrf.mxu0
          %v1653 = vpop.f32.mrf.mxu0
          %v1654 = vadd.f32 %v1551, %v1653
          %v1655 = vpop.f32.mrf.mxu0
          %1656 = vmatprep.mubr.bf16.mxu0 0
          %1657 = vmatmul.mubr.bf16.gmra.mxu0 %v1432
          %v1658 = vpop.f32.mrf.mxu0
          %v1659 = vadd.f32 %v1551, %v1658
          %v1660 = vpop.f32.mrf.mxu0
          %v1661 = vpop.f32.mrf.mxu0
          %v1662 = vadd.f32 %v1551, %v1661
          %v1663 = vpop.f32.mrf.mxu0
          %1664 = vmatprep.mubr.bf16.mxu0 0
          %1665 = vmatmul.mubr.bf16.gmra.mxu0 %v1433
          %v1666 = vpop.f32.mrf.mxu0
          %v1667 = vadd.f32 %v1551, %v1666
          %v1668 = vpop.f32.mrf.mxu0
          %v1669 = vpop.f32.mrf.mxu0
          %v1670 = vadd.f32 %v1551, %v1669
          %v1671 = vpop.f32.mrf.mxu0
          %1672 = vmatprep.mubr.bf16.mxu0 0
          %1673 = vmatmul.mubr.bf16.gmra.mxu0 %v1434
          %v1674 = vpop.f32.mrf.mxu0
          %v1675 = vadd.f32 %v1551, %v1674
          %v1676 = vpop.f32.mrf.mxu0
          %v1677 = vpop.f32.mrf.mxu0
          %v1678 = vadd.f32 %v1551, %v1677
          %v1679 = vpop.f32.mrf.mxu0
          %1680 = vmatprep.mubr.bf16.mxu0 0
          %1681 = vmatmul.mubr.bf16.gmra.mxu0 %v1435
          %v1682 = vpop.f32.mrf.mxu0
          %v1683 = vadd.f32 %v1551, %v1682
          %v1684 = vpop.f32.mrf.mxu0
          %v1685 = vpop.f32.mrf.mxu0
          %v1686 = vadd.f32 %v1551, %v1685
          %v1687 = vpop.f32.mrf.mxu0
          %1688 = vmatprep.mubr.bf16.mxu0 0
          %1689 = vmatmul.mubr.bf16.gmra.mxu0 %v1436
          %v1690 = vpop.f32.mrf.mxu0
          %v1691 = vadd.f32 %v1551, %v1690
          %v1692 = vpop.f32.mrf.mxu0
          %v1693 = vpop.f32.mrf.mxu0
          %v1694 = vadd.f32 %v1551, %v1693
          %v1695 = vpop.f32.mrf.mxu0
          %1696 = vdwg.mxu0
          %vm1697 = vcmp.gt.f32.partialorder %v1518, 0.0
          %vm1698 = vcmp.gt.f32.partialorder %v1519, 0.0
          %vm1699 = vcmp.gt.f32.partialorder %v1520, 0.0
          %vm1700 = vcmp.gt.f32.partialorder %v1521, 0.0
          %vm1701 = vcmp.gt.f32.partialorder %v1522, 0.0
          %vm1702 = vcmp.gt.f32.partialorder %v1523, 0.0
          %vm1703 = vcmp.gt.f32.partialorder %v1524, 0.0
          %vm1704 = vcmp.gt.f32.partialorder %v1525, 0.0
          %vm1705 = vcmp.gt.f32.partialorder %v1526, 0.0
          %vm1706 = vcmp.gt.f32.partialorder %v1527, 0.0
          %vm1707 = vcmp.gt.f32.partialorder %v1528, 0.0
          %vm1708 = vcmp.gt.f32.partialorder %v1529, 0.0
          %vm1709 = vcmp.gt.f32.partialorder %v1530, 0.0
          %vm1710 = vcmp.gt.f32.partialorder %v1531, 0.0
          %vm1711 = vcmp.gt.f32.partialorder %v1532, 0.0
          %vm1712 = vcmp.gt.f32.partialorder %v1533, 0.0
          %v1713 = vsel %vm1697, %v1635, -1e+30
          %v1714 = vsel %vm1698, %v1638, -1e+30
          %v1715 = vsel %vm1699, %v1643, -1e+30
          %v1716 = vsel %vm1700, %v1646, -1e+30
          %v1717 = vsel %vm1701, %v1651, -1e+30
          %v1718 = vsel %vm1702, %v1654, -1e+30
          %v1719 = vsel %vm1703, %v1659, -1e+30
          %v1720 = vsel %vm1704, %v1662, -1e+30
          %v1721 = vsel %vm1705, %v1667, -1e+30
          %v1722 = vsel %vm1706, %v1670, -1e+30
          %v1723 = vsel %vm1707, %v1675, -1e+30
          %v1724 = vsel %vm1708, %v1678, -1e+30
          %v1725 = vsel %vm1709, %v1683, -1e+30
          %v1726 = vsel %vm1710, %v1686, -1e+30
          %v1727 = vsel %vm1711, %v1691, -1e+30
          %v1728 = vsel %vm1712, %v1694, -1e+30
          %v1729 = vld [vmem:[#allocation4] sm:$0x1]
          %v1730 = vmax.f32 %v1713, %v1717
          %v1731 = vmax.f32 %v1714, %v1718
          %v1732 = vmax.f32 %v1715, %v1719
          %v1733 = vmax.f32 %v1716, %v1720
          %v1734 = vmax.f32 %v1730, %v1721
          %v1735 = vmax.f32 %v1731, %v1722
          %v1736 = vmax.f32 %v1732, %v1723
          %v1737 = vmax.f32 %v1733, %v1724
          %v1738 = vmax.f32 %v1734, %v1725
          %v1739 = vmax.f32 %v1735, %v1726
          %v1740 = vmax.f32 %v1736, %v1727
          %v1741 = vmax.f32 %v1737, %v1728
          %v1742 = vmax.f32 %v1738, %v1739
          %v1743 = vmax.f32 %v1740, %v1741
          %v1744 = vmax.f32 %v1742, %v1743
          %v1745 = vrot.slane %v1744, 4
          %v1746 = vmax.f32 %v1744, %v1745
          %v1747 = vrot.slane %v1746, 2
          %v1748 = vmax.f32 %v1746, %v1747
          %v1749 = vrot.slane %v1748, 1
          %v1750 = vmax.f32 %v1748, %v1749
          %v1751 = vmax.f32 %v1729, %v1750
          %v1752 = vsub.f32 %v1729, %v1751
          %v1753 = vmul.f32 %v1752, 1.442695
          %v1754 = vpow.pop %v1753
          %v1756 = vlaneseq
          %v1757 = vshrl.u32 %v1756, 7
          %v1758 = vsub.s32 0, %v1757
          %v1759 = vrot.slane %v1751, %v1758
          %v1761 = vsub.f32 %v1635, %v1759
          %v1762 = vsub.f32 %v1638, %v1759
          %v1763 = vsub.f32 %v1643, %v1759
          %v1764 = vsub.f32 %v1646, %v1759
          %v1765 = vsub.f32 %v1651, %v1759
          %v1766 = vsub.f32 %v1654, %v1759
          %v1767 = vsub.f32 %v1659, %v1759
          %v1768 = vsub.f32 %v1662, %v1759
          %v1769 = vsub.f32 %v1667, %v1759
          %v1770 = vsub.f32 %v1670, %v1759
          %v1771 = vsub.f32 %v1675, %v1759
          %v1772 = vsub.f32 %v1678, %v1759
          %v1773 = vsub.f32 %v1683, %v1759
          %v1774 = vsub.f32 %v1686, %v1759
          %v1775 = vsub.f32 %v1691, %v1759
          %v1776 = vsub.f32 %v1694, %v1759
          %v1777 = vmul.f32 %v1761, 1.442695
          %v1778 = vpow.pop %v1777
          %v1779 = vmul.f32 %v1762, 1.442695
          %v1780 = vpow.pop %v1779
          %v1781 = vmul.f32 %v1763, 1.442695
          %v1782 = vpow.pop %v1781
          %v1783 = vmul.f32 %v1764, 1.442695
          %v1784 = vpow.pop %v1783
          %v1785 = vmul.f32 %v1765, 1.442695
          %v1786 = vpow.pop %v1785
          %v1787 = vmul.f32 %v1766, 1.442695
          %v1788 = vpow.pop %v1787
          %v1789 = vmul.f32 %v1767, 1.442695
          %v1790 = vpow.pop %v1789
          %v1791 = vmul.f32 %v1768, 1.442695
          %v1792 = vpow.pop %v1791
          %v1793 = vmul.f32 %v1769, 1.442695
          %v1794 = vpow.pop %v1793
          %v1795 = vmul.f32 %v1770, 1.442695
          %v1796 = vpow.pop %v1795
          %v1797 = vmul.f32 %v1771, 1.442695
          %v1798 = vpow.pop %v1797
          %v1799 = vmul.f32 %v1772, 1.442695
          %v1800 = vpow.pop %v1799
          %v1801 = vmul.f32 %v1773, 1.442695
          %v1802 = vpow.pop %v1801
          %v1803 = vmul.f32 %v1774, 1.442695
          %v1804 = vpow.pop %v1803
          %v1805 = vmul.f32 %v1775, 1.442695
          %v1806 = vpow.pop %v1805
          %v1807 = vmul.f32 %v1776, 1.442695
          %v1808 = vpow.pop %v1807
          %v1809 = vsel %vm1697, %v1778, 0.0
          %v1810 = vsel %vm1698, %v1780, 0.0
          %v1811 = vsel %vm1699, %v1782, 0.0
          %v1812 = vsel %vm1700, %v1784, 0.0
          %v1813 = vsel %vm1701, %v1786, 0.0
          %v1814 = vsel %vm1702, %v1788, 0.0
          %v1815 = vsel %vm1703, %v1790, 0.0
          %v1816 = vsel %vm1704, %v1792, 0.0
          %v1817 = vsel %vm1705, %v1794, 0.0
          %v1818 = vsel %vm1706, %v1796, 0.0
          %v1819 = vsel %vm1707, %v1798, 0.0
          %v1820 = vsel %vm1708, %v1800, 0.0
          %v1821 = vsel %vm1709, %v1802, 0.0
          %v1822 = vsel %vm1710, %v1804, 0.0
          %v1823 = vsel %vm1711, %v1806, 0.0
          %v1824 = vsel %vm1712, %v1808, 0.0
          %v1825 = vld [vmem:[#allocation5] sm:$0x1]
          %v1826 = vmul.f32 %v1754, %v1825
          %v1827 = vadd.f32 %v1809, %v1810
          %v1828 = vadd.f32 %v1827, %v1811
          %v1829 = vadd.f32 %v1828, %v1812
          %v1830 = vadd.f32 %v1829, %v1813
          %v1831 = vadd.f32 %v1830, %v1814
          %v1832 = vadd.f32 %v1831, %v1815
          %v1833 = vadd.f32 %v1832, %v1816
          %v1834 = vadd.f32 %v1833, %v1817
          %v1835 = vadd.f32 %v1834, %v1818
          %v1836 = vadd.f32 %v1835, %v1819
          %v1837 = vadd.f32 %v1836, %v1820
          %v1838 = vadd.f32 %v1837, %v1821
          %v1839 = vadd.f32 %v1838, %v1822
          %v1840 = vadd.f32 %v1839, %v1823
          %v1841 = vadd.f32 %v1840, %v1824
          %v1842 = vrot.slane %v1841, 4
          %v1843 = vadd.f32 %v1841, %v1842
          %v1844 = vrot.slane %v1843, 2
          %v1845 = vadd.f32 %v1843, %v1844
          %v1846 = vrot.slane %v1845, 1
          %v1847 = vadd.f32 %v1845, %v1846
          %v1848 = vadd.f32 %v1826, %v1847
          %1849 = vst [vmem:[#allocation5] sm:$0x1] %v1848
          %v1850 = vld [vmem:[#allocation6] sm:$0xff]
          %v1851 = vld [vmem:[#allocation6 + $0x8] sm:$0xff]
          %v1852 = vld [vmem:[#allocation6 + $0x10] sm:$0xff]
          %v1853 = vld [vmem:[#allocation6 + $0x18] sm:$0xff]
          %v1854 = vld [vmem:[#allocation6 + $0x20] sm:$0xff]
          %v1855 = vld [vmem:[#allocation6 + $0x28] sm:$0xff]
          %v1856 = vld [vmem:[#allocation6 + $0x30] sm:$0xff]
          %v1857 = vld [vmem:[#allocation6 + $0x38] sm:$0xff]
          %v1858 = vld [vmem:[#allocation6 + $0x40] sm:$0xff]
          %v1859 = vld [vmem:[#allocation6 + $0x48] sm:$0xff]
          %v1860 = vld [vmem:[#allocation6 + $0x50] sm:$0xff]
          %v1861 = vld [vmem:[#allocation6 + $0x58] sm:$0xff]
          %v1862 = vld [vmem:[#allocation6 + $0x60] sm:$0xff]
          %v1863 = vld [vmem:[#allocation6 + $0x68] sm:$0xff]
          %v1864 = vld [vmem:[#allocation6 + $0x70] sm:$0xff]
          %v1865 = vld [vmem:[#allocation6 + $0x78] sm:$0xff]
          %v1867 = vlaneseq
          %v1868 = vshrl.u32 %v1867, 7
          %v1869 = vsub.s32 0, %v1868
          %v1870 = vrot.slane %v1754, %v1869
          %v1872 = vmul.f32 %v1870, %v1850
          %v1873 = vmul.f32 %v1870, %v1851
          %v1874 = vmul.f32 %v1870, %v1852
          %v1875 = vmul.f32 %v1870, %v1853
          %v1876 = vmul.f32 %v1870, %v1854
          %v1877 = vmul.f32 %v1870, %v1855
          %v1878 = vmul.f32 %v1870, %v1856
          %v1879 = vmul.f32 %v1870, %v1857
          %v1880 = vmul.f32 %v1870, %v1858
          %v1881 = vmul.f32 %v1870, %v1859
          %v1882 = vmul.f32 %v1870, %v1860
          %v1883 = vmul.f32 %v1870, %v1861
          %v1884 = vmul.f32 %v1870, %v1862
          %v1885 = vmul.f32 %v1870, %v1863
          %v1886 = vmul.f32 %v1870, %v1864
          %v1887 = vmul.f32 %v1870, %v1865
          %v1888 = vpack.c.bf16 %v1810, %v1809
          %v1889 = vpack.c.bf16 %v1812, %v1811
          %v1890 = vpack.c.bf16 %v1814, %v1813
          %v1891 = vpack.c.bf16 %v1816, %v1815
          %v1892 = vpack.c.bf16 %v1818, %v1817
          %v1893 = vpack.c.bf16 %v1820, %v1819
          %v1894 = vpack.c.bf16 %v1822, %v1821
          %v1895 = vpack.c.bf16 %v1824, %v1823
          %1896 = vxpose.xlu0.c.b16.start [1/8] %v1429, 128
          %1897 = vxpose.xlu0.c.b16.cont [2/8] %v1430, 128
          %1898 = vxpose.xlu0.c.b16.cont [3/8] %v1431, 128
          %1899 = vxpose.xlu0.c.b16.cont [4/8] %v1432, 128
          %1900 = vxpose.xlu0.c.b16.cont [5/8] %v1433, 128
          %1901 = vxpose.xlu0.c.b16.cont [6/8] %v1434, 128
          %1902 = vxpose.xlu0.c.b16.cont [7/8] %v1435, 128
          %1903 = vxpose.xlu0.c.b16.end [8/8] %v1436, 128
          %v1904 = vpop.trf.xlu0
          %v1905 = vpop.trf.xlu0
          %v1906 = vpop.trf.xlu0
          %v1907 = vpop.trf.xlu0
          %v1908 = vpop.trf.xlu0
          %v1909 = vpop.trf.xlu0
          %v1910 = vpop.trf.xlu0
          %v1911 = vpop.trf.xlu0
          %1912 = vmatprep.subr.bf16.mxu0 0
          %1913 = vmatpush1.bf16.msra.mxu0 %v1895
          %1914 = vmatprep.subr.bf16.mxu0 0
          %1915 = vmatpush1.bf16.msra.mxu0 %v1894
          %1916 = vmatprep.subr.bf16.mxu0 0
          %1917 = vmatpush1.bf16.msra.mxu0 %v1893
          %1918 = vmatprep.subr.bf16.mxu0 0
          %1919 = vmatpush1.bf16.msra.mxu0 %v1892
          %1920 = vmatprep.subr.bf16.mxu0 0
          %1921 = vmatpush1.bf16.msra.mxu0 %v1891
          %1922 = vmatprep.subr.bf16.mxu0 0
          %1923 = vmatpush1.bf16.msra.mxu0 %v1890
          %1924 = vmatprep.subr.bf16.mxu0 0
          %1925 = vmatpush1.bf16.msra.mxu0 %v1889
          %1926 = vmatprep.subr.bf16.mxu0 0
          %1927 = vmatpush1.bf16.msra.mxu0 %v1888
          %1928 = vmatprep.subr.bf16.mxu0 0
          %1929 = vmatpush2.bf16.msra.mxu0 0
          %1930 = vmatprep.subr.bf16.mxu0 0
          %1931 = vmatpush2.bf16.msra.mxu0 0
          %1932 = vmatprep.subr.bf16.mxu0 0
          %1933 = vmatpush2.bf16.msra.mxu0 0
          %1934 = vmatprep.subr.bf16.mxu0 0
          %1935 = vmatpush2.bf16.msra.mxu0 0
          %1936 = vmatprep.subr.bf16.mxu0 0
          %1937 = vmatpush2.bf16.msra.mxu0 0
          %1938 = vmatprep.subr.bf16.mxu0 0
          %1939 = vmatpush2.bf16.msra.mxu0 0
          %1940 = vmatprep.subr.bf16.mxu0 0
          %1941 = vmatpush2.bf16.msra.mxu0 0
          %1942 = vmatprep.subr.bf16.mxu0 0
          %1943 = vmatpush2.bf16.msra.mxu0 0
          %1944 = vmatprep.mubr.bf16.mxu0 0
          %1945 = vmatmul.mubr.bf16.gmra.mxu0 %v1904
          %v1946 = vpop.f32.mrf.mxu0
          %v1947 = vadd.f32 0.0, %v1946
          %v1948 = vpop.f32.mrf.mxu0
          %v1949 = vpop.f32.mrf.mxu0
          %v1950 = vadd.f32 0.0, %v1949
          %v1951 = vpop.f32.mrf.mxu0
          %1952 = vmatprep.mubr.bf16.mxu0 0
          %1953 = vmatmul.mubr.bf16.gmra.mxu0 %v1905
          %v1954 = vpop.f32.mrf.mxu0
          %v1955 = vadd.f32 0.0, %v1954
          %v1956 = vpop.f32.mrf.mxu0
          %v1957 = vpop.f32.mrf.mxu0
          %v1958 = vadd.f32 0.0, %v1957
          %v1959 = vpop.f32.mrf.mxu0
          %1960 = vmatprep.mubr.bf16.mxu0 0
          %1961 = vmatmul.mubr.bf16.gmra.mxu0 %v1906
          %v1962 = vpop.f32.mrf.mxu0
          %v1963 = vadd.f32 0.0, %v1962
          %v1964 = vpop.f32.mrf.mxu0
          %v1965 = vpop.f32.mrf.mxu0
          %v1966 = vadd.f32 0.0, %v1965
          %v1967 = vpop.f32.mrf.mxu0
          %1968 = vmatprep.mubr.bf16.mxu0 0
          %1969 = vmatmul.mubr.bf16.gmra.mxu0 %v1907
          %v1970 = vpop.f32.mrf.mxu0
          %v1971 = vadd.f32 0.0, %v1970
          %v1972 = vpop.f32.mrf.mxu0
          %v1973 = vpop.f32.mrf.mxu0
          %v1974 = vadd.f32 0.0, %v1973
          %v1975 = vpop.f32.mrf.mxu0
          %1976 = vmatprep.mubr.bf16.mxu0 0
          %1977 = vmatmul.mubr.bf16.gmra.mxu0 %v1908
          %v1978 = vpop.f32.mrf.mxu0
          %v1979 = vadd.f32 0.0, %v1978
          %v1980 = vpop.f32.mrf.mxu0
          %v1981 = vpop.f32.mrf.mxu0
          %v1982 = vadd.f32 0.0, %v1981
          %v1983 = vpop.f32.mrf.mxu0
          %1984 = vmatprep.mubr.bf16.mxu0 0
          %1985 = vmatmul.mubr.bf16.gmra.mxu0 %v1909
          %v1986 = vpop.f32.mrf.mxu0
          %v1987 = vadd.f32 0.0, %v1986
          %v1988 = vpop.f32.mrf.mxu0
          %v1989 = vpop.f32.mrf.mxu0
          %v1990 = vadd.f32 0.0, %v1989
          %v1991 = vpop.f32.mrf.mxu0
          %1992 = vmatprep.mubr.bf16.mxu0 0
          %1993 = vmatmul.mubr.bf16.gmra.mxu0 %v1910
          %v1994 = vpop.f32.mrf.mxu0
          %v1995 = vadd.f32 0.0, %v1994
          %v1996 = vpop.f32.mrf.mxu0
          %v1997 = vpop.f32.mrf.mxu0
          %v1998 = vadd.f32 0.0, %v1997
          %v1999 = vpop.f32.mrf.mxu0
          %2000 = vmatprep.mubr.bf16.mxu0 0
          %2001 = vmatmul.mubr.bf16.gmra.mxu0 %v1911
          %v2002 = vpop.f32.mrf.mxu0
          %v2003 = vadd.f32 0.0, %v2002
          %v2004 = vpop.f32.mrf.mxu0
          %v2005 = vpop.f32.mrf.mxu0
          %v2006 = vadd.f32 0.0, %v2005
          %v2007 = vpop.f32.mrf.mxu0
          %2008 = vdwg.mxu0
          %v2009 = vadd.f32 %v1872, %v1947
          %v2010 = vadd.f32 %v1873, %v1950
          %v2011 = vadd.f32 %v1874, %v1955
          %v2012 = vadd.f32 %v1875, %v1958
          %v2013 = vadd.f32 %v1876, %v1963
          %v2014 = vadd.f32 %v1877, %v1966
          %v2015 = vadd.f32 %v1878, %v1971
          %v2016 = vadd.f32 %v1879, %v1974
          %v2017 = vadd.f32 %v1880, %v1979
          %v2018 = vadd.f32 %v1881, %v1982
          %v2019 = vadd.f32 %v1882, %v1987
          %v2020 = vadd.f32 %v1883, %v1990
          %v2021 = vadd.f32 %v1884, %v1995
          %v2022 = vadd.f32 %v1885, %v1998
          %v2023 = vadd.f32 %v1886, %v2003
          %v2024 = vadd.f32 %v1887, %v2006
          %2025 = vst [vmem:[#allocation6] sm:$0xff] %v2009
          %2026 = vst [vmem:[#allocation6 + $0x8] sm:$0xff] %v2010
          %2027 = vst [vmem:[#allocation6 + $0x10] sm:$0xff] %v2011
          %2028 = vst [vmem:[#allocation6 + $0x18] sm:$0xff] %v2012
          %2029 = vst [vmem:[#allocation6 + $0x20] sm:$0xff] %v2013
          %2030 = vst [vmem:[#allocation6 + $0x28] sm:$0xff] %v2014
          %2031 = vst [vmem:[#allocation6 + $0x30] sm:$0xff] %v2015
          %2032 = vst [vmem:[#allocation6 + $0x38] sm:$0xff] %v2016
          %2033 = vst [vmem:[#allocation6 + $0x40] sm:$0xff] %v2017
          %2034 = vst [vmem:[#allocation6 + $0x48] sm:$0xff] %v2018
          %2035 = vst [vmem:[#allocation6 + $0x50] sm:$0xff] %v2019
          %2036 = vst [vmem:[#allocation6 + $0x58] sm:$0xff] %v2020
          %2037 = vst [vmem:[#allocation6 + $0x60] sm:$0xff] %v2021
          %2038 = vst [vmem:[#allocation6 + $0x68] sm:$0xff] %v2022
          %2039 = vst [vmem:[#allocation6 + $0x70] sm:$0xff] %v2023
          %2040 = vst [vmem:[#allocation6 + $0x78] sm:$0xff] %v2024
          %2041 = vst [vmem:[#allocation4] sm:$0x1] %v1751
          // Predicated region
          $region89: #{global_attention_net_forward.1} parent=87 // pred_check
            %p2042 = pneg %p610
          $region90: #{global_attention_net_forward.1} parent=87 // pred_check_branch
            %2044 = sbr.rel (%p2042) target = $region92
          $region91: #{global_attention_net_forward.1} parent=87 // pred_region
            %v2045 = vld [vmem:[#allocation5] sm:$0x1]
            %v2046 = vmax.f32 %v2045, 1e-20
            %v2047 = vrcp.pop %v2046
            %v2048 = vld [vmem:[#allocation6] sm:$0xff]
            %v2049 = vld [vmem:[#allocation6 + $0x8] sm:$0xff]
            %v2050 = vld [vmem:[#allocation6 + $0x10] sm:$0xff]
            %v2051 = vld [vmem:[#allocation6 + $0x18] sm:$0xff]
            %v2052 = vld [vmem:[#allocation6 + $0x20] sm:$0xff]
            %v2053 = vld [vmem:[#allocation6 + $0x28] sm:$0xff]
            %v2054 = vld [vmem:[#allocation6 + $0x30] sm:$0xff]
            %v2055 = vld [vmem:[#allocation6 + $0x38] sm:$0xff]
            %v2056 = vld [vmem:[#allocation6 + $0x40] sm:$0xff]
            %v2057 = vld [vmem:[#allocation6 + $0x48] sm:$0xff]
            %v2058 = vld [vmem:[#allocation6 + $0x50] sm:$0xff]
            %v2059 = vld [vmem:[#allocation6 + $0x58] sm:$0xff]
            %v2060 = vld [vmem:[#allocation6 + $0x60] sm:$0xff]
            %v2061 = vld [vmem:[#allocation6 + $0x68] sm:$0xff]
            %v2062 = vld [vmem:[#allocation6 + $0x70] sm:$0xff]
            %v2063 = vld [vmem:[#allocation6 + $0x78] sm:$0xff]
            %v2065 = vlaneseq
            %v2066 = vshrl.u32 %v2065, 7
            %v2067 = vsub.s32 0, %v2066
            %v2068 = vrot.slane %v2047, %v2067
            %v2070 = vmul.f32 %v2048, %v2068
            %v2071 = vmul.f32 %v2049, %v2068
            %v2072 = vmul.f32 %v2050, %v2068
            %v2073 = vmul.f32 %v2051, %v2068
            %v2074 = vmul.f32 %v2052, %v2068
            %v2075 = vmul.f32 %v2053, %v2068
            %v2076 = vmul.f32 %v2054, %v2068
            %v2077 = vmul.f32 %v2055, %v2068
            %v2078 = vmul.f32 %v2056, %v2068
            %v2079 = vmul.f32 %v2057, %v2068
            %v2080 = vmul.f32 %v2058, %v2068
            %v2081 = vmul.f32 %v2059, %v2068
            %v2082 = vmul.f32 %v2060, %v2068
            %v2083 = vmul.f32 %v2061, %v2068
            %v2084 = vmul.f32 %v2062, %v2068
            %v2085 = vmul.f32 %v2063, %v2068
            %v2086 = vpack.c.bf16 %v2071, %v2070
            %v2087 = vpack.c.bf16 %v2073, %v2072
            %v2088 = vpack.c.bf16 %v2075, %v2074
            %v2089 = vpack.c.bf16 %v2077, %v2076
            %v2090 = vpack.c.bf16 %v2079, %v2078
            %v2091 = vpack.c.bf16 %v2081, %v2080
            %v2092 = vpack.c.bf16 %v2083, %v2082
            %v2093 = vpack.c.bf16 %v2085, %v2084
            %v2094 = vld [vmem:[%s8] sm:$0xf]
            %v2095 = vld [vmem:[%s8 + $0x4] sm:$0xf]
            %v2096 = vld [vmem:[%s8 + $0x8] sm:$0xf]
            %v2097 = vld [vmem:[%s8 + $0xc] sm:$0xf]
            %v2098 = vld [vmem:[%s8 + $0x10] sm:$0xf]
            %v2099 = vld [vmem:[%s8 + $0x14] sm:$0xf]
            %v2100 = vld [vmem:[%s8 + $0x18] sm:$0xf]
            %v2101 = vld [vmem:[%s8 + $0x1c] sm:$0xf]
            %v2102 = vld [vmem:[%s8 + $0x20] sm:$0xf]
            %v2103 = vld [vmem:[%s8 + $0x24] sm:$0xf]
            %v2104 = vld [vmem:[%s8 + $0x28] sm:$0xf]
            %v2105 = vld [vmem:[%s8 + $0x2c] sm:$0xf]
            %v2106 = vld [vmem:[%s8 + $0x30] sm:$0xf]
            %v2107 = vld [vmem:[%s8 + $0x34] sm:$0xf]
            %v2108 = vld [vmem:[%s8 + $0x38] sm:$0xf]
            %v2109 = vld [vmem:[%s8 + $0x3c] sm:$0xf]
            %v2110 = vld [vmem:[%s9] sm:$0x1]
            %v2112 = vlaneseq
            %v2113 = vshrl.u32 %v2112, 7
            %v2114 = vsub.s32 0, %v2113
            %v2115 = vrot.slane %v2110, %v2114
            %2117 = vxpose.xlu0.c.b16.start [1/8] %v2086, 128
            %2118 = vxpose.xlu0.c.b16.cont [2/8] %v2087, 128
            %2119 = vxpose.xlu0.c.b16.cont [3/8] %v2088, 128
            %2120 = vxpose.xlu0.c.b16.cont [4/8] %v2089, 128
            %2121 = vxpose.xlu0.c.b16.cont [5/8] %v2090, 128
            %2122 = vxpose.xlu0.c.b16.cont [6/8] %v2091, 128
            %2123 = vxpose.xlu0.c.b16.cont [7/8] %v2092, 128
            %2124 = vxpose.xlu0.c.b16.end [8/8] %v2093, 128
            %v2125 = vpop.trf.xlu0
            %v2126 = vpop.trf.xlu0
            %v2127 = vpop.trf.xlu0
            %v2128 = vpop.trf.xlu0
            %v2129 = vpop.trf.xlu0
            %v2130 = vpop.trf.xlu0
            %v2131 = vpop.trf.xlu0
            %v2132 = vpop.trf.xlu0
            %v2149 = vunpack.c.l.b16 %v2094
            %v2150 = vunpack.c.l.b16 %v2095
            %v2151 = vunpack.c.l.b16 %v2096
            %v2152 = vunpack.c.l.b16 %v2097
            %v2153 = vunpack.c.l.b16 %v2098
            %v2154 = vunpack.c.l.b16 %v2099
            %v2155 = vunpack.c.l.b16 %v2100
            %v2156 = vunpack.c.l.b16 %v2101
            %v2157 = vunpack.c.l.b16 %v2102
            %v2158 = vunpack.c.l.b16 %v2103
            %v2159 = vunpack.c.l.b16 %v2104
            %v2160 = vunpack.c.l.b16 %v2105
            %v2161 = vunpack.c.l.b16 %v2106
            %v2162 = vunpack.c.l.b16 %v2107
            %v2163 = vunpack.c.l.b16 %v2108
            %v2164 = vunpack.c.l.b16 %v2109
            %v2165 = vpack.c.b16 %v2150, %v2149
            %v2166 = vpack.c.b16 %v2152, %v2151
            %v2167 = vpack.c.b16 %v2154, %v2153
            %v2168 = vpack.c.b16 %v2156, %v2155
            %v2169 = vpack.c.b16 %v2158, %v2157
            %v2170 = vpack.c.b16 %v2160, %v2159
            %v2171 = vpack.c.b16 %v2162, %v2161
            %v2172 = vpack.c.b16 %v2164, %v2163
            %2181 = vmatprep.subr.bf16.mxu0 0
            %2182 = vmatpush1.bf16.msra.mxu0 %v2172
            %2183 = vmatprep.subr.bf16.mxu0 0
            %2184 = vmatpush1.bf16.msra.mxu0 %v2171
            %2185 = vmatprep.subr.bf16.mxu0 0
            %2186 = vmatpush1.bf16.msra.mxu0 %v2170
            %2187 = vmatprep.subr.bf16.mxu0 0
            %2188 = vmatpush1.bf16.msra.mxu0 %v2169
            %2189 = vmatprep.subr.bf16.mxu0 0
            %2190 = vmatpush1.bf16.msra.mxu0 %v2168
            %2191 = vmatprep.subr.bf16.mxu0 0
            %2192 = vmatpush1.bf16.msra.mxu0 %v2167
            %2193 = vmatprep.subr.bf16.mxu0 0
            %2194 = vmatpush1.bf16.msra.mxu0 %v2166
            %2195 = vmatprep.subr.bf16.mxu0 0
            %2196 = vmatpush1.bf16.msra.mxu0 %v2165
            %2197 = vmatprep.subr.bf16.mxu0 0
            %2198 = vmatpush2.bf16.msra.mxu0 0
            %2199 = vmatprep.subr.bf16.mxu0 0
            %2200 = vmatpush2.bf16.msra.mxu0 0
            %2201 = vmatprep.subr.bf16.mxu0 0
            %2202 = vmatpush2.bf16.msra.mxu0 0
            %2203 = vmatprep.subr.bf16.mxu0 0
            %2204 = vmatpush2.bf16.msra.mxu0 0
            %2205 = vmatprep.subr.bf16.mxu0 0
            %2206 = vmatpush2.bf16.msra.mxu0 0
            %2207 = vmatprep.subr.bf16.mxu0 0
            %2208 = vmatpush2.bf16.msra.mxu0 0
            %2209 = vmatprep.subr.bf16.mxu0 0
            %2210 = vmatpush2.bf16.msra.mxu0 0
            %2211 = vmatprep.subr.bf16.mxu0 0
            %2212 = vmatpush2.bf16.msra.mxu0 0
            %2213 = vmatprep.mubr.bf16.mxu0 0
            %2214 = vmatmul.mubr.bf16.gmra.mxu0 %v2125
            %v2215 = vpop.f32.mrf.mxu0
            %v2216 = vadd.f32 %v2115, %v2215
            %v2217 = vpop.f32.mrf.mxu0
            %v2218 = vpop.f32.mrf.mxu0
            %v2219 = vadd.f32 %v2115, %v2218
            %v2220 = vpop.f32.mrf.mxu0
            %2221 = vmatprep.mubr.bf16.mxu0 0
            %2222 = vmatmul.mubr.bf16.gmra.mxu0 %v2126
            %v2223 = vpop.f32.mrf.mxu0
            %v2224 = vadd.f32 %v2115, %v2223
            %v2225 = vpop.f32.mrf.mxu0
            %v2226 = vpop.f32.mrf.mxu0
            %v2227 = vadd.f32 %v2115, %v2226
            %v2228 = vpop.f32.mrf.mxu0
            %2229 = vmatprep.mubr.bf16.mxu0 0
            %2230 = vmatmul.mubr.bf16.gmra.mxu0 %v2127
            %v2231 = vpop.f32.mrf.mxu0
            %v2232 = vadd.f32 %v2115, %v2231
            %v2233 = vpop.f32.mrf.mxu0
            %v2234 = vpop.f32.mrf.mxu0
            %v2235 = vadd.f32 %v2115, %v2234
            %v2236 = vpop.f32.mrf.mxu0
            %2237 = vmatprep.mubr.bf16.mxu0 0
            %2238 = vmatmul.mubr.bf16.gmra.mxu0 %v2128
            %v2239 = vpop.f32.mrf.mxu0
            %v2240 = vadd.f32 %v2115, %v2239
            %v2241 = vpop.f32.mrf.mxu0
            %v2242 = vpop.f32.mrf.mxu0
            %v2243 = vadd.f32 %v2115, %v2242
            %v2244 = vpop.f32.mrf.mxu0
            %2245 = vmatprep.mubr.bf16.mxu0 0
            %2246 = vmatmul.mubr.bf16.gmra.mxu0 %v2129
            %v2247 = vpop.f32.mrf.mxu0
            %v2248 = vadd.f32 %v2115, %v2247
            %v2249 = vpop.f32.mrf.mxu0
            %v2250 = vpop.f32.mrf.mxu0
            %v2251 = vadd.f32 %v2115, %v2250
            %v2252 = vpop.f32.mrf.mxu0
            %2253 = vmatprep.mubr.bf16.mxu0 0
            %2254 = vmatmul.mubr.bf16.gmra.mxu0 %v2130
            %v2255 = vpop.f32.mrf.mxu0
            %v2256 = vadd.f32 %v2115, %v2255
            %v2257 = vpop.f32.mrf.mxu0
            %v2258 = vpop.f32.mrf.mxu0
            %v2259 = vadd.f32 %v2115, %v2258
            %v2260 = vpop.f32.mrf.mxu0
            %2261 = vmatprep.mubr.bf16.mxu0 0
            %2262 = vmatmul.mubr.bf16.gmra.mxu0 %v2131
            %v2263 = vpop.f32.mrf.mxu0
            %v2264 = vadd.f32 %v2115, %v2263
            %v2265 = vpop.f32.mrf.mxu0
            %v2266 = vpop.f32.mrf.mxu0
            %v2267 = vadd.f32 %v2115, %v2266
            %v2268 = vpop.f32.mrf.mxu0
            %2269 = vmatprep.mubr.bf16.mxu0 0
            %2270 = vmatmul.mubr.bf16.gmra.mxu0 %v2132
            %v2271 = vpop.f32.mrf.mxu0
            %v2272 = vadd.f32 %v2115, %v2271
            %v2273 = vpop.f32.mrf.mxu0
            %v2274 = vpop.f32.mrf.mxu0
            %v2275 = vadd.f32 %v2115, %v2274
            %v2276 = vpop.f32.mrf.mxu0
            %2277 = vdwg.mxu0
            %v2278 = vmax.f32 %v2216, 0.0
            %v2279 = vmax.f32 %v2219, 0.0
            %v2280 = vmax.f32 %v2224, 0.0
            %v2281 = vmax.f32 %v2227, 0.0
            %v2282 = vmax.f32 %v2232, 0.0
            %v2283 = vmax.f32 %v2235, 0.0
            %v2284 = vmax.f32 %v2240, 0.0
            %v2285 = vmax.f32 %v2243, 0.0
            %v2286 = vmax.f32 %v2248, 0.0
            %v2287 = vmax.f32 %v2251, 0.0
            %v2288 = vmax.f32 %v2256, 0.0
            %v2289 = vmax.f32 %v2259, 0.0
            %v2290 = vmax.f32 %v2264, 0.0
            %v2291 = vmax.f32 %v2267, 0.0
            %v2292 = vmax.f32 %v2272, 0.0
            %v2293 = vmax.f32 %v2275, 0.0
            %v2294 = vpack.c.bf16 %v2279, %v2278
            %v2295 = vpack.c.bf16 %v2281, %v2280
            %v2296 = vpack.c.bf16 %v2283, %v2282
            %v2297 = vpack.c.bf16 %v2285, %v2284
            %v2298 = vpack.c.bf16 %v2287, %v2286
            %v2299 = vpack.c.bf16 %v2289, %v2288
            %v2300 = vpack.c.bf16 %v2291, %v2290
            %v2301 = vpack.c.bf16 %v2293, %v2292
            %v2302 = vld [vmem:[%s10] sm:$0xf]
            %v2303 = vld [vmem:[%s10 + $0x4] sm:$0xf]
            %v2304 = vld [vmem:[%s10 + $0x8] sm:$0xf]
            %v2305 = vld [vmem:[%s10 + $0xc] sm:$0xf]
            %v2306 = vld [vmem:[%s10 + $0x10] sm:$0xf]
            %v2307 = vld [vmem:[%s10 + $0x14] sm:$0xf]
            %v2308 = vld [vmem:[%s10 + $0x18] sm:$0xf]
            %v2309 = vld [vmem:[%s10 + $0x1c] sm:$0xf]
            %v2310 = vld [vmem:[%s10 + $0x20] sm:$0xf]
            %v2311 = vld [vmem:[%s10 + $0x24] sm:$0xf]
            %v2312 = vld [vmem:[%s10 + $0x28] sm:$0xf]
            %v2313 = vld [vmem:[%s10 + $0x2c] sm:$0xf]
            %v2314 = vld [vmem:[%s10 + $0x30] sm:$0xf]
            %v2315 = vld [vmem:[%s10 + $0x34] sm:$0xf]
            %v2316 = vld [vmem:[%s10 + $0x38] sm:$0xf]
            %v2317 = vld [vmem:[%s10 + $0x3c] sm:$0xf]
            %v2318 = vld [vmem:[%s11] sm:$0x1]
            %v2320 = vlaneseq
            %v2321 = vshrl.u32 %v2320, 7
            %v2322 = vsub.s32 0, %v2321
            %v2323 = vrot.slane %v2318, %v2322
            %v2341 = vunpack.c.l.b16 %v2302
            %v2342 = vunpack.c.l.b16 %v2303
            %v2343 = vunpack.c.l.b16 %v2304
            %v2344 = vunpack.c.l.b16 %v2305
            %v2345 = vunpack.c.l.b16 %v2306
            %v2346 = vunpack.c.l.b16 %v2307
            %v2347 = vunpack.c.l.b16 %v2308
            %v2348 = vunpack.c.l.b16 %v2309
            %v2349 = vunpack.c.l.b16 %v2310
            %v2350 = vunpack.c.l.b16 %v2311
            %v2351 = vunpack.c.l.b16 %v2312
            %v2352 = vunpack.c.l.b16 %v2313
            %v2353 = vunpack.c.l.b16 %v2314
            %v2354 = vunpack.c.l.b16 %v2315
            %v2355 = vunpack.c.l.b16 %v2316
            %v2356 = vunpack.c.l.b16 %v2317
            %v2357 = vpack.c.b16 %v2342, %v2341
            %v2358 = vpack.c.b16 %v2344, %v2343
            %v2359 = vpack.c.b16 %v2346, %v2345
            %v2360 = vpack.c.b16 %v2348, %v2347
            %v2361 = vpack.c.b16 %v2350, %v2349
            %v2362 = vpack.c.b16 %v2352, %v2351
            %v2363 = vpack.c.b16 %v2354, %v2353
            %v2364 = vpack.c.b16 %v2356, %v2355
            %2373 = vmatprep.subr.bf16.mxu0 0
            %2374 = vmatpush1.bf16.msra.mxu0 %v2364
            %2375 = vmatprep.subr.bf16.mxu0 0
            %2376 = vmatpush1.bf16.msra.mxu0 %v2363
            %2377 = vmatprep.subr.bf16.mxu0 0
            %2378 = vmatpush1.bf16.msra.mxu0 %v2362
            %2379 = vmatprep.subr.bf16.mxu0 0
            %2380 = vmatpush1.bf16.msra.mxu0 %v2361
            %2381 = vmatprep.subr.bf16.mxu0 0
            %2382 = vmatpush1.bf16.msra.mxu0 %v2360
            %2383 = vmatprep.subr.bf16.mxu0 0
            %2384 = vmatpush1.bf16.msra.mxu0 %v2359
            %2385 = vmatprep.subr.bf16.mxu0 0
            %2386 = vmatpush1.bf16.msra.mxu0 %v2358
            %2387 = vmatprep.subr.bf16.mxu0 0
            %2388 = vmatpush1.bf16.msra.mxu0 %v2357
            %2389 = vmatprep.subr.bf16.mxu0 0
            %2390 = vmatpush2.bf16.msra.mxu0 0
            %2391 = vmatprep.subr.bf16.mxu0 0
            %2392 = vmatpush2.bf16.msra.mxu0 0
            %2393 = vmatprep.subr.bf16.mxu0 0
            %2394 = vmatpush2.bf16.msra.mxu0 0
            %2395 = vmatprep.subr.bf16.mxu0 0
            %2396 = vmatpush2.bf16.msra.mxu0 0
            %2397 = vmatprep.subr.bf16.mxu0 0
            %2398 = vmatpush2.bf16.msra.mxu0 0
            %2399 = vmatprep.subr.bf16.mxu0 0
            %2400 = vmatpush2.bf16.msra.mxu0 0
            %2401 = vmatprep.subr.bf16.mxu0 0
            %2402 = vmatpush2.bf16.msra.mxu0 0
            %2403 = vmatprep.subr.bf16.mxu0 0
            %2404 = vmatpush2.bf16.msra.mxu0 0
            %2405 = vmatprep.mubr.bf16.mxu0 0
            %2406 = vmatmul.mubr.bf16.gmra.mxu0 %v2294
            %v2407 = vpop.f32.mrf.mxu0
            %v2408 = vadd.f32 %v2323, %v2407
            %v2409 = vpop.f32.mrf.mxu0
            %v2410 = vpop.f32.mrf.mxu0
            %v2411 = vadd.f32 %v2323, %v2410
            %v2412 = vpop.f32.mrf.mxu0
            %2413 = vmatprep.mubr.bf16.mxu0 0
            %2414 = vmatmul.mubr.bf16.gmra.mxu0 %v2295
            %v2415 = vpop.f32.mrf.mxu0
            %v2416 = vadd.f32 %v2323, %v2415
            %v2417 = vpop.f32.mrf.mxu0
            %v2418 = vpop.f32.mrf.mxu0
            %v2419 = vadd.f32 %v2323, %v2418
            %v2420 = vpop.f32.mrf.mxu0
            %2421 = vmatprep.mubr.bf16.mxu0 0
            %2422 = vmatmul.mubr.bf16.gmra.mxu0 %v2296
            %v2423 = vpop.f32.mrf.mxu0
            %v2424 = vadd.f32 %v2323, %v2423
            %v2425 = vpop.f32.mrf.mxu0
            %v2426 = vpop.f32.mrf.mxu0
            %v2427 = vadd.f32 %v2323, %v2426
            %v2428 = vpop.f32.mrf.mxu0
            %2429 = vmatprep.mubr.bf16.mxu0 0
            %2430 = vmatmul.mubr.bf16.gmra.mxu0 %v2297
            %v2431 = vpop.f32.mrf.mxu0
            %v2432 = vadd.f32 %v2323, %v2431
            %v2433 = vpop.f32.mrf.mxu0
            %v2434 = vpop.f32.mrf.mxu0
            %v2435 = vadd.f32 %v2323, %v2434
            %v2436 = vpop.f32.mrf.mxu0
            %2437 = vmatprep.mubr.bf16.mxu0 0
            %2438 = vmatmul.mubr.bf16.gmra.mxu0 %v2298
            %v2439 = vpop.f32.mrf.mxu0
            %v2440 = vadd.f32 %v2323, %v2439
            %v2441 = vpop.f32.mrf.mxu0
            %v2442 = vpop.f32.mrf.mxu0
            %v2443 = vadd.f32 %v2323, %v2442
            %v2444 = vpop.f32.mrf.mxu0
            %2445 = vmatprep.mubr.bf16.mxu0 0
            %2446 = vmatmul.mubr.bf16.gmra.mxu0 %v2299
            %v2447 = vpop.f32.mrf.mxu0
            %v2448 = vadd.f32 %v2323, %v2447
            %v2449 = vpop.f32.mrf.mxu0
            %v2450 = vpop.f32.mrf.mxu0
            %v2451 = vadd.f32 %v2323, %v2450
            %v2452 = vpop.f32.mrf.mxu0
            %2453 = vmatprep.mubr.bf16.mxu0 0
            %2454 = vmatmul.mubr.bf16.gmra.mxu0 %v2300
            %v2455 = vpop.f32.mrf.mxu0
            %v2456 = vadd.f32 %v2323, %v2455
            %v2457 = vpop.f32.mrf.mxu0
            %v2458 = vpop.f32.mrf.mxu0
            %v2459 = vadd.f32 %v2323, %v2458
            %v2460 = vpop.f32.mrf.mxu0
            %2461 = vmatprep.mubr.bf16.mxu0 0
            %2462 = vmatmul.mubr.bf16.gmra.mxu0 %v2301
            %v2463 = vpop.f32.mrf.mxu0
            %v2464 = vadd.f32 %v2323, %v2463
            %v2465 = vpop.f32.mrf.mxu0
            %v2466 = vpop.f32.mrf.mxu0
            %v2467 = vadd.f32 %v2323, %v2466
            %v2468 = vpop.f32.mrf.mxu0
            %2469 = vdwg.mxu0
            %2470 = vmax.xlane.f32.xlu0 %v2408
            %v2471 = vpop.xlane.xlu0 %2470
            %2472 = vmax.xlane.f32.xlu0 %v2411
            %v2473 = vpop.xlane.xlu0 %2472
            %2474 = vmax.xlane.f32.xlu0 %v2416
            %v2475 = vpop.xlane.xlu0 %2474
            %2476 = vmax.xlane.f32.xlu0 %v2419
            %v2477 = vpop.xlane.xlu0 %2476
            %2478 = vmax.xlane.f32.xlu0 %v2424
            %v2479 = vpop.xlane.xlu0 %2478
            %2480 = vmax.xlane.f32.xlu0 %v2427
            %v2481 = vpop.xlane.xlu0 %2480
            %2482 = vmax.xlane.f32.xlu0 %v2432
            %v2483 = vpop.xlane.xlu0 %2482
            %2484 = vmax.xlane.f32.xlu0 %v2435
            %v2485 = vpop.xlane.xlu0 %2484
            %2486 = vmax.xlane.f32.xlu0 %v2440
            %v2487 = vpop.xlane.xlu0 %2486
            %2488 = vmax.xlane.f32.xlu0 %v2443
            %v2489 = vpop.xlane.xlu0 %2488
            %2490 = vmax.xlane.f32.xlu0 %v2448
            %v2491 = vpop.xlane.xlu0 %2490
            %2492 = vmax.xlane.f32.xlu0 %v2451
            %v2493 = vpop.xlane.xlu0 %2492
            %2494 = vmax.xlane.f32.xlu0 %v2456
            %v2495 = vpop.xlane.xlu0 %2494
            %2496 = vmax.xlane.f32.xlu0 %v2459
            %v2497 = vpop.xlane.xlu0 %2496
            %2498 = vmax.xlane.f32.xlu0 %v2464
            %v2499 = vpop.xlane.xlu0 %2498
            %2500 = vmax.xlane.f32.xlu0 %v2467
            %v2501 = vpop.xlane.xlu0 %2500
            %v2502 = vsub.f32 %v2408, %v2471
            %v2503 = vsub.f32 %v2411, %v2473
            %v2504 = vsub.f32 %v2416, %v2475
            %v2505 = vsub.f32 %v2419, %v2477
            %v2506 = vsub.f32 %v2424, %v2479
            %v2507 = vsub.f32 %v2427, %v2481
            %v2508 = vsub.f32 %v2432, %v2483
            %v2509 = vsub.f32 %v2435, %v2485
            %v2510 = vsub.f32 %v2440, %v2487
            %v2511 = vsub.f32 %v2443, %v2489
            %v2512 = vsub.f32 %v2448, %v2491
            %v2513 = vsub.f32 %v2451, %v2493
            %v2514 = vsub.f32 %v2456, %v2495
            %v2515 = vsub.f32 %v2459, %v2497
            %v2516 = vsub.f32 %v2464, %v2499
            %v2517 = vsub.f32 %v2467, %v2501
            %v2518 = vmul.f32 %v2502, 1.442695
            %v2519 = vpow.pop %v2518
            %v2520 = vmul.f32 %v2503, 1.442695
            %v2521 = vpow.pop %v2520
            %v2522 = vmul.f32 %v2504, 1.442695
            %v2523 = vpow.pop %v2522
            %v2524 = vmul.f32 %v2505, 1.442695
            %v2525 = vpow.pop %v2524
            %v2526 = vmul.f32 %v2506, 1.442695
            %v2527 = vpow.pop %v2526
            %v2528 = vmul.f32 %v2507, 1.442695
            %v2529 = vpow.pop %v2528
            %v2530 = vmul.f32 %v2508, 1.442695
            %v2531 = vpow.pop %v2530
            %v2532 = vmul.f32 %v2509, 1.442695
            %v2533 = vpow.pop %v2532
            %v2534 = vmul.f32 %v2510, 1.442695
            %v2535 = vpow.pop %v2534
            %v2536 = vmul.f32 %v2511, 1.442695
            %v2537 = vpow.pop %v2536
            %v2538 = vmul.f32 %v2512, 1.442695
            %v2539 = vpow.pop %v2538
            %v2540 = vmul.f32 %v2513, 1.442695
            %v2541 = vpow.pop %v2540
            %v2542 = vmul.f32 %v2514, 1.442695
            %v2543 = vpow.pop %v2542
            %v2544 = vmul.f32 %v2515, 1.442695
            %v2545 = vpow.pop %v2544
            %v2546 = vmul.f32 %v2516, 1.442695
            %v2547 = vpow.pop %v2546
            %v2548 = vmul.f32 %v2517, 1.442695
            %v2549 = vpow.pop %v2548
            %2550 = vadd.xlane.f32.xlu0 %v2519
            %v2551 = vpop.xlane.xlu0 %2550
            %2552 = vadd.xlane.f32.xlu0 %v2521
            %v2553 = vpop.xlane.xlu0 %2552
            %2554 = vadd.xlane.f32.xlu0 %v2523
            %v2555 = vpop.xlane.xlu0 %2554
            %2556 = vadd.xlane.f32.xlu0 %v2525
            %v2557 = vpop.xlane.xlu0 %2556
            %2558 = vadd.xlane.f32.xlu0 %v2527
            %v2559 = vpop.xlane.xlu0 %2558
            %2560 = vadd.xlane.f32.xlu0 %v2529
            %v2561 = vpop.xlane.xlu0 %2560
            %2562 = vadd.xlane.f32.xlu0 %v2531
            %v2563 = vpop.xlane.xlu0 %2562
            %2564 = vadd.xlane.f32.xlu0 %v2533
            %v2565 = vpop.xlane.xlu0 %2564
            %2566 = vadd.xlane.f32.xlu0 %v2535
            %v2567 = vpop.xlane.xlu0 %2566
            %2568 = vadd.xlane.f32.xlu0 %v2537
            %v2569 = vpop.xlane.xlu0 %2568
            %2570 = vadd.xlane.f32.xlu0 %v2539
            %v2571 = vpop.xlane.xlu0 %2570
            %2572 = vadd.xlane.f32.xlu0 %v2541
            %v2573 = vpop.xlane.xlu0 %2572
            %2574 = vadd.xlane.f32.xlu0 %v2543
            %v2575 = vpop.xlane.xlu0 %2574
            %2576 = vadd.xlane.f32.xlu0 %v2545
            %v2577 = vpop.xlane.xlu0 %2576
            %2578 = vadd.xlane.f32.xlu0 %v2547
            %v2579 = vpop.xlane.xlu0 %2578
            %2580 = vadd.xlane.f32.xlu0 %v2549
            %v2581 = vpop.xlane.xlu0 %2580
            %v2582 = vlog2.pop %v2551
            %v2583 = vmul.f32 %v2582, 0.6931472
            %v2584 = vlog2.pop %v2553
            %v2585 = vmul.f32 %v2584, 0.6931472
            %v2586 = vlog2.pop %v2555
            %v2587 = vmul.f32 %v2586, 0.6931472
            %v2588 = vlog2.pop %v2557
            %v2589 = vmul.f32 %v2588, 0.6931472
            %v2590 = vlog2.pop %v2559
            %v2591 = vmul.f32 %v2590, 0.6931472
            %v2592 = vlog2.pop %v2561
            %v2593 = vmul.f32 %v2592, 0.6931472
            %v2594 = vlog2.pop %v2563
            %v2595 = vmul.f32 %v2594, 0.6931472
            %v2596 = vlog2.pop %v2565
            %v2597 = vmul.f32 %v2596, 0.6931472
            %v2598 = vlog2.pop %v2567
            %v2599 = vmul.f32 %v2598, 0.6931472
            %v2600 = vlog2.pop %v2569
            %v2601 = vmul.f32 %v2600, 0.6931472
            %v2602 = vlog2.pop %v2571
            %v2603 = vmul.f32 %v2602, 0.6931472
            %v2604 = vlog2.pop %v2573
            %v2605 = vmul.f32 %v2604, 0.6931472
            %v2606 = vlog2.pop %v2575
            %v2607 = vmul.f32 %v2606, 0.6931472
            %v2608 = vlog2.pop %v2577
            %v2609 = vmul.f32 %v2608, 0.6931472
            %v2610 = vlog2.pop %v2579
            %v2611 = vmul.f32 %v2610, 0.6931472
            %v2612 = vlog2.pop %v2581
            %v2613 = vmul.f32 %v2612, 0.6931472
            %v2614 = vsub.f32 %v2502, %v2583
            %v2615 = vsub.f32 %v2503, %v2585
            %v2616 = vsub.f32 %v2504, %v2587
            %v2617 = vsub.f32 %v2505, %v2589
            %v2618 = vsub.f32 %v2506, %v2591
            %v2619 = vsub.f32 %v2507, %v2593
            %v2620 = vsub.f32 %v2508, %v2595
            %v2621 = vsub.f32 %v2509, %v2597
            %v2622 = vsub.f32 %v2510, %v2599
            %v2623 = vsub.f32 %v2511, %v2601
            %v2624 = vsub.f32 %v2512, %v2603
            %v2625 = vsub.f32 %v2513, %v2605
            %v2626 = vsub.f32 %v2514, %v2607
            %v2627 = vsub.f32 %v2515, %v2609
            %v2628 = vsub.f32 %v2516, %v2611
            %v2629 = vsub.f32 %v2517, %v2613
            %2630 = vst [vmem:[%s12] sm:$0xff] %v2614
            %2631 = vst [vmem:[%s12 + $0x8] sm:$0xff] %v2615
            %2632 = vst [vmem:[%s12 + $0x10] sm:$0xff] %v2616
            %2633 = vst [vmem:[%s12 + $0x18] sm:$0xff] %v2617
            %2634 = vst [vmem:[%s12 + $0x20] sm:$0xff] %v2618
            %2635 = vst [vmem:[%s12 + $0x28] sm:$0xff] %v2619
            %2636 = vst [vmem:[%s12 + $0x30] sm:$0xff] %v2620
            %2637 = vst [vmem:[%s12 + $0x38] sm:$0xff] %v2621
            %2638 = vst [vmem:[%s12 + $0x40] sm:$0xff] %v2622
            %2639 = vst [vmem:[%s12 + $0x48] sm:$0xff] %v2623
            %2640 = vst [vmem:[%s12 + $0x50] sm:$0xff] %v2624
            %2641 = vst [vmem:[%s12 + $0x58] sm:$0xff] %v2625
            %2642 = vst [vmem:[%s12 + $0x60] sm:$0xff] %v2626
            %2643 = vst [vmem:[%s12 + $0x68] sm:$0xff] %v2627
            %2644 = vst [vmem:[%s12 + $0x70] sm:$0xff] %v2628
            %2645 = vst [vmem:[%s12 + $0x78] sm:$0xff] %v2629
          $region92: #{global_attention_net_forward.1} parent=87 // pred_fallthru
            _
        $region88: #{global_attention_net_forward.1} parent=83 // pred_fallthru
          _
      $region84: #{global_attention_net_forward.1} parent=67 // pred_fallthru
        _
      // Predicated region
      $region93: #{global_attention_net_forward.1} parent=67 // pred_check
        %p2646 = pneg %p354
      $region94: #{global_attention_net_forward.1} parent=67 // pred_check_branch
        %2648 = sbr.rel (%p2646) target = $region96
      $region95: #{global_attention_net_forward.1} parent=67 // pred_region
        _
      $region96: #{global_attention_net_forward.1} parent=67 // pred_fallthru
        _
      // Predicated region
      $region97: #{global_attention_net_forward.1} parent=67 // pred_check
        %p2649 = pneg %p354
      $region98: #{global_attention_net_forward.1} parent=67 // pred_check_branch
        %2651 = sbr.rel (%p2649) target = $region100
      $region99: #{global_attention_net_forward.1} parent=67 // pred_region
        _
      $region100: #{global_attention_net_forward.1} parent=67 // pred_fallthru
        _
    $region68: #{global_attention_net_forward.1} parent=5 // pred_fallthru
      _
    %p2652 = scmp.le.s32.totalorder 2, %s19
    // Predicated region
    $region101: #{global_attention_net_forward.1} parent=5 // pred_check
      %p2653 = pneg %p2652
    $region102: #{global_attention_net_forward.1} parent=5 // pred_check_branch
      %2655 = sbr.rel (%p2653) target = $region104
    $region103: #{global_attention_net_forward.1} parent=5 // pred_region
      %s2656 = ssub.s32 %s19, 2
    $region104: #{global_attention_net_forward.1} parent=5 // pred_fallthru
      _
  $region6: #{global_attention_net_forward.1} parent=0 // loop_footer
    %s23 = sadd.s32 1, %s19
  $region7: #{global_attention_net_forward.1} parent=0 // loop_footer_branch
    %18 = sbr.rel target = $region3
  $region8: #{global_attention_net_forward.1} parent=0 // loop_exit
    _

</llo_original>
